<compile_context>
chip_gen: v5e
topology: v5e:2x2
jax: 0.10.0
libtpu: 0.0.40
codegen_flags: <defaults>
</compile_context>

<pallas_src>
import functools

import jax
import jax.numpy as jnp
from jax.experimental import pallas as pl
from jax.experimental.pallas import tpu as pltpu


# ----------------------------------------------------------------------------
# Fused kernel: conv3d -> (conv1 3x3 + ReLU + pool) -> (conv2 3x3 + ReLU + pool)
# One grid point per batch element; all intermediates live in VMEM.
# ----------------------------------------------------------------------------
def _frontend_cnn_kernel(x_ref, w3_ref, b3_ref, w1_ref, b1_ref, w2_ref, b2_ref,
                         o_ref, pad1_ref, pad2_ref, *, H, W, D, C3, C1, C2):
    # ---- conv3d with kernel (D,1,1): per-pixel depth contraction ------------
    x = x_ref[0].reshape(H * W, D)                                    # (H*W, D)
    y0 = jnp.dot(x, w3_ref[...], preferred_element_type=jnp.float32)  # (H*W, C3)
    y0 = y0 + b3_ref[...]

    # ---- conv1 (3x3, pad=1) + ReLU + 2x2 maxpool (im2col, padding in VMEM) --
    pad1_ref[...] = jnp.zeros_like(pad1_ref)
    pad1_ref[1:H + 1, 1:W + 1, :] = y0.reshape(H, W, C3)
    xp = pad1_ref[...]                                                # (H+2, W+2, C3)
    patches = jnp.concatenate(
        [xp[dy:dy + H, dx:dx + W, :].reshape(H * W, C3)
         for dy in range(3) for dx in range(3)], axis=-1)             # (H*W, 9*C3)
    h1 = jnp.dot(patches, w1_ref[...], preferred_element_type=jnp.float32)
    h1 = jnp.maximum(h1 + b1_ref[...], 0.0).reshape(H, W, C1)
    h1 = jnp.max(h1.reshape(H // 2, 2, W, C1), axis=1)
    h1 = jnp.max(h1.reshape(H // 2, W // 2, 2, C1), axis=2)           # (H/2, W/2, C1)

    H2, W2 = H // 2, W // 2
    # ---- conv2 (3x3, pad=1) + ReLU + 2x2 maxpool -----------------------------
    pad2_ref[...] = jnp.zeros_like(pad2_ref)
    pad2_ref[1:H2 + 1, 1:W2 + 1, :] = h1
    xp2 = pad2_ref[...]                                               # (H2+2, W2+2, C1)
    patches2 = jnp.concatenate(
        [xp2[dy:dy + H2, dx:dx + W2, :].reshape(H2 * W2, C1)
         for dy in range(3) for dx in range(3)], axis=-1)             # (H2*W2, 9*C1)
    h2 = jnp.dot(patches2, w2_ref[...], preferred_element_type=jnp.float32)
    h2 = jnp.maximum(h2 + b2_ref[...], 0.0).reshape(H2, W2, C2)
    h2 = jnp.max(h2.reshape(H2 // 2, 2, W2, C2), axis=1)
    h2 = jnp.max(h2.reshape(H2 // 2, W2 // 2, 2, C2), axis=2)         # (H/4, W/4, C2)

    o_ref[0] = h2.astype(o_ref.dtype)


def frontend_retinal_cnn(params, x_ncdhw):
    """x: (B, 1, D, H, W)  ->  (B, conv2_out_channels, H//4, W//4)  (NCHW)."""
    B, _, D, H, W = x_ncdhw.shape
    C3 = params["w3"].shape[1]
    C1 = params["w1"].shape[1]
    C2 = params["w2"].shape[1]

    # NCDHW (in_channels=1) -> channels-last (B, H, W, D)
    x_nhwd = x_ncdhw.reshape(B, D, H, W).transpose(0, 2, 3, 1)

    out_nhwc = pl.pallas_call(
        functools.partial(_frontend_cnn_kernel,
                          H=H, W=W, D=D, C3=C3, C1=C1, C2=C2),
        out_shape=jax.ShapeDtypeStruct((B, H // 4, W // 4, C2), x_ncdhw.dtype),
        grid=(B,),
        in_specs=[
            pl.BlockSpec((1, H, W, D), lambda b: (b, 0, 0, 0)),
            pl.BlockSpec((D, C3), lambda b: (0, 0)),
            pl.BlockSpec((1, C3), lambda b: (0, 0)),
            pl.BlockSpec((9 * C3, C1), lambda b: (0, 0)),
            pl.BlockSpec((1, C1), lambda b: (0, 0)),
            pl.BlockSpec((9 * C1, C2), lambda b: (0, 0)),
            pl.BlockSpec((1, C2), lambda b: (0, 0)),
        ],
        out_specs=pl.BlockSpec((1, H // 4, W // 4, C2), lambda b: (b, 0, 0, 0)),
        scratch_shapes=[
            pltpu.VMEM((H + 2, W + 2, C3), jnp.float32),          # padded conv1 input
            pltpu.VMEM((H // 2 + 2, W // 2 + 2, C1), jnp.float32),  # padded conv2 input
        ],
        compiler_params=pltpu.CompilerParams(dimension_semantics=("parallel",)),
    )(x_nhwd, params["w3"], params["b3"], params["w1"], params["b1"],
      params["w2"], params["b2"])

    return out_nhwc.transpose(0, 3, 1, 2)                            # NCHW


# ----------------------------------------------------------------------------
# Parameters: generated in torch layouts, pre-arranged once for the kernel.
# ----------------------------------------------------------------------------
def prepare_params(w3_t, b3_t, w1_t, b1_t, w2_t, b2_t):
    """torch layouts -> kernel layouts (done once, outside the forward)."""
    C3, _, D, _, _ = w3_t.shape
    C1 = w1_t.shape[0]
    C2 = w2_t.shape[0]
    return {
        "w3": jnp.transpose(w3_t.reshape(C3, D)),                          # (D, C3)
        "b3": b3_t.reshape(1, C3),
        # (Cout, Cin, 3, 3) -> (dy, dx, Cin, Cout) -> (9*Cin, Cout)  (im2col order)
        "w1": jnp.transpose(w1_t, (2, 3, 1, 0)).reshape(9 * C3, C1),
        "b1": b1_t.reshape(1, C1),
        "w2": jnp.transpose(w2_t, (2, 3, 1, 0)).reshape(9 * C1, C2),
        "b2": b2_t.reshape(1, C2),
    }


def init_torch_layout_params(key, *, input_depth, conv3d_out_channels=10,
                             conv2_out_channels=64):
    D, C3, C1, C2 = input_depth, conv3d_out_channels, 32, conv2_out_channels
    ks = jax.random.split(key, 6)
    s = 0.05
    w3_t = jax.random.normal(ks[0], (C3, 1, D, 1, 1), jnp.float32) * s   # Conv3d
    b3_t = jax.random.normal(ks[1], (C3,), jnp.float32) * s
    w1_t = jax.random.normal(ks[2], (C1, C3, 3, 3), jnp.float32) * s     # Conv2d #1
    b1_t = jax.random.normal(ks[3], (C1,), jnp.float32) * s
    w2_t = jax.random.normal(ks[4], (C2, C1, 3, 3), jnp.float32) * s     # Conv2d #2
    b2_t = jax.random.normal(ks[5], (C2,), jnp.float32) * s
    return (w3_t, b3_t, w1_t, b1_t, w2_t, b2_t)


# ----------------------------------------------------------------------------
# Pure-JAX reference (mirrors the PyTorch module) for a correctness check.
# ----------------------------------------------------------------------------
def reference_forward(torch_params, x_ncdhw):
    w3_t, b3_t, w1_t, b1_t, w2_t, b2_t = torch_params
    hp = jax.lax.Precision.HIGHEST
    y = jax.lax.conv_general_dilated(
        x_ncdhw, w3_t, window_strides=(1, 1, 1), padding="VALID",
        dimension_numbers=("NCDHW", "OIDHW", "NCDHW"), precision=hp)
    y = y[:, :, 0] + b3_t[None, :, None, None]                       # (B, C3, H, W)

    def conv2d(z, w, b):
        r = jax.lax.conv_general_dilated(
            z, w, window_strides=(1, 1), padding=((1, 1), (1, 1)),
            dimension_numbers=("NCHW", "OIHW", "NCHW"), precision=hp)
        return r + b[None, :, None, None]

    def pool(z):
        Bz, C, Hh, Ww = z.shape
        return z.reshape(Bz, C, Hh // 2, 2, Ww // 2, 2).max(axis=(3, 5))

    h1 = pool(jnp.maximum(conv2d(y, w1_t, b1_t), 0.0))
    h2 = pool(jnp.maximum(conv2d(h1, w2_t, b2_t), 0.0))
    return h2                                                        # (B, C2, H/4, W/4)


# ----------------------------------------------------------------------------
if __name__ == "__main__":
    key = jax.random.PRNGKey(0)
    kparam, kx = jax.random.split(key, 2)

    # Small, module-consistent shapes
    B, D, H, W = 2, 4, 16, 16
    conv3d_out_channels, conv2_out_channels = 10, 64

    torch_params = init_torch_layout_params(
        kparam, input_depth=D,
        conv3d_out_channels=conv3d_out_channels,
        conv2_out_channels=conv2_out_channels)
    params = prepare_params(*torch_params)

    x = jax.random.normal(kx, (B, 1, D, H, W), jnp.float32)

    out = frontend_retinal_cnn(params, x)
    out = jax.block_until_ready(out)

    assert out.shape == (B, conv2_out_channels, H // 4, W // 4), out.shape
    assert bool(jnp.all(jnp.isfinite(out)))

    ref = jax.block_until_ready(reference_forward(torch_params, x))
    max_err = float(jnp.max(jnp.abs(out - ref)))
    assert max_err < 1e-3, f"mismatch vs reference: max abs err {max_err}"

    print("KERNEL_OK")
</pallas_src>

<mosaic_0001>
module attributes {stable_mosaic.version = 11 : i64} {
  func.func @_frontend_cnn_kernel(%arg0: i32, %arg1: memref<1x16x16x4xf32, #tpu.memory_space<vmem>>, %arg2: memref<4x10xf32, #tpu.memory_space<vmem>>, %arg3: memref<1x10xf32, #tpu.memory_space<vmem>>, %arg4: memref<90x32xf32, #tpu.memory_space<vmem>>, %arg5: memref<1x32xf32, #tpu.memory_space<vmem>>, %arg6: memref<288x64xf32, #tpu.memory_space<vmem>>, %arg7: memref<1x64xf32, #tpu.memory_space<vmem>>, %arg8: memref<1x4x4x64xf32, #tpu.memory_space<vmem>>, %arg9: memref<18x18x10xf32, #tpu.memory_space<vmem>>, %arg10: memref<10x10x32xf32, #tpu.memory_space<vmem>>) attributes {dimension_semantics = [#tpu.dimension_semantics<parallel>], iteration_bounds = array<i64: 2>, scalar_prefetch = 0 : i64, scratch_operands = 2 : i64, tpu.core_type = #tpu.core_type<tc>, window_params = [{transform_indices = @transform_0, window_bounds = array<i64: 1, 16, 16, 4>}, {pipeline_mode = #tpu.pipeline_mode<synchronous>, transform_indices = @transform_1, window_bounds = array<i64: 4, 10>}, {pipeline_mode = #tpu.pipeline_mode<synchronous>, transform_indices = @transform_2, window_bounds = array<i64: 1, 10>}, {pipeline_mode = #tpu.pipeline_mode<synchronous>, transform_indices = @transform_3, window_bounds = array<i64: 90, 32>}, {pipeline_mode = #tpu.pipeline_mode<synchronous>, transform_indices = @transform_4, window_bounds = array<i64: 1, 32>}, {pipeline_mode = #tpu.pipeline_mode<synchronous>, transform_indices = @transform_5, window_bounds = array<i64: 288, 64>}, {pipeline_mode = #tpu.pipeline_mode<synchronous>, transform_indices = @transform_6, window_bounds = array<i64: 1, 64>}, {transform_indices = @transform_7, window_bounds = array<i64: 1, 4, 4, 64>}]} {
    %c0 = arith.constant 0 : index
    %c0_0 = arith.constant 0 : index
    %c0_1 = arith.constant 0 : index
    %c0_2 = arith.constant 0 : index
    %0 = vector.load %arg1[%c0, %c0_0, %c0_1, %c0_2] : memref<1x16x16x4xf32, #tpu.memory_space<vmem>>, vector<1x16x16x4xf32>
    %1 = vector.shape_cast %0 : vector<1x16x16x4xf32> to vector<16x16x4xf32>
    %2 = vector.shape_cast %1 : vector<16x16x4xf32> to vector<256x4xf32>
    %c0_3 = arith.constant 0 : index
    %c0_4 = arith.constant 0 : index
    %3 = vector.load %arg2[%c0_3, %c0_4] : memref<4x10xf32, #tpu.memory_space<vmem>>, vector<4x10xf32>
    %cst = arith.constant dense<0.000000e+00> : vector<256x10xf32>
    %4 = tpu.matmul %2, %3, %cst {dimension_numbers = #tpu.dot_dimension_numbers<[1], [0], [0], [1], [0, 0, 1, 1], [], []>} : vector<256x4xf32>, vector<4x10xf32>, vector<256x10xf32> -> vector<256x10xf32>
    %c0_5 = arith.constant 0 : index
    %c0_6 = arith.constant 0 : index
    %5 = vector.load %arg3[%c0_5, %c0_6] : memref<1x10xf32, #tpu.memory_space<vmem>>, vector<1x10xf32>
    %6 = vector.broadcast %5 : vector<1x10xf32> to vector<256x10xf32>
    %7 = arith.addf %4, %6 : vector<256x10xf32>
    %cst_7 = arith.constant 0.000000e+00 : f32
    %8 = vector.broadcast %cst_7 : f32 to vector<18x18x10xf32>
    %c0_8 = arith.constant 0 : index
    %c0_9 = arith.constant 0 : index
    %c0_10 = arith.constant 0 : index
    %9 = vector.load %arg9[%c0_8, %c0_9, %c0_10] : memref<18x18x10xf32, #tpu.memory_space<vmem>>, vector<18x18x10xf32>
    tpu.vector_store %arg9[%c0_8, %c0_9, %c0_10], %8 {strides = array<i32>} : memref<18x18x10xf32, #tpu.memory_space<vmem>>, vector<18x18x10xf32>,
    %10 = vector.shape_cast %7 : vector<256x10xf32> to vector<16x16x10xf32>
    %c1 = arith.constant 1 : index
    %c1_11 = arith.constant 1 : index
    %c0_12 = arith.constant 0 : index
    %11 = vector.load %arg9[%c1, %c1_11, %c0_12] : memref<18x18x10xf32, #tpu.memory_space<vmem>>, vector<16x16x10xf32>
    tpu.vector_store %arg9[%c1, %c1_11, %c0_12], %10 {strides = array<i32>} : memref<18x18x10xf32, #tpu.memory_space<vmem>>, vector<16x16x10xf32>,
    %c0_13 = arith.constant 0 : index
    %c0_14 = arith.constant 0 : index
    %c0_15 = arith.constant 0 : index
    %12 = vector.load %arg9[%c0_13, %c0_14, %c0_15] : memref<18x18x10xf32, #tpu.memory_space<vmem>>, vector<18x18x10xf32>
    %13 = vector.extract_strided_slice %12 {offsets = [0, 0, 0], sizes = [16, 16, 10], strides = [1, 1, 1]} : vector<18x18x10xf32> to vector<16x16x10xf32>
    %14 = vector.shape_cast %13 : vector<16x16x10xf32> to vector<256x10xf32>
    %15 = vector.extract_strided_slice %12 {offsets = [0, 1, 0], sizes = [16, 16, 10], strides = [1, 1, 1]} : vector<18x18x10xf32> to vector<16x16x10xf32>
    %16 = vector.shape_cast %15 : vector<16x16x10xf32> to vector<256x10xf32>
    %17 = vector.extract_strided_slice %12 {offsets = [0, 2, 0], sizes = [16, 16, 10], strides = [1, 1, 1]} : vector<18x18x10xf32> to vector<16x16x10xf32>
    %18 = vector.shape_cast %17 : vector<16x16x10xf32> to vector<256x10xf32>
    %19 = vector.extract_strided_slice %12 {offsets = [1, 0, 0], sizes = [16, 16, 10], strides = [1, 1, 1]} : vector<18x18x10xf32> to vector<16x16x10xf32>
    %20 = vector.shape_cast %19 : vector<16x16x10xf32> to vector<256x10xf32>
    %21 = vector.extract_strided_slice %12 {offsets = [1, 1, 0], sizes = [16, 16, 10], strides = [1, 1, 1]} : vector<18x18x10xf32> to vector<16x16x10xf32>
    %22 = vector.shape_cast %21 : vector<16x16x10xf32> to vector<256x10xf32>
    %23 = vector.extract_strided_slice %12 {offsets = [1, 2, 0], sizes = [16, 16, 10], strides = [1, 1, 1]} : vector<18x18x10xf32> to vector<16x16x10xf32>
    %24 = vector.shape_cast %23 : vector<16x16x10xf32> to vector<256x10xf32>
    %25 = vector.extract_strided_slice %12 {offsets = [2, 0, 0], sizes = [16, 16, 10], strides = [1, 1, 1]} : vector<18x18x10xf32> to vector<16x16x10xf32>
    %26 = vector.shape_cast %25 : vector<16x16x10xf32> to vector<256x10xf32>
    %27 = vector.extract_strided_slice %12 {offsets = [2, 1, 0], sizes = [16, 16, 10], strides = [1, 1, 1]} : vector<18x18x10xf32> to vector<16x16x10xf32>
    %28 = vector.shape_cast %27 : vector<16x16x10xf32> to vector<256x10xf32>
    %29 = vector.extract_strided_slice %12 {offsets = [2, 2, 0], sizes = [16, 16, 10], strides = [1, 1, 1]} : vector<18x18x10xf32> to vector<16x16x10xf32>
    %30 = vector.shape_cast %29 : vector<16x16x10xf32> to vector<256x10xf32>
    %31 = tpu.concatenate %14, %16, %18, %20, %22, %24, %26, %28, %30 in 1 : vector<256x10xf32>, vector<256x10xf32>, vector<256x10xf32>, vector<256x10xf32>, vector<256x10xf32>, vector<256x10xf32>, vector<256x10xf32>, vector<256x10xf32>, vector<256x10xf32> -> vector<256x90xf32>
    %c0_16 = arith.constant 0 : index
    %c0_17 = arith.constant 0 : index
    %32 = vector.load %arg4[%c0_16, %c0_17] : memref<90x32xf32, #tpu.memory_space<vmem>>, vector<90x32xf32>
    %cst_18 = arith.constant dense<0.000000e+00> : vector<256x32xf32>
    %33 = tpu.matmul %31, %32, %cst_18 {dimension_numbers = #tpu.dot_dimension_numbers<[1], [0], [0], [1], [0, 0, 1, 1], [], []>} : vector<256x90xf32>, vector<90x32xf32>, vector<256x32xf32> -> vector<256x32xf32>
    %c0_19 = arith.constant 0 : index
    %c0_20 = arith.constant 0 : index
    %34 = vector.load %arg5[%c0_19, %c0_20] : memref<1x32xf32, #tpu.memory_space<vmem>>, vector<1x32xf32>
    %35 = vector.broadcast %34 : vector<1x32xf32> to vector<256x32xf32>
    %36 = arith.addf %33, %35 : vector<256x32xf32>
    %cst_21 = arith.constant 0.000000e+00 : f32
    %37 = vector.broadcast %cst_21 : f32 to vector<256x32xf32>
    %38 = arith.maximumf %36, %37 : vector<256x32xf32>
    %39 = vector.shape_cast %38 : vector<256x32xf32> to vector<16x16x32xf32>
    %40 = vector.shape_cast %39 : vector<16x16x32xf32> to vector<8x2x16x32xf32>
    %cst_22 = arith.constant dense<0xFF800000> : vector<8x16x32xf32>
    %41 = vector.multi_reduction <maximumf>, %40, %cst_22 [1] : vector<8x2x16x32xf32> to vector<8x16x32xf32>
    %42 = vector.shape_cast %41 : vector<8x16x32xf32> to vector<8x8x2x32xf32>
    %cst_23 = arith.constant dense<0xFF800000> : vector<8x8x32xf32>
    %43 = vector.multi_reduction <maximumf>, %42, %cst_23 [2] : vector<8x8x2x32xf32> to vector<8x8x32xf32>
    %cst_24 = arith.constant 0.000000e+00 : f32
    %44 = vector.broadcast %cst_24 : f32 to vector<10x10x32xf32>
    %c0_25 = arith.constant 0 : index
    %c0_26 = arith.constant 0 : index
    %c0_27 = arith.constant 0 : index
    %45 = vector.load %arg10[%c0_25, %c0_26, %c0_27] : memref<10x10x32xf32, #tpu.memory_space<vmem>>, vector<10x10x32xf32>
    tpu.vector_store %arg10[%c0_25, %c0_26, %c0_27], %44 {strides = array<i32>} : memref<10x10x32xf32, #tpu.memory_space<vmem>>, vector<10x10x32xf32>,
    %c1_28 = arith.constant 1 : index
    %c1_29 = arith.constant 1 : index
    %c0_30 = arith.constant 0 : index
    %46 = vector.load %arg10[%c1_28, %c1_29, %c0_30] : memref<10x10x32xf32, #tpu.memory_space<vmem>>, vector<8x8x32xf32>
    tpu.vector_store %arg10[%c1_28, %c1_29, %c0_30], %43 {strides = array<i32>} : memref<10x10x32xf32, #tpu.memory_space<vmem>>, vector<8x8x32xf32>,
    %c0_31 = arith.constant 0 : index
    %c0_32 = arith.constant 0 : index
    %c0_33 = arith.constant 0 : index
    %47 = vector.load %arg10[%c0_31, %c0_32, %c0_33] : memref<10x10x32xf32, #tpu.memory_space<vmem>>, vector<10x10x32xf32>
    %48 = vector.extract_strided_slice %47 {offsets = [0, 0, 0], sizes = [8, 8, 32], strides = [1, 1, 1]} : vector<10x10x32xf32> to vector<8x8x32xf32>
    %49 = vector.shape_cast %48 : vector<8x8x32xf32> to vector<64x32xf32>
    %50 = vector.extract_strided_slice %47 {offsets = [0, 1, 0], sizes = [8, 8, 32], strides = [1, 1, 1]} : vector<10x10x32xf32> to vector<8x8x32xf32>
    %51 = vector.shape_cast %50 : vector<8x8x32xf32> to vector<64x32xf32>
    %52 = vector.extract_strided_slice %47 {offsets = [0, 2, 0], sizes = [8, 8, 32], strides = [1, 1, 1]} : vector<10x10x32xf32> to vector<8x8x32xf32>
    %53 = vector.shape_cast %52 : vector<8x8x32xf32> to vector<64x32xf32>
    %54 = vector.extract_strided_slice %47 {offsets = [1, 0, 0], sizes = [8, 8, 32], strides = [1, 1, 1]} : vector<10x10x32xf32> to vector<8x8x32xf32>
    %55 = vector.shape_cast %54 : vector<8x8x32xf32> to vector<64x32xf32>
    %56 = vector.extract_strided_slice %47 {offsets = [1, 1, 0], sizes = [8, 8, 32], strides = [1, 1, 1]} : vector<10x10x32xf32> to vector<8x8x32xf32>
    %57 = vector.shape_cast %56 : vector<8x8x32xf32> to vector<64x32xf32>
    %58 = vector.extract_strided_slice %47 {offsets = [1, 2, 0], sizes = [8, 8, 32], strides = [1, 1, 1]} : vector<10x10x32xf32> to vector<8x8x32xf32>
    %59 = vector.shape_cast %58 : vector<8x8x32xf32> to vector<64x32xf32>
    %60 = vector.extract_strided_slice %47 {offsets = [2, 0, 0], sizes = [8, 8, 32], strides = [1, 1, 1]} : vector<10x10x32xf32> to vector<8x8x32xf32>
    %61 = vector.shape_cast %60 : vector<8x8x32xf32> to vector<64x32xf32>
    %62 = vector.extract_strided_slice %47 {offsets = [2, 1, 0], sizes = [8, 8, 32], strides = [1, 1, 1]} : vector<10x10x32xf32> to vector<8x8x32xf32>
    %63 = vector.shape_cast %62 : vector<8x8x32xf32> to vector<64x32xf32>
    %64 = vector.extract_strided_slice %47 {offsets = [2, 2, 0], sizes = [8, 8, 32], strides = [1, 1, 1]} : vector<10x10x32xf32> to vector<8x8x32xf32>
    %65 = vector.shape_cast %64 : vector<8x8x32xf32> to vector<64x32xf32>
    %66 = tpu.concatenate %49, %51, %53, %55, %57, %59, %61, %63, %65 in 1 : vector<64x32xf32>, vector<64x32xf32>, vector<64x32xf32>, vector<64x32xf32>, vector<64x32xf32>, vector<64x32xf32>, vector<64x32xf32>, vector<64x32xf32>, vector<64x32xf32> -> vector<64x288xf32>
    %c0_34 = arith.constant 0 : index
    %c0_35 = arith.constant 0 : index
    %67 = vector.load %arg6[%c0_34, %c0_35] : memref<288x64xf32, #tpu.memory_space<vmem>>, vector<288x64xf32>
    %cst_36 = arith.constant dense<0.000000e+00> : vector<64x64xf32>
    %68 = tpu.matmul %66, %67, %cst_36 {dimension_numbers = #tpu.dot_dimension_numbers<[1], [0], [0], [1], [0, 0, 1, 1], [], []>} : vector<64x288xf32>, vector<288x64xf32>, vector<64x64xf32> -> vector<64x64xf32>
    %c0_37 = arith.constant 0 : index
    %c0_38 = arith.constant 0 : index
    %69 = vector.load %arg7[%c0_37, %c0_38] : memref<1x64xf32, #tpu.memory_space<vmem>>, vector<1x64xf32>
    %70 = vector.broadcast %69 : vector<1x64xf32> to vector<64x64xf32>
    %71 = arith.addf %68, %70 : vector<64x64xf32>
    %cst_39 = arith.constant 0.000000e+00 : f32
    %72 = vector.broadcast %cst_39 : f32 to vector<64x64xf32>
    %73 = arith.maximumf %71, %72 : vector<64x64xf32>
    %74 = vector.shape_cast %73 : vector<64x64xf32> to vector<8x8x64xf32>
    %75 = vector.shape_cast %74 : vector<8x8x64xf32> to vector<4x2x8x64xf32>
    %cst_40 = arith.constant dense<0xFF800000> : vector<4x8x64xf32>
    %76 = vector.multi_reduction <maximumf>, %75, %cst_40 [1] : vector<4x2x8x64xf32> to vector<4x8x64xf32>
    %77 = vector.shape_cast %76 : vector<4x8x64xf32> to vector<4x4x2x64xf32>
    %cst_41 = arith.constant dense<0xFF800000> : vector<4x4x64xf32>
    %78 = vector.multi_reduction <maximumf>, %77, %cst_41 [2] : vector<4x4x2x64xf32> to vector<4x4x64xf32>
    %c0_42 = arith.constant 0 : index
    %c0_43 = arith.constant 0 : index
    %c0_44 = arith.constant 0 : index
    %c0_45 = arith.constant 0 : index
    %79 = vector.load %arg8[%c0_42, %c0_43, %c0_44, %c0_45] : memref<1x4x4x64xf32, #tpu.memory_space<vmem>>, vector<1x4x4x64xf32>
    %80 = vector.shape_cast %79 : vector<1x4x4x64xf32> to vector<4x4x64xf32>
    %81 = vector.shape_cast %78 : vector<4x4x64xf32> to vector<1x4x4x64xf32>
    tpu.vector_store %arg8[%c0_42, %c0_43, %c0_44, %c0_45], %81 {strides = array<i32>} : memref<1x4x4x64xf32, #tpu.memory_space<vmem>>, vector<1x4x4x64xf32>,
    return
  }
  func.func @transform_0(%arg0: i32) -> (i32, i32, i32, i32) {
    %c0_i32 = arith.constant 0 : i32
    %c0_i32_0 = arith.constant 0 : i32
    %c0_i32_1 = arith.constant 0 : i32
    %c0_i32_2 = arith.constant 0 : i32
    return %arg0, %c0_i32, %c0_i32_0, %c0_i32_1 : i32, i32, i32, i32
  }
  func.func @transform_1(%arg0: i32) -> (i32, i32) {
    %c0_i32 = arith.constant 0 : i32
    %c0_i32_0 = arith.constant 0 : i32
    %c0_i32_1 = arith.constant 0 : i32
    return %c0_i32, %c0_i32_0 : i32, i32
  }
  func.func @transform_2(%arg0: i32) -> (i32, i32) {
    %c0_i32 = arith.constant 0 : i32
    %c0_i32_0 = arith.constant 0 : i32
    %c0_i32_1 = arith.constant 0 : i32
    return %c0_i32, %c0_i32_0 : i32, i32
  }
  func.func @transform_3(%arg0: i32) -> (i32, i32) {
    %c0_i32 = arith.constant 0 : i32
    %c0_i32_0 = arith.constant 0 : i32
    %c0_i32_1 = arith.constant 0 : i32
    return %c0_i32, %c0_i32_0 : i32, i32
  }
  func.func @transform_4(%arg0: i32) -> (i32, i32) {
    %c0_i32 = arith.constant 0 : i32
    %c0_i32_0 = arith.constant 0 : i32
    %c0_i32_1 = arith.constant 0 : i32
    return %c0_i32, %c0_i32_0 : i32, i32
  }
  func.func @transform_5(%arg0: i32) -> (i32, i32) {
    %c0_i32 = arith.constant 0 : i32
    %c0_i32_0 = arith.constant 0 : i32
    %c0_i32_1 = arith.constant 0 : i32
    return %c0_i32, %c0_i32_0 : i32, i32
  }
  func.func @transform_6(%arg0: i32) -> (i32, i32) {
    %c0_i32 = arith.constant 0 : i32
    %c0_i32_0 = arith.constant 0 : i32
    %c0_i32_1 = arith.constant 0 : i32
    return %c0_i32, %c0_i32_0 : i32, i32
  }
  func.func @transform_7(%arg0: i32) -> (i32, i32, i32, i32) {
    %c0_i32 = arith.constant 0 : i32
    %c0_i32_0 = arith.constant 0 : i32
    %c0_i32_1 = arith.constant 0 : i32
    %c0_i32_2 = arith.constant 0 : i32
    return %arg0, %c0_i32, %c0_i32_0, %c0_i32_1 : i32, i32, i32, i32
  }
}

</mosaic_0001>

<llo_original>
// kernel: tpu_custom_call.1
$region0: #{tpu_custom_call.1}
  #allocation0 [shape = 'u32[]', space=smem, size = 0x4, offset = 0x4, fixed_abs, tag = 'smem constant byte address 0x4 - core index']
  #allocation1 [shape = 'u32[72,128]{1,0:T(1,128)}', space=vmem, size = 0x9000, scoped, tag = 'internal scratch']
  #allocation2 [shape = 'f32[18,18,10]{2,1,0:T(8,128)}', space=vmem, size = 0x36000, scoped, tag = 'scratch operand']
  #allocation3 [shape = 'f32[10,10,32]{2,1,0:T(8,128)}', space=vmem, size = 0x14000, scoped, tag = 'scratch operand']
  %s0 = inlined_call_operand.vmem [shape: f32[2,16,16,4], index: 0, kind: input, shape index: {}]
  %s1 = inlined_call_operand.vmem [shape: f32[4,10], index: 1, kind: input, shape index: {}]
  %s2 = inlined_call_operand.vmem [shape: f32[1,10], index: 2, kind: input, shape index: {}]
  %s3 = inlined_call_operand.vmem [shape: f32[90,32], index: 3, kind: input, shape index: {}]
  %s4 = inlined_call_operand.vmem [shape: f32[1,32], index: 4, kind: input, shape index: {}]
  %s5 = inlined_call_operand.vmem [shape: f32[288,64], index: 5, kind: input, shape index: {}]
  %s6 = inlined_call_operand.vmem [shape: f32[1,64], index: 6, kind: input, shape index: {}]
  %s7 = inlined_call_operand.hbm [shape: f32[2,4,4,64], index: 7, kind: output, shape index: {}]
  %s8 = sld [smem:[#allocation0]]
  $region61: #{tpu_custom_call.1} parent=0
    _
  %s10 = ssub.s32 1, %s8
  %s11 = scalar_select 0, %s10, %s8
  $region1: #{tpu_custom_call.1} parent=0
    #allocation4 [shape = 'u8[16384]{0}', space=vmem, size = 0x4000, scoped, tag = 'output window, operand 0']
    #allocation5 [shape = 's32[2]{0}', space=sflag, size = 0x8, scoped, tag = 'scoped memory for tpu_custom_call.1']
    %12 = vsyncpa [#allocation5], 0
    %s13 = scalar_lea.sflag [#allocation5], 1
    %14 = vsyncpa %s13, 0
    loop: start=0, step=1, limit=4
    $region2: #{tpu_custom_call.1} parent=1 // loop_pre_header
      _
    $region3: #{tpu_custom_call.1} parent=1 // loop_header
      %s16 = sphi 0, %s20
      %p17 = scmp.ge.s32.totalorder %s16, 4
      %s26 = sphi 0, %s28
      %s29 = sphi 0, %s26
      %s30 = sphi 0, %s29
      %s46 = sphi 0, %s30
      %s50 = sphi 0, %s50
      %s52 = sphi 0, %s50
      %s53 = sphi 0, %s52
      %s67 = sphi 0, %s53
      %s71 = sphi 0, %s71
      %s73 = sphi 0, %s71
      %s74 = sphi 0, %s73
      %s88 = sphi 0, %s74
      %s92 = sphi 0, %s92
      %s94 = sphi 0, %s92
      %s95 = sphi 0, %s94
      %s109 = sphi 0, %s95
      %s113 = sphi 0, %s113
      %s115 = sphi 0, %s113
      %s116 = sphi 0, %s115
      %s130 = sphi 0, %s116
      %s134 = sphi 0, %s134
      %s136 = sphi 0, %s134
      %s137 = sphi 0, %s136
      %s151 = sphi 0, %s137
      %s155 = sphi 0, %s155
      %s157 = sphi 0, %s155
      %s158 = sphi 0, %s157
      %s172 = sphi 0, %s158
      %s178 = sphi 0, %s180
      %s181 = sphi 0, %s178
      %s182 = sphi 0, %s181
      %s198 = sphi 0, %s182
    $region4: #{tpu_custom_call.1} parent=1 // loop_header_branch
      %19 = sbr.rel (%p17) target = $region8
    $region5: #{tpu_custom_call.1} parent=1 // loop_body
      %s21 = ssub.s32 %s16, 1
      %s22 = ssub.s32 %s16, 2
      %s23 = sadd.s32 %s16, 1
      %s24 = ssub.s32 %s16, %s23
      %p25 = scmp.eq.s32.totalorder %s24, 0
      %s27 = sadd.s32 %s26, 1
      %s28 = scalar_select %p25, %s26, %s27
      %p31 = pneg %p25
      %p32 = scmp.eq.s32.totalorder %s16, 1
      %p33 = por %p31, %p32
      %p34 = scmp.ne.s32.totalorder %s26, %s29
      %p35 = scmp.eq.s32.totalorder %s16, 0
      %p36 = por %p34, %p35
      %p37 = scmp.ne.s32.totalorder %s26, %s29
      %p38 = scmp.eq.s32.totalorder %s21, 1
      %p39 = por %p37, %p38
      %p40 = scmp.ne.s32.totalorder %s29, %s30
      %p41 = scmp.eq.s32.totalorder %s21, 0
      %p42 = por %p40, %p41
      %p43 = scmp.ne.s32.totalorder %s29, %s30
      %p44 = scmp.eq.s32.totalorder %s22, 1
      %p45 = por %p43, %p44
      %p47 = scmp.ne.s32.totalorder %s30, %s46
      %p48 = scmp.eq.s32.totalorder %s22, 0
      %p49 = por %p47, %p48
      %s51 = sadd.s32 %s50, 1
      %p54 = scmp.eq.s32.totalorder %s16, 1
      %p55 = scmp.ne.s32.totalorder %s50, %s52
      %p56 = scmp.eq.s32.totalorder %s16, 0
      %p57 = por %p55, %p56
      %p58 = scmp.ne.s32.totalorder %s50, %s52
      %p59 = scmp.eq.s32.totalorder %s21, 1
      %p60 = por %p58, %p59
      %p61 = scmp.ne.s32.totalorder %s52, %s53
      %p62 = scmp.eq.s32.totalorder %s21, 0
      %p63 = por %p61, %p62
      %p64 = scmp.ne.s32.totalorder %s52, %s53
      %p65 = scmp.eq.s32.totalorder %s22, 1
      %p66 = por %p64, %p65
      %p68 = scmp.ne.s32.totalorder %s53, %s67
      %p69 = scmp.eq.s32.totalorder %s22, 0
      %p70 = por %p68, %p69
      %s72 = sadd.s32 %s71, 1
      %p75 = scmp.eq.s32.totalorder %s16, 1
      %p76 = scmp.ne.s32.totalorder %s71, %s73
      %p77 = scmp.eq.s32.totalorder %s16, 0
      %p78 = por %p76, %p77
      %p79 = scmp.ne.s32.totalorder %s71, %s73
      %p80 = scmp.eq.s32.totalorder %s21, 1
      %p81 = por %p79, %p80
      %p82 = scmp.ne.s32.totalorder %s73, %s74
      %p83 = scmp.eq.s32.totalorder %s21, 0
      %p84 = por %p82, %p83
      %p85 = scmp.ne.s32.totalorder %s73, %s74
      %p86 = scmp.eq.s32.totalorder %s22, 1
      %p87 = por %p85, %p86
      %p89 = scmp.ne.s32.totalorder %s74, %s88
      %p90 = scmp.eq.s32.totalorder %s22, 0
      %p91 = por %p89, %p90
      %s93 = sadd.s32 %s92, 1
      %p96 = scmp.eq.s32.totalorder %s16, 1
      %p97 = scmp.ne.s32.totalorder %s92, %s94
      %p98 = scmp.eq.s32.totalorder %s16, 0
      %p99 = por %p97, %p98
      %p100 = scmp.ne.s32.totalorder %s92, %s94
      %p101 = scmp.eq.s32.totalorder %s21, 1
      %p102 = por %p100, %p101
      %p103 = scmp.ne.s32.totalorder %s94, %s95
      %p104 = scmp.eq.s32.totalorder %s21, 0
      %p105 = por %p103, %p104
      %p106 = scmp.ne.s32.totalorder %s94, %s95
      %p107 = scmp.eq.s32.totalorder %s22, 1
      %p108 = por %p106, %p107
      %p110 = scmp.ne.s32.totalorder %s95, %s109
      %p111 = scmp.eq.s32.totalorder %s22, 0
      %p112 = por %p110, %p111
      %s114 = sadd.s32 %s113, 1
      %p117 = scmp.eq.s32.totalorder %s16, 1
      %p118 = scmp.ne.s32.totalorder %s113, %s115
      %p119 = scmp.eq.s32.totalorder %s16, 0
      %p120 = por %p118, %p119
      %p121 = scmp.ne.s32.totalorder %s113, %s115
      %p122 = scmp.eq.s32.totalorder %s21, 1
      %p123 = por %p121, %p122
      %p124 = scmp.ne.s32.totalorder %s115, %s116
      %p125 = scmp.eq.s32.totalorder %s21, 0
      %p126 = por %p124, %p125
      %p127 = scmp.ne.s32.totalorder %s115, %s116
      %p128 = scmp.eq.s32.totalorder %s22, 1
      %p129 = por %p127, %p128
      %p131 = scmp.ne.s32.totalorder %s116, %s130
      %p132 = scmp.eq.s32.totalorder %s22, 0
      %p133 = por %p131, %p132
      %s135 = sadd.s32 %s134, 1
      %p138 = scmp.eq.s32.totalorder %s16, 1
      %p139 = scmp.ne.s32.totalorder %s134, %s136
      %p140 = scmp.eq.s32.totalorder %s16, 0
      %p141 = por %p139, %p140
      %p142 = scmp.ne.s32.totalorder %s134, %s136
      %p143 = scmp.eq.s32.totalorder %s21, 1
      %p144 = por %p142, %p143
      %p145 = scmp.ne.s32.totalorder %s136, %s137
      %p146 = scmp.eq.s32.totalorder %s21, 0
      %p147 = por %p145, %p146
      %p148 = scmp.ne.s32.totalorder %s136, %s137
      %p149 = scmp.eq.s32.totalorder %s22, 1
      %p150 = por %p148, %p149
      %p152 = scmp.ne.s32.totalorder %s137, %s151
      %p153 = scmp.eq.s32.totalorder %s22, 0
      %p154 = por %p152, %p153
      %s156 = sadd.s32 %s155, 1
      %p159 = scmp.eq.s32.totalorder %s16, 1
      %p160 = scmp.ne.s32.totalorder %s155, %s157
      %p161 = scmp.eq.s32.totalorder %s16, 0
      %p162 = por %p160, %p161
      %p163 = scmp.ne.s32.totalorder %s155, %s157
      %p164 = scmp.eq.s32.totalorder %s21, 1
      %p165 = por %p163, %p164
      %p166 = scmp.ne.s32.totalorder %s157, %s158
      %p167 = scmp.eq.s32.totalorder %s21, 0
      %p168 = por %p166, %p167
      %p169 = scmp.ne.s32.totalorder %s157, %s158
      %p170 = scmp.eq.s32.totalorder %s22, 1
      %p171 = por %p169, %p170
      %p173 = scmp.ne.s32.totalorder %s158, %s172
      %p174 = scmp.eq.s32.totalorder %s22, 0
      %p175 = por %p173, %p174
      %s176 = ssub.s32 %s16, %s23
      %p177 = scmp.eq.s32.totalorder %s176, 0
      %s179 = sadd.s32 %s178, 1
      %s180 = scalar_select %p177, %s178, %s179
      %p183 = pneg %p177
      %p184 = scmp.eq.s32.totalorder %s16, 1
      %p185 = por %p183, %p184
      %p186 = scmp.ne.s32.totalorder %s178, %s181
      %p187 = scmp.eq.s32.totalorder %s16, 0
      %p188 = por %p186, %p187
      %p189 = scmp.ne.s32.totalorder %s178, %s181
      %p190 = scmp.eq.s32.totalorder %s21, 1
      %p191 = por %p189, %p190
      %p192 = scmp.ne.s32.totalorder %s181, %s182
      %p193 = scmp.eq.s32.totalorder %s21, 0
      %p194 = por %p192, %p193
      %p195 = scmp.ne.s32.totalorder %s181, %s182
      %p196 = scmp.eq.s32.totalorder %s22, 1
      %p197 = por %p195, %p196
      %p199 = scmp.ne.s32.totalorder %s182, %s198
      %p200 = scmp.eq.s32.totalorder %s22, 0
      %p201 = por %p199, %p200
      %p202 = scmp.le.s32.totalorder 1, %s16
      %p203 = scmp.lt.s32.totalorder %s16, 3
      %p204 = pnand %p202, %p203
      %p205 = pneg %p204
      // Predicated region
      $region9: #{tpu_custom_call.1} parent=5 // pred_check
        _
      $region10: #{tpu_custom_call.1} parent=5 // pred_check_branch
        %207 = sbr.rel (%p204) target = $region12
      $region11: #{tpu_custom_call.1} parent=5 // pred_region
        %s208 = ssub.s32 %s16, 1
        // Predicated region
        $region13: #{tpu_custom_call.1} parent=11 // pred_check
          %p209 = pneg %p63
        $region14: #{tpu_custom_call.1} parent=11 // pred_check_branch
          %211 = sbr.rel (%p209) target = $region16
        $region15: #{tpu_custom_call.1} parent=11 // pred_region
          _
        $region16: #{tpu_custom_call.1} parent=11 // pred_fallthru
          _
        // Predicated region
        $region17: #{tpu_custom_call.1} parent=11 // pred_check
          %p212 = pneg %p84
        $region18: #{tpu_custom_call.1} parent=11 // pred_check_branch
          %214 = sbr.rel (%p212) target = $region20
        $region19: #{tpu_custom_call.1} parent=11 // pred_region
          _
        $region20: #{tpu_custom_call.1} parent=11 // pred_fallthru
          _
        // Predicated region
        $region21: #{tpu_custom_call.1} parent=11 // pred_check
          %p215 = pneg %p105
        $region22: #{tpu_custom_call.1} parent=11 // pred_check_branch
          %217 = sbr.rel (%p215) target = $region24
        $region23: #{tpu_custom_call.1} parent=11 // pred_region
          _
        $region24: #{tpu_custom_call.1} parent=11 // pred_fallthru
          _
        // Predicated region
        $region25: #{tpu_custom_call.1} parent=11 // pred_check
          %p218 = pneg %p126
        $region26: #{tpu_custom_call.1} parent=11 // pred_check_branch
          %220 = sbr.rel (%p218) target = $region28
        $region27: #{tpu_custom_call.1} parent=11 // pred_region
          _
        $region28: #{tpu_custom_call.1} parent=11 // pred_fallthru
          _
        // Predicated region
        $region29: #{tpu_custom_call.1} parent=11 // pred_check
          %p221 = pneg %p147
        $region30: #{tpu_custom_call.1} parent=11 // pred_check_branch
          %223 = sbr.rel (%p221) target = $region32
        $region31: #{tpu_custom_call.1} parent=11 // pred_region
          _
        $region32: #{tpu_custom_call.1} parent=11 // pred_fallthru
          _
        // Predicated region
        $region33: #{tpu_custom_call.1} parent=11 // pred_check
          %p224 = pneg %p168
        $region34: #{tpu_custom_call.1} parent=11 // pred_check_branch
          %226 = sbr.rel (%p224) target = $region36
        $region35: #{tpu_custom_call.1} parent=11 // pred_region
          _
        $region36: #{tpu_custom_call.1} parent=11 // pred_fallthru
          _
      $region12: #{tpu_custom_call.1} parent=5 // pred_fallthru
        _
      %p227 = scmp.lt.s32.totalorder %s16, 2
      // Predicated region
      $region37: #{tpu_custom_call.1} parent=5 // pred_check
        %p228 = pneg %p227
      $region38: #{tpu_custom_call.1} parent=5 // pred_check_branch
        %230 = sbr.rel (%p228) target = $region40
      $region39: #{tpu_custom_call.1} parent=5 // pred_region
        // Predicated region
        $region41: #{tpu_custom_call.1} parent=39 // pred_check
          %p231 = pneg %p36
        $region42: #{tpu_custom_call.1} parent=39 // pred_check_branch
          %233 = sbr.rel (%p231) target = $region44
        $region43: #{tpu_custom_call.1} parent=39 // pred_region
          %p234 = scmp.lt.s32.totalorder %s16, 1
          %s235 = scalar_select %p234, %s16, 1
          %s236 = smul.addr %s235, 32
          %s237 = smul.addr %s236, 8
          %s238 = scalar_lea.vmem %s0, %s237
        $region44: #{tpu_custom_call.1} parent=39 // pred_fallthru
          _
      $region40: #{tpu_custom_call.1} parent=5 // pred_fallthru
        _
      %p239 = scmp.le.s32.totalorder 1, %s16
      %p240 = scmp.lt.s32.totalorder %s16, 3
      %p241 = pnand %p239, %p240
      %p242 = pneg %p241
      // Predicated region
      $region45: #{tpu_custom_call.1} parent=5 // pred_check
        _
      $region46: #{tpu_custom_call.1} parent=5 // pred_check_branch
        %244 = sbr.rel (%p241) target = $region48
      $region47: #{tpu_custom_call.1} parent=5 // pred_region
        %s245 = ssub.s32 %s16, 1
        %p246 = scmp.lt.s32.totalorder %s21, 1
        %s247 = scalar_select %p246, %s21, 1
        %s248 = smul.addr %s247, 32
        %s249 = smul.addr %s248, 8
        %s250 = scalar_lea.vmem %s0, %s249
        %p251 = pneg %p42
        %p252 = pneg %p39
        %p253 = pneg %p63
        %p254 = pneg %p60
        %p255 = pneg %p84
        %p256 = pneg %p81
        %p257 = pneg %p105
        %p258 = pneg %p102
        %p259 = pneg %p126
        %p260 = pneg %p123
        %p261 = pneg %p147
        %p262 = pneg %p144
        %p263 = pneg %p168
        %p264 = pneg %p165
        %p265 = pneg %p194
        %p266 = pneg %p191
        %s267 = sand.u32 %s181, 1
        %s268 = scalar_lea.sflag [#allocation5], %s267
        %s269 = sand.u32 %s181, 1
        %s270 = smul.addr %s269, 16
        %s271 = scalar_lea.vmem [#allocation4], %s270
        %p272 = scmp.lt.s32.totalorder %s21, 1
        %s273 = scalar_select %p272, %s21, 1
        %s274 = smul.addr %s273, 32
        %s275 = smul.addr %s274, 8
        %s276 = scalar_lea.vmem %s0, %s275
        %v277 = vld [vmem:[%s276] sm:$0xff]
        %v278 = vld [vmem:[%s276 + $0x8] sm:$0xff]
        %v279 = vld [vmem:[%s276 + $0x10] sm:$0xff]
        %v280 = vld [vmem:[%s276 + $0x18] sm:$0xff]
        %v281 = vld [vmem:[%s276 + $0x20] sm:$0xff]
        %v282 = vld [vmem:[%s276 + $0x28] sm:$0xff]
        %v283 = vld [vmem:[%s276 + $0x30] sm:$0xff]
        %v284 = vld [vmem:[%s276 + $0x38] sm:$0xff]
        %v285 = vld [vmem:[%s276 + $0x40] sm:$0xff]
        %v286 = vld [vmem:[%s276 + $0x48] sm:$0xff]
        %v287 = vld [vmem:[%s276 + $0x50] sm:$0xff]
        %v288 = vld [vmem:[%s276 + $0x58] sm:$0xff]
        %v289 = vld [vmem:[%s276 + $0x60] sm:$0xff]
        %v290 = vld [vmem:[%s276 + $0x68] sm:$0xff]
        %v291 = vld [vmem:[%s276 + $0x70] sm:$0xff]
        %v292 = vld [vmem:[%s276 + $0x78] sm:$0xff]
        %v293 = vld [vmem:[%s276 + $0x80] sm:$0xff]
        %v294 = vld [vmem:[%s276 + $0x88] sm:$0xff]
        %v295 = vld [vmem:[%s276 + $0x90] sm:$0xff]
        %v296 = vld [vmem:[%s276 + $0x98] sm:$0xff]
        %v297 = vld [vmem:[%s276 + $0xa0] sm:$0xff]
        %v298 = vld [vmem:[%s276 + $0xa8] sm:$0xff]
        %v299 = vld [vmem:[%s276 + $0xb0] sm:$0xff]
        %v300 = vld [vmem:[%s276 + $0xb8] sm:$0xff]
        %v301 = vld [vmem:[%s276 + $0xc0] sm:$0xff]
        %v302 = vld [vmem:[%s276 + $0xc8] sm:$0xff]
        %v303 = vld [vmem:[%s276 + $0xd0] sm:$0xff]
        %v304 = vld [vmem:[%s276 + $0xd8] sm:$0xff]
        %v305 = vld [vmem:[%s276 + $0xe0] sm:$0xff]
        %v306 = vld [vmem:[%s276 + $0xe8] sm:$0xff]
        %v307 = vld [vmem:[%s276 + $0xf0] sm:$0xff]
        %v308 = vld [vmem:[%s276 + $0xf8] sm:$0xff]
        %v309 = vld [vmem:[%s1] sm:$0xf]
        %v310 = vld [vmem:[%s2] sm:$0x1]
        %v312 = vperm.slane %v310, 0
        %vm314 = vcmask 31744
        %v316 = vsel %vm314, %v277, 0
        %v319 = vsel %vm314, %v278, 0
        %v322 = vsel %vm314, %v279, 0
        %v325 = vsel %vm314, %v280, 0
        %v328 = vsel %vm314, %v281, 0
        %v331 = vsel %vm314, %v282, 0
        %v334 = vsel %vm314, %v283, 0
        %v337 = vsel %vm314, %v284, 0
        %v340 = vsel %vm314, %v285, 0
        %v343 = vsel %vm314, %v286, 0
        %v346 = vsel %vm314, %v287, 0
        %v349 = vsel %vm314, %v288, 0
        %v352 = vsel %vm314, %v289, 0
        %v355 = vsel %vm314, %v290, 0
        %v358 = vsel %vm314, %v291, 0
        %v361 = vsel %vm314, %v292, 0
        %v364 = vsel %vm314, %v293, 0
        %v367 = vsel %vm314, %v294, 0
        %v370 = vsel %vm314, %v295, 0
        %v373 = vsel %vm314, %v296, 0
        %v376 = vsel %vm314, %v297, 0
        %v379 = vsel %vm314, %v298, 0
        %v382 = vsel %vm314, %v299, 0
        %v385 = vsel %vm314, %v300, 0
        %v388 = vsel %vm314, %v301, 0
        %v391 = vsel %vm314, %v302, 0
        %v394 = vsel %vm314, %v303, 0
        %v397 = vsel %vm314, %v304, 0
        %v400 = vsel %vm314, %v305, 0
        %v403 = vsel %vm314, %v306, 0
        %v406 = vsel %vm314, %v307, 0
        %v409 = vsel %vm314, %v308, 0
        %vm411 = vcmask 1043456
        %v413 = vsel %vm411, %v309, 0
        %415 = vmatpush.msra.mxu0 0.0
        %416 = vmatpush.msra.mxu0 0.0
        %417 = vmatpush.msra.mxu0 0.0
        %418 = vmatpush.msra.mxu0 0.0
        %419 = vmatpush.msra.mxu0 0.0
        %420 = vmatpush.msra.mxu0 0.0
        %421 = vmatpush.msra.mxu0 0.0
        %422 = vmatpush.msra.mxu0 0.0
        %423 = vmatpush.msra.mxu0 0.0
        %424 = vmatpush.msra.mxu0 0.0
        %425 = vmatpush.msra.mxu0 0.0
        %426 = vmatpush.msra.mxu0 0.0
        %427 = vmatpush.msra.mxu0 0.0
        %428 = vmatpush.msra.mxu0 0.0
        %429 = vmatpush.msra.mxu0 0.0
        %430 = vmatpush.msra.mxu0 %v413
        %431 = vmatmul.f32.gmra.mxu0 %v316
        %v432 = vpop.f32.mrf.mxu0
        %v433 = vadd.f32 %v312, %v432
        %434 = vmatmul.f32.gmra.mxu0 %v319
        %v435 = vpop.f32.mrf.mxu0
        %v436 = vadd.f32 %v312, %v435
        %437 = vmatmul.f32.gmra.mxu0 %v322
        %v438 = vpop.f32.mrf.mxu0
        %v439 = vadd.f32 %v312, %v438
        %440 = vmatmul.f32.gmra.mxu0 %v325
        %v441 = vpop.f32.mrf.mxu0
        %v442 = vadd.f32 %v312, %v441
        %443 = vmatmul.f32.gmra.mxu0 %v328
        %v444 = vpop.f32.mrf.mxu0
        %v445 = vadd.f32 %v312, %v444
        %446 = vmatmul.f32.gmra.mxu0 %v331
        %v447 = vpop.f32.mrf.mxu0
        %v448 = vadd.f32 %v312, %v447
        %449 = vmatmul.f32.gmra.mxu0 %v334
        %v450 = vpop.f32.mrf.mxu0
        %v451 = vadd.f32 %v312, %v450
        %452 = vmatmul.f32.gmra.mxu0 %v337
        %v453 = vpop.f32.mrf.mxu0
        %v454 = vadd.f32 %v312, %v453
        %455 = vmatmul.f32.gmra.mxu0 %v340
        %v456 = vpop.f32.mrf.mxu0
        %v457 = vadd.f32 %v312, %v456
        %458 = vmatmul.f32.gmra.mxu0 %v343
        %v459 = vpop.f32.mrf.mxu0
        %v460 = vadd.f32 %v312, %v459
        %461 = vmatmul.f32.gmra.mxu0 %v346
        %v462 = vpop.f32.mrf.mxu0
        %v463 = vadd.f32 %v312, %v462
        %464 = vmatmul.f32.gmra.mxu0 %v349
        %v465 = vpop.f32.mrf.mxu0
        %v466 = vadd.f32 %v312, %v465
        %467 = vmatmul.f32.gmra.mxu0 %v352
        %v468 = vpop.f32.mrf.mxu0
        %v469 = vadd.f32 %v312, %v468
        %470 = vmatmul.f32.gmra.mxu0 %v355
        %v471 = vpop.f32.mrf.mxu0
        %v472 = vadd.f32 %v312, %v471
        %473 = vmatmul.f32.gmra.mxu0 %v358
        %v474 = vpop.f32.mrf.mxu0
        %v475 = vadd.f32 %v312, %v474
        %476 = vmatmul.f32.gmra.mxu0 %v361
        %v477 = vpop.f32.mrf.mxu0
        %v478 = vadd.f32 %v312, %v477
        %479 = vmatmul.f32.gmra.mxu0 %v364
        %v480 = vpop.f32.mrf.mxu0
        %v481 = vadd.f32 %v312, %v480
        %482 = vmatmul.f32.gmra.mxu0 %v367
        %v483 = vpop.f32.mrf.mxu0
        %v484 = vadd.f32 %v312, %v483
        %485 = vmatmul.f32.gmra.mxu0 %v370
        %v486 = vpop.f32.mrf.mxu0
        %v487 = vadd.f32 %v312, %v486
        %488 = vmatmul.f32.gmra.mxu0 %v373
        %v489 = vpop.f32.mrf.mxu0
        %v490 = vadd.f32 %v312, %v489
        %491 = vmatmul.f32.gmra.mxu0 %v376
        %v492 = vpop.f32.mrf.mxu0
        %v493 = vadd.f32 %v312, %v492
        %494 = vmatmul.f32.gmra.mxu0 %v379
        %v495 = vpop.f32.mrf.mxu0
        %v496 = vadd.f32 %v312, %v495
        %497 = vmatmul.f32.gmra.mxu0 %v382
        %v498 = vpop.f32.mrf.mxu0
        %v499 = vadd.f32 %v312, %v498
        %500 = vmatmul.f32.gmra.mxu0 %v385
        %v501 = vpop.f32.mrf.mxu0
        %v502 = vadd.f32 %v312, %v501
        %503 = vmatmul.f32.gmra.mxu0 %v388
        %v504 = vpop.f32.mrf.mxu0
        %v505 = vadd.f32 %v312, %v504
        %506 = vmatmul.f32.gmra.mxu0 %v391
        %v507 = vpop.f32.mrf.mxu0
        %v508 = vadd.f32 %v312, %v507
        %509 = vmatmul.f32.gmra.mxu0 %v394
        %v510 = vpop.f32.mrf.mxu0
        %v511 = vadd.f32 %v312, %v510
        %512 = vmatmul.f32.gmra.mxu0 %v397
        %v513 = vpop.f32.mrf.mxu0
        %v514 = vadd.f32 %v312, %v513
        %515 = vmatmul.f32.gmra.mxu0 %v400
        %v516 = vpop.f32.mrf.mxu0
        %v517 = vadd.f32 %v312, %v516
        %518 = vmatmul.f32.gmra.mxu0 %v403
        %v519 = vpop.f32.mrf.mxu0
        %v520 = vadd.f32 %v312, %v519
        %521 = vmatmul.f32.gmra.mxu0 %v406
        %v522 = vpop.f32.mrf.mxu0
        %v523 = vadd.f32 %v312, %v522
        %524 = vmatmul.f32.gmra.mxu0 %v409
        %v525 = vpop.f32.mrf.mxu0
        %v526 = vadd.f32 %v312, %v525
        %527 = vdwg.mxu0
        %vm528 = vcmask 80896
        %529 = vst.msk [vmem:[#allocation2] sm:$0xff] %vm528, 0.0
        %530 = vst.msk [vmem:[#allocation2 + $0x8] sm:$0xff] %vm528, 0.0
        %vm531 = vcmask 74752
        %532 = vst.msk [vmem:[#allocation2 + $0x10] sm:$0x3] %vm531, 0.0
        %533 = vst.msk [vmem:[#allocation2 + $0x18] sm:$0xff] %vm528, 0.0
        %534 = vst.msk [vmem:[#allocation2 + $0x20] sm:$0xff] %vm528, 0.0
        %535 = vst.msk [vmem:[#allocation2 + $0x28] sm:$0x3] %vm531, 0.0
        %536 = vst.msk [vmem:[#allocation2 + $0x30] sm:$0xff] %vm528, 0.0
        %537 = vst.msk [vmem:[#allocation2 + $0x38] sm:$0xff] %vm528, 0.0
        %538 = vst.msk [vmem:[#allocation2 + $0x40] sm:$0x3] %vm531, 0.0
        %539 = vst.msk [vmem:[#allocation2 + $0x48] sm:$0xff] %vm528, 0.0
        %540 = vst.msk [vmem:[#allocation2 + $0x50] sm:$0xff] %vm528, 0.0
        %541 = vst.msk [vmem:[#allocation2 + $0x58] sm:$0x3] %vm531, 0.0
        %542 = vst.msk [vmem:[#allocation2 + $0x60] sm:$0xff] %vm528, 0.0
        %543 = vst.msk [vmem:[#allocation2 + $0x68] sm:$0xff] %vm528, 0.0
        %544 = vst.msk [vmem:[#allocation2 + $0x70] sm:$0x3] %vm531, 0.0
        %545 = vst.msk [vmem:[#allocation2 + $0x78] sm:$0xff] %vm528, 0.0
        %546 = vst.msk [vmem:[#allocation2 + $0x80] sm:$0xff] %vm528, 0.0
        %547 = vst.msk [vmem:[#allocation2 + $0x88] sm:$0x3] %vm531, 0.0
        %548 = vst.msk [vmem:[#allocation2 + $0x90] sm:$0xff] %vm528, 0.0
        %549 = vst.msk [vmem:[#allocation2 + $0x98] sm:$0xff] %vm528, 0.0
        %550 = vst.msk [vmem:[#allocation2 + $0xa0] sm:$0x3] %vm531, 0.0
        %551 = vst.msk [vmem:[#allocation2 + $0xa8] sm:$0xff] %vm528, 0.0
        %552 = vst.msk [vmem:[#allocation2 + $0xb0] sm:$0xff] %vm528, 0.0
        %553 = vst.msk [vmem:[#allocation2 + $0xb8] sm:$0x3] %vm531, 0.0
        %554 = vst.msk [vmem:[#allocation2 + $0xc0] sm:$0xff] %vm528, 0.0
        %555 = vst.msk [vmem:[#allocation2 + $0xc8] sm:$0xff] %vm528, 0.0
        %556 = vst.msk [vmem:[#allocation2 + $0xd0] sm:$0x3] %vm531, 0.0
        %557 = vst.msk [vmem:[#allocation2 + $0xd8] sm:$0xff] %vm528, 0.0
        %558 = vst.msk [vmem:[#allocation2 + $0xe0] sm:$0xff] %vm528, 0.0
        %559 = vst.msk [vmem:[#allocation2 + $0xe8] sm:$0x3] %vm531, 0.0
        %560 = vst.msk [vmem:[#allocation2 + $0xf0] sm:$0xff] %vm528, 0.0
        %561 = vst.msk [vmem:[#allocation2 + $0xf8] sm:$0xff] %vm528, 0.0
        %562 = vst.msk [vmem:[#allocation2 + $0x100] sm:$0x3] %vm531, 0.0
        %563 = vst.msk [vmem:[#allocation2 + $0x108] sm:$0xff] %vm528, 0.0
        %564 = vst.msk [vmem:[#allocation2 + $0x110] sm:$0xff] %vm528, 0.0
        %565 = vst.msk [vmem:[#allocation2 + $0x118] sm:$0x3] %vm531, 0.0
        %566 = vst.msk [vmem:[#allocation2 + $0x120] sm:$0xff] %vm528, 0.0
        %567 = vst.msk [vmem:[#allocation2 + $0x128] sm:$0xff] %vm528, 0.0
        %568 = vst.msk [vmem:[#allocation2 + $0x130] sm:$0x3] %vm531, 0.0
        %569 = vst.msk [vmem:[#allocation2 + $0x138] sm:$0xff] %vm528, 0.0
        %570 = vst.msk [vmem:[#allocation2 + $0x140] sm:$0xff] %vm528, 0.0
        %571 = vst.msk [vmem:[#allocation2 + $0x148] sm:$0x3] %vm531, 0.0
        %572 = vst.msk [vmem:[#allocation2 + $0x150] sm:$0xff] %vm528, 0.0
        %573 = vst.msk [vmem:[#allocation2 + $0x158] sm:$0xff] %vm528, 0.0
        %574 = vst.msk [vmem:[#allocation2 + $0x160] sm:$0x3] %vm531, 0.0
        %575 = vst.msk [vmem:[#allocation2 + $0x168] sm:$0xff] %vm528, 0.0
        %576 = vst.msk [vmem:[#allocation2 + $0x170] sm:$0xff] %vm528, 0.0
        %577 = vst.msk [vmem:[#allocation2 + $0x178] sm:$0x3] %vm531, 0.0
        %578 = vst.msk [vmem:[#allocation2 + $0x180] sm:$0xff] %vm528, 0.0
        %579 = vst.msk [vmem:[#allocation2 + $0x188] sm:$0xff] %vm528, 0.0
        %580 = vst.msk [vmem:[#allocation2 + $0x190] sm:$0x3] %vm531, 0.0
        %581 = vst.msk [vmem:[#allocation2 + $0x198] sm:$0xff] %vm528, 0.0
        %582 = vst.msk [vmem:[#allocation2 + $0x1a0] sm:$0xff] %vm528, 0.0
        %583 = vst.msk [vmem:[#allocation2 + $0x1a8] sm:$0x3] %vm531, 0.0
        %s584 = scalar_lea.vmem [#allocation2], 24
        %585 = vst.msk [vmem:[%s584 + $0x1] sm:$0xff] %vm528, %v433
        %586 = vst.msk [vmem:[%s584 + $0x9] sm:$0xff] %vm528, %v436
        %587 = vst.msk [vmem:[%s584 + $0x19] sm:$0xff] %vm528, %v439
        %588 = vst.msk [vmem:[%s584 + $0x21] sm:$0xff] %vm528, %v442
        %589 = vst.msk [vmem:[%s584 + $0x31] sm:$0xff] %vm528, %v445
        %590 = vst.msk [vmem:[%s584 + $0x39] sm:$0xff] %vm528, %v448
        %591 = vst.msk [vmem:[%s584 + $0x49] sm:$0xff] %vm528, %v451
        %592 = vst.msk [vmem:[%s584 + $0x51] sm:$0xff] %vm528, %v454
        %593 = vst.msk [vmem:[%s584 + $0x61] sm:$0xff] %vm528, %v457
        %594 = vst.msk [vmem:[%s584 + $0x69] sm:$0xff] %vm528, %v460
        %595 = vst.msk [vmem:[%s584 + $0x79] sm:$0xff] %vm528, %v463
        %596 = vst.msk [vmem:[%s584 + $0x81] sm:$0xff] %vm528, %v466
        %597 = vst.msk [vmem:[%s584 + $0x91] sm:$0xff] %vm528, %v469
        %598 = vst.msk [vmem:[%s584 + $0x99] sm:$0xff] %vm528, %v472
        %599 = vst.msk [vmem:[%s584 + $0xa9] sm:$0xff] %vm528, %v475
        %600 = vst.msk [vmem:[%s584 + $0xb1] sm:$0xff] %vm528, %v478
        %601 = vst.msk [vmem:[%s584 + $0xc1] sm:$0xff] %vm528, %v481
        %602 = vst.msk [vmem:[%s584 + $0xc9] sm:$0xff] %vm528, %v484
        %603 = vst.msk [vmem:[%s584 + $0xd9] sm:$0xff] %vm528, %v487
        %604 = vst.msk [vmem:[%s584 + $0xe1] sm:$0xff] %vm528, %v490
        %605 = vst.msk [vmem:[%s584 + $0xf1] sm:$0xff] %vm528, %v493
        %606 = vst.msk [vmem:[%s584 + $0xf9] sm:$0xff] %vm528, %v496
        %607 = vst.msk [vmem:[%s584 + $0x109] sm:$0xff] %vm528, %v499
        %608 = vst.msk [vmem:[%s584 + $0x111] sm:$0xff] %vm528, %v502
        %609 = vst.msk [vmem:[%s584 + $0x121] sm:$0xff] %vm528, %v505
        %610 = vst.msk [vmem:[%s584 + $0x129] sm:$0xff] %vm528, %v508
        %611 = vst.msk [vmem:[%s584 + $0x139] sm:$0xff] %vm528, %v511
        %612 = vst.msk [vmem:[%s584 + $0x141] sm:$0xff] %vm528, %v514
        %613 = vst.msk [vmem:[%s584 + $0x151] sm:$0xff] %vm528, %v517
        %614 = vst.msk [vmem:[%s584 + $0x159] sm:$0xff] %vm528, %v520
        %615 = vst.msk [vmem:[%s584 + $0x169] sm:$0xff] %vm528, %v523
        %616 = vst.msk [vmem:[%s584 + $0x171] sm:$0xff] %vm528, %v526
        %v617 = vld [vmem:[#allocation2] sm:$0xff]
        %v618 = vld [vmem:[#allocation2 + $0x8] sm:$0xff]
        %v619 = vld [vmem:[#allocation2 + $0x10] sm:$0x3]
        %v620 = vld [vmem:[#allocation2 + $0x18] sm:$0xff]
        %v621 = vld [vmem:[#allocation2 + $0x20] sm:$0xff]
        %v622 = vld [vmem:[#allocation2 + $0x28] sm:$0x3]
        %v623 = vld [vmem:[#allocation2 + $0x30] sm:$0xff]
        %v624 = vld [vmem:[#allocation2 + $0x38] sm:$0xff]
        %v625 = vld [vmem:[#allocation2 + $0x40] sm:$0x3]
        %v626 = vld [vmem:[#allocation2 + $0x48] sm:$0xff]
        %v627 = vld [vmem:[#allocation2 + $0x50] sm:$0xff]
        %v628 = vld [vmem:[#allocation2 + $0x58] sm:$0x3]
        %v629 = vld [vmem:[#allocation2 + $0x60] sm:$0xff]
        %v630 = vld [vmem:[#allocation2 + $0x68] sm:$0xff]
        %v631 = vld [vmem:[#allocation2 + $0x70] sm:$0x3]
        %v632 = vld [vmem:[#allocation2 + $0x78] sm:$0xff]
        %v633 = vld [vmem:[#allocation2 + $0x80] sm:$0xff]
        %v634 = vld [vmem:[#allocation2 + $0x88] sm:$0x3]
        %v635 = vld [vmem:[#allocation2 + $0x90] sm:$0xff]
        %v636 = vld [vmem:[#allocation2 + $0x98] sm:$0xff]
        %v637 = vld [vmem:[#allocation2 + $0xa0] sm:$0x3]
        %v638 = vld [vmem:[#allocation2 + $0xa8] sm:$0xff]
        %v639 = vld [vmem:[#allocation2 + $0xb0] sm:$0xff]
        %v640 = vld [vmem:[#allocation2 + $0xb8] sm:$0x3]
        %v641 = vld [vmem:[#allocation2 + $0xc0] sm:$0xff]
        %v642 = vld [vmem:[#allocation2 + $0xc8] sm:$0xff]
        %v643 = vld [vmem:[#allocation2 + $0xd0] sm:$0x3]
        %v644 = vld [vmem:[#allocation2 + $0xd8] sm:$0xff]
        %v645 = vld [vmem:[#allocation2 + $0xe0] sm:$0xff]
        %v646 = vld [vmem:[#allocation2 + $0xe8] sm:$0x3]
        %v647 = vld [vmem:[#allocation2 + $0xf0] sm:$0xff]
        %v648 = vld [vmem:[#allocation2 + $0xf8] sm:$0xff]
        %v649 = vld [vmem:[#allocation2 + $0x100] sm:$0x3]
        %v650 = vld [vmem:[#allocation2 + $0x108] sm:$0xff]
        %v651 = vld [vmem:[#allocation2 + $0x110] sm:$0xff]
        %v652 = vld [vmem:[#allocation2 + $0x118] sm:$0x3]
        %v653 = vld [vmem:[#allocation2 + $0x120] sm:$0xff]
        %v654 = vld [vmem:[#allocation2 + $0x128] sm:$0xff]
        %v655 = vld [vmem:[#allocation2 + $0x130] sm:$0x3]
        %v656 = vld [vmem:[#allocation2 + $0x138] sm:$0xff]
        %v657 = vld [vmem:[#allocation2 + $0x140] sm:$0xff]
        %v658 = vld [vmem:[#allocation2 + $0x148] sm:$0x3]
        %v659 = vld [vmem:[#allocation2 + $0x150] sm:$0xff]
        %v660 = vld [vmem:[#allocation2 + $0x158] sm:$0xff]
        %v661 = vld [vmem:[#allocation2 + $0x160] sm:$0x3]
        %v662 = vld [vmem:[#allocation2 + $0x168] sm:$0xff]
        %v663 = vld [vmem:[#allocation2 + $0x170] sm:$0xff]
        %v664 = vld [vmem:[#allocation2 + $0x178] sm:$0x3]
        %v665 = vld [vmem:[#allocation2 + $0x180] sm:$0xff]
        %v666 = vld [vmem:[#allocation2 + $0x188] sm:$0xff]
        %v667 = vld [vmem:[#allocation2 + $0x190] sm:$0x3]
        %v668 = vld [vmem:[#allocation2 + $0x198] sm:$0xff]
        %v669 = vld [vmem:[#allocation2 + $0x1a0] sm:$0xff]
        %v670 = vld [vmem:[#allocation2 + $0x1a8] sm:$0x3]
        %vm719 = vcmask 1046528
        %v720 = vrot.slane %v617, 1
        %v721 = vrot.slane %v618, 1
        %v722 = vsel %vm719, %v720, %v721
        %v723 = vrot.slane %v619, 1
        %v724 = vsel %vm719, %v721, %v723
        %v725 = vrot.slane %v620, 1
        %v726 = vrot.slane %v621, 1
        %v727 = vsel %vm719, %v725, %v726
        %v728 = vrot.slane %v622, 1
        %v729 = vsel %vm719, %v726, %v728
        %v730 = vrot.slane %v623, 1
        %v731 = vrot.slane %v624, 1
        %v732 = vsel %vm719, %v730, %v731
        %v733 = vrot.slane %v625, 1
        %v734 = vsel %vm719, %v731, %v733
        %v735 = vrot.slane %v626, 1
        %v736 = vrot.slane %v627, 1
        %v737 = vsel %vm719, %v735, %v736
        %v738 = vrot.slane %v628, 1
        %v739 = vsel %vm719, %v736, %v738
        %v740 = vrot.slane %v629, 1
        %v741 = vrot.slane %v630, 1
        %v742 = vsel %vm719, %v740, %v741
        %v743 = vrot.slane %v631, 1
        %v744 = vsel %vm719, %v741, %v743
        %v745 = vrot.slane %v632, 1
        %v746 = vrot.slane %v633, 1
        %v747 = vsel %vm719, %v745, %v746
        %v748 = vrot.slane %v634, 1
        %v749 = vsel %vm719, %v746, %v748
        %v750 = vrot.slane %v635, 1
        %v751 = vrot.slane %v636, 1
        %v752 = vsel %vm719, %v750, %v751
        %v753 = vrot.slane %v637, 1
        %v754 = vsel %vm719, %v751, %v753
        %v755 = vrot.slane %v638, 1
        %v756 = vrot.slane %v639, 1
        %v757 = vsel %vm719, %v755, %v756
        %v758 = vrot.slane %v640, 1
        %v759 = vsel %vm719, %v756, %v758
        %v760 = vrot.slane %v641, 1
        %v761 = vrot.slane %v642, 1
        %v762 = vsel %vm719, %v760, %v761
        %v763 = vrot.slane %v643, 1
        %v764 = vsel %vm719, %v761, %v763
        %v765 = vrot.slane %v644, 1
        %v766 = vrot.slane %v645, 1
        %v767 = vsel %vm719, %v765, %v766
        %v768 = vrot.slane %v646, 1
        %v769 = vsel %vm719, %v766, %v768
        %v770 = vrot.slane %v647, 1
        %v771 = vrot.slane %v648, 1
        %v772 = vsel %vm719, %v770, %v771
        %v773 = vrot.slane %v649, 1
        %v774 = vsel %vm719, %v771, %v773
        %v775 = vrot.slane %v650, 1
        %v776 = vrot.slane %v651, 1
        %v777 = vsel %vm719, %v775, %v776
        %v778 = vrot.slane %v652, 1
        %v779 = vsel %vm719, %v776, %v778
        %v780 = vrot.slane %v653, 1
        %v781 = vrot.slane %v654, 1
        %v782 = vsel %vm719, %v780, %v781
        %v783 = vrot.slane %v655, 1
        %v784 = vsel %vm719, %v781, %v783
        %v785 = vrot.slane %v656, 1
        %v786 = vrot.slane %v657, 1
        %v787 = vsel %vm719, %v785, %v786
        %v788 = vrot.slane %v658, 1
        %v789 = vsel %vm719, %v786, %v788
        %v790 = vrot.slane %v659, 1
        %v791 = vrot.slane %v660, 1
        %v792 = vsel %vm719, %v790, %v791
        %v793 = vrot.slane %v661, 1
        %v794 = vsel %vm719, %v791, %v793
        %v795 = vrot.slane %v662, 1
        %v796 = vrot.slane %v663, 1
        %v797 = vsel %vm719, %v795, %v796
        %v798 = vrot.slane %v664, 1
        %v799 = vsel %vm719, %v796, %v798
        %vm800 = vcmask 1045504
        %v801 = vrot.slane %v617, 2
        %v802 = vrot.slane %v618, 2
        %v803 = vsel %vm800, %v801, %v802
        %v804 = vrot.slane %v619, 2
        %v805 = vsel %vm800, %v802, %v804
        %v806 = vrot.slane %v620, 2
        %v807 = vrot.slane %v621, 2
        %v808 = vsel %vm800, %v806, %v807
        %v809 = vrot.slane %v622, 2
        %v810 = vsel %vm800, %v807, %v809
        %v811 = vrot.slane %v623, 2
        %v812 = vrot.slane %v624, 2
        %v813 = vsel %vm800, %v811, %v812
        %v814 = vrot.slane %v625, 2
        %v815 = vsel %vm800, %v812, %v814
        %v816 = vrot.slane %v626, 2
        %v817 = vrot.slane %v627, 2
        %v818 = vsel %vm800, %v816, %v817
        %v819 = vrot.slane %v628, 2
        %v820 = vsel %vm800, %v817, %v819
        %v821 = vrot.slane %v629, 2
        %v822 = vrot.slane %v630, 2
        %v823 = vsel %vm800, %v821, %v822
        %v824 = vrot.slane %v631, 2
        %v825 = vsel %vm800, %v822, %v824
        %v826 = vrot.slane %v632, 2
        %v827 = vrot.slane %v633, 2
        %v828 = vsel %vm800, %v826, %v827
        %v829 = vrot.slane %v634, 2
        %v830 = vsel %vm800, %v827, %v829
        %v831 = vrot.slane %v635, 2
        %v832 = vrot.slane %v636, 2
        %v833 = vsel %vm800, %v831, %v832
        %v834 = vrot.slane %v637, 2
        %v835 = vsel %vm800, %v832, %v834
        %v836 = vrot.slane %v638, 2
        %v837 = vrot.slane %v639, 2
        %v838 = vsel %vm800, %v836, %v837
        %v839 = vrot.slane %v640, 2
        %v840 = vsel %vm800, %v837, %v839
        %v841 = vrot.slane %v641, 2
        %v842 = vrot.slane %v642, 2
        %v843 = vsel %vm800, %v841, %v842
        %v844 = vrot.slane %v643, 2
        %v845 = vsel %vm800, %v842, %v844
        %v846 = vrot.slane %v644, 2
        %v847 = vrot.slane %v645, 2
        %v848 = vsel %vm800, %v846, %v847
        %v849 = vrot.slane %v646, 2
        %v850 = vsel %vm800, %v847, %v849
        %v851 = vrot.slane %v647, 2
        %v852 = vrot.slane %v648, 2
        %v853 = vsel %vm800, %v851, %v852
        %v854 = vrot.slane %v649, 2
        %v855 = vsel %vm800, %v852, %v854
        %v856 = vrot.slane %v650, 2
        %v857 = vrot.slane %v651, 2
        %v858 = vsel %vm800, %v856, %v857
        %v859 = vrot.slane %v652, 2
        %v860 = vsel %vm800, %v857, %v859
        %v861 = vrot.slane %v653, 2
        %v862 = vrot.slane %v654, 2
        %v863 = vsel %vm800, %v861, %v862
        %v864 = vrot.slane %v655, 2
        %v865 = vsel %vm800, %v862, %v864
        %v866 = vrot.slane %v656, 2
        %v867 = vrot.slane %v657, 2
        %v868 = vsel %vm800, %v866, %v867
        %v869 = vrot.slane %v658, 2
        %v870 = vsel %vm800, %v867, %v869
        %v871 = vrot.slane %v659, 2
        %v872 = vrot.slane %v660, 2
        %v873 = vsel %vm800, %v871, %v872
        %v874 = vrot.slane %v661, 2
        %v875 = vsel %vm800, %v872, %v874
        %v876 = vrot.slane %v662, 2
        %v877 = vrot.slane %v663, 2
        %v878 = vsel %vm800, %v876, %v877
        %v879 = vrot.slane %v664, 2
        %v880 = vsel %vm800, %v877, %v879
        %v884 = vrot.slane %v665, 1
        %v885 = vrot.slane %v666, 1
        %v886 = vsel %vm719, %v884, %v885
        %v887 = vrot.slane %v667, 1
        %v888 = vsel %vm719, %v885, %v887
        %v889 = vrot.slane %v665, 2
        %v890 = vrot.slane %v666, 2
        %v891 = vsel %vm800, %v889, %v890
        %v892 = vrot.slane %v667, 2
        %v893 = vsel %vm800, %v890, %v892
        %v897 = vrot.slane %v668, 1
        %v898 = vrot.slane %v669, 1
        %v899 = vsel %vm719, %v897, %v898
        %v900 = vrot.slane %v670, 1
        %v901 = vsel %vm719, %v898, %v900
        %v902 = vrot.slane %v668, 2
        %v903 = vrot.slane %v669, 2
        %v904 = vsel %vm800, %v902, %v903
        %v905 = vrot.slane %v670, 2
        %v906 = vsel %vm800, %v903, %v905
        %907 = vrot.lane.b32.xlu0 %v722, 10
        %v908 = vpop.permute.xlu0 %907
        %909 = vrot.lane.b32.xlu0 %v724, 10
        %v910 = vpop.permute.xlu0 %909
        %911 = vrot.lane.b32.xlu0 %v727, 10
        %v912 = vpop.permute.xlu0 %911
        %913 = vrot.lane.b32.xlu0 %v729, 10
        %v914 = vpop.permute.xlu0 %913
        %915 = vrot.lane.b32.xlu0 %v732, 10
        %v916 = vpop.permute.xlu0 %915
        %917 = vrot.lane.b32.xlu0 %v734, 10
        %v918 = vpop.permute.xlu0 %917
        %919 = vrot.lane.b32.xlu0 %v737, 10
        %v920 = vpop.permute.xlu0 %919
        %921 = vrot.lane.b32.xlu0 %v739, 10
        %v922 = vpop.permute.xlu0 %921
        %923 = vrot.lane.b32.xlu0 %v742, 10
        %v924 = vpop.permute.xlu0 %923
        %925 = vrot.lane.b32.xlu0 %v744, 10
        %v926 = vpop.permute.xlu0 %925
        %927 = vrot.lane.b32.xlu0 %v747, 10
        %v928 = vpop.permute.xlu0 %927
        %929 = vrot.lane.b32.xlu0 %v749, 10
        %v930 = vpop.permute.xlu0 %929
        %931 = vrot.lane.b32.xlu0 %v752, 10
        %v932 = vpop.permute.xlu0 %931
        %933 = vrot.lane.b32.xlu0 %v754, 10
        %v934 = vpop.permute.xlu0 %933
        %935 = vrot.lane.b32.xlu0 %v757, 10
        %v936 = vpop.permute.xlu0 %935
        %937 = vrot.lane.b32.xlu0 %v759, 10
        %v938 = vpop.permute.xlu0 %937
        %939 = vrot.lane.b32.xlu0 %v762, 10
        %v940 = vpop.permute.xlu0 %939
        %941 = vrot.lane.b32.xlu0 %v764, 10
        %v942 = vpop.permute.xlu0 %941
        %943 = vrot.lane.b32.xlu0 %v767, 10
        %v944 = vpop.permute.xlu0 %943
        %945 = vrot.lane.b32.xlu0 %v769, 10
        %v946 = vpop.permute.xlu0 %945
        %947 = vrot.lane.b32.xlu0 %v772, 10
        %v948 = vpop.permute.xlu0 %947
        %949 = vrot.lane.b32.xlu0 %v774, 10
        %v950 = vpop.permute.xlu0 %949
        %951 = vrot.lane.b32.xlu0 %v777, 10
        %v952 = vpop.permute.xlu0 %951
        %953 = vrot.lane.b32.xlu0 %v779, 10
        %v954 = vpop.permute.xlu0 %953
        %955 = vrot.lane.b32.xlu0 %v782, 10
        %v956 = vpop.permute.xlu0 %955
        %957 = vrot.lane.b32.xlu0 %v784, 10
        %v958 = vpop.permute.xlu0 %957
        %959 = vrot.lane.b32.xlu0 %v787, 10
        %v960 = vpop.permute.xlu0 %959
        %961 = vrot.lane.b32.xlu0 %v789, 10
        %v962 = vpop.permute.xlu0 %961
        %963 = vrot.lane.b32.xlu0 %v792, 10
        %v964 = vpop.permute.xlu0 %963
        %965 = vrot.lane.b32.xlu0 %v794, 10
        %v966 = vpop.permute.xlu0 %965
        %967 = vrot.lane.b32.xlu0 %v797, 10
        %v968 = vpop.permute.xlu0 %967
        %969 = vrot.lane.b32.xlu0 %v799, 10
        %v970 = vpop.permute.xlu0 %969
        %1003 = vrot.lane.b32.xlu0 %v803, 20
        %v1004 = vpop.permute.xlu0 %1003
        %1005 = vrot.lane.b32.xlu0 %v805, 20
        %v1006 = vpop.permute.xlu0 %1005
        %1007 = vrot.lane.b32.xlu0 %v808, 20
        %v1008 = vpop.permute.xlu0 %1007
        %1009 = vrot.lane.b32.xlu0 %v810, 20
        %v1010 = vpop.permute.xlu0 %1009
        %1011 = vrot.lane.b32.xlu0 %v813, 20
        %v1012 = vpop.permute.xlu0 %1011
        %1013 = vrot.lane.b32.xlu0 %v815, 20
        %v1014 = vpop.permute.xlu0 %1013
        %1015 = vrot.lane.b32.xlu0 %v818, 20
        %v1016 = vpop.permute.xlu0 %1015
        %1017 = vrot.lane.b32.xlu0 %v820, 20
        %v1018 = vpop.permute.xlu0 %1017
        %1019 = vrot.lane.b32.xlu0 %v823, 20
        %v1020 = vpop.permute.xlu0 %1019
        %1021 = vrot.lane.b32.xlu0 %v825, 20
        %v1022 = vpop.permute.xlu0 %1021
        %1023 = vrot.lane.b32.xlu0 %v828, 20
        %v1024 = vpop.permute.xlu0 %1023
        %1025 = vrot.lane.b32.xlu0 %v830, 20
        %v1026 = vpop.permute.xlu0 %1025
        %1027 = vrot.lane.b32.xlu0 %v833, 20
        %v1028 = vpop.permute.xlu0 %1027
        %1029 = vrot.lane.b32.xlu0 %v835, 20
        %v1030 = vpop.permute.xlu0 %1029
        %1031 = vrot.lane.b32.xlu0 %v838, 20
        %v1032 = vpop.permute.xlu0 %1031
        %1033 = vrot.lane.b32.xlu0 %v840, 20
        %v1034 = vpop.permute.xlu0 %1033
        %1035 = vrot.lane.b32.xlu0 %v843, 20
        %v1036 = vpop.permute.xlu0 %1035
        %1037 = vrot.lane.b32.xlu0 %v845, 20
        %v1038 = vpop.permute.xlu0 %1037
        %1039 = vrot.lane.b32.xlu0 %v848, 20
        %v1040 = vpop.permute.xlu0 %1039
        %1041 = vrot.lane.b32.xlu0 %v850, 20
        %v1042 = vpop.permute.xlu0 %1041
        %1043 = vrot.lane.b32.xlu0 %v853, 20
        %v1044 = vpop.permute.xlu0 %1043
        %1045 = vrot.lane.b32.xlu0 %v855, 20
        %v1046 = vpop.permute.xlu0 %1045
        %1047 = vrot.lane.b32.xlu0 %v858, 20
        %v1048 = vpop.permute.xlu0 %1047
        %1049 = vrot.lane.b32.xlu0 %v860, 20
        %v1050 = vpop.permute.xlu0 %1049
        %1051 = vrot.lane.b32.xlu0 %v863, 20
        %v1052 = vpop.permute.xlu0 %1051
        %1053 = vrot.lane.b32.xlu0 %v865, 20
        %v1054 = vpop.permute.xlu0 %1053
        %1055 = vrot.lane.b32.xlu0 %v868, 20
        %v1056 = vpop.permute.xlu0 %1055
        %1057 = vrot.lane.b32.xlu0 %v870, 20
        %v1058 = vpop.permute.xlu0 %1057
        %1059 = vrot.lane.b32.xlu0 %v873, 20
        %v1060 = vpop.permute.xlu0 %1059
        %1061 = vrot.lane.b32.xlu0 %v875, 20
        %v1062 = vpop.permute.xlu0 %1061
        %1063 = vrot.lane.b32.xlu0 %v878, 20
        %v1064 = vpop.permute.xlu0 %1063
        %1065 = vrot.lane.b32.xlu0 %v880, 20
        %v1066 = vpop.permute.xlu0 %1065
        %1099 = vrot.lane.b32.xlu0 %v620, 30
        %v1100 = vpop.permute.xlu0 %1099
        %1101 = vrot.lane.b32.xlu0 %v621, 30
        %v1102 = vpop.permute.xlu0 %1101
        %1103 = vrot.lane.b32.xlu0 %v623, 30
        %v1104 = vpop.permute.xlu0 %1103
        %1105 = vrot.lane.b32.xlu0 %v624, 30
        %v1106 = vpop.permute.xlu0 %1105
        %1107 = vrot.lane.b32.xlu0 %v626, 30
        %v1108 = vpop.permute.xlu0 %1107
        %1109 = vrot.lane.b32.xlu0 %v627, 30
        %v1110 = vpop.permute.xlu0 %1109
        %1111 = vrot.lane.b32.xlu0 %v629, 30
        %v1112 = vpop.permute.xlu0 %1111
        %1113 = vrot.lane.b32.xlu0 %v630, 30
        %v1114 = vpop.permute.xlu0 %1113
        %1115 = vrot.lane.b32.xlu0 %v632, 30
        %v1116 = vpop.permute.xlu0 %1115
        %1117 = vrot.lane.b32.xlu0 %v633, 30
        %v1118 = vpop.permute.xlu0 %1117
        %1119 = vrot.lane.b32.xlu0 %v635, 30
        %v1120 = vpop.permute.xlu0 %1119
        %1121 = vrot.lane.b32.xlu0 %v636, 30
        %v1122 = vpop.permute.xlu0 %1121
        %1123 = vrot.lane.b32.xlu0 %v638, 30
        %v1124 = vpop.permute.xlu0 %1123
        %1125 = vrot.lane.b32.xlu0 %v639, 30
        %v1126 = vpop.permute.xlu0 %1125
        %1127 = vrot.lane.b32.xlu0 %v641, 30
        %v1128 = vpop.permute.xlu0 %1127
        %1129 = vrot.lane.b32.xlu0 %v642, 30
        %v1130 = vpop.permute.xlu0 %1129
        %1131 = vrot.lane.b32.xlu0 %v644, 30
        %v1132 = vpop.permute.xlu0 %1131
        %1133 = vrot.lane.b32.xlu0 %v645, 30
        %v1134 = vpop.permute.xlu0 %1133
        %1135 = vrot.lane.b32.xlu0 %v647, 30
        %v1136 = vpop.permute.xlu0 %1135
        %1137 = vrot.lane.b32.xlu0 %v648, 30
        %v1138 = vpop.permute.xlu0 %1137
        %1139 = vrot.lane.b32.xlu0 %v650, 30
        %v1140 = vpop.permute.xlu0 %1139
        %1141 = vrot.lane.b32.xlu0 %v651, 30
        %v1142 = vpop.permute.xlu0 %1141
        %1143 = vrot.lane.b32.xlu0 %v653, 30
        %v1144 = vpop.permute.xlu0 %1143
        %1145 = vrot.lane.b32.xlu0 %v654, 30
        %v1146 = vpop.permute.xlu0 %1145
        %1147 = vrot.lane.b32.xlu0 %v656, 30
        %v1148 = vpop.permute.xlu0 %1147
        %1149 = vrot.lane.b32.xlu0 %v657, 30
        %v1150 = vpop.permute.xlu0 %1149
        %1151 = vrot.lane.b32.xlu0 %v659, 30
        %v1152 = vpop.permute.xlu0 %1151
        %1153 = vrot.lane.b32.xlu0 %v660, 30
        %v1154 = vpop.permute.xlu0 %1153
        %1155 = vrot.lane.b32.xlu0 %v662, 30
        %v1156 = vpop.permute.xlu0 %1155
        %1157 = vrot.lane.b32.xlu0 %v663, 30
        %v1158 = vpop.permute.xlu0 %1157
        %1159 = vrot.lane.b32.xlu0 %v665, 30
        %v1160 = vpop.permute.xlu0 %1159
        %1161 = vrot.lane.b32.xlu0 %v666, 30
        %v1162 = vpop.permute.xlu0 %1161
        %1195 = vrot.lane.b32.xlu0 %v727, 40
        %v1196 = vpop.permute.xlu0 %1195
        %1197 = vrot.lane.b32.xlu0 %v729, 40
        %v1198 = vpop.permute.xlu0 %1197
        %1199 = vrot.lane.b32.xlu0 %v732, 40
        %v1200 = vpop.permute.xlu0 %1199
        %1201 = vrot.lane.b32.xlu0 %v734, 40
        %v1202 = vpop.permute.xlu0 %1201
        %1203 = vrot.lane.b32.xlu0 %v737, 40
        %v1204 = vpop.permute.xlu0 %1203
        %1205 = vrot.lane.b32.xlu0 %v739, 40
        %v1206 = vpop.permute.xlu0 %1205
        %1207 = vrot.lane.b32.xlu0 %v742, 40
        %v1208 = vpop.permute.xlu0 %1207
        %1209 = vrot.lane.b32.xlu0 %v744, 40
        %v1210 = vpop.permute.xlu0 %1209
        %1211 = vrot.lane.b32.xlu0 %v747, 40
        %v1212 = vpop.permute.xlu0 %1211
        %1213 = vrot.lane.b32.xlu0 %v749, 40
        %v1214 = vpop.permute.xlu0 %1213
        %1215 = vrot.lane.b32.xlu0 %v752, 40
        %v1216 = vpop.permute.xlu0 %1215
        %1217 = vrot.lane.b32.xlu0 %v754, 40
        %v1218 = vpop.permute.xlu0 %1217
        %1219 = vrot.lane.b32.xlu0 %v757, 40
        %v1220 = vpop.permute.xlu0 %1219
        %1221 = vrot.lane.b32.xlu0 %v759, 40
        %v1222 = vpop.permute.xlu0 %1221
        %1223 = vrot.lane.b32.xlu0 %v762, 40
        %v1224 = vpop.permute.xlu0 %1223
        %1225 = vrot.lane.b32.xlu0 %v764, 40
        %v1226 = vpop.permute.xlu0 %1225
        %1227 = vrot.lane.b32.xlu0 %v767, 40
        %v1228 = vpop.permute.xlu0 %1227
        %1229 = vrot.lane.b32.xlu0 %v769, 40
        %v1230 = vpop.permute.xlu0 %1229
        %1231 = vrot.lane.b32.xlu0 %v772, 40
        %v1232 = vpop.permute.xlu0 %1231
        %1233 = vrot.lane.b32.xlu0 %v774, 40
        %v1234 = vpop.permute.xlu0 %1233
        %1235 = vrot.lane.b32.xlu0 %v777, 40
        %v1236 = vpop.permute.xlu0 %1235
        %1237 = vrot.lane.b32.xlu0 %v779, 40
        %v1238 = vpop.permute.xlu0 %1237
        %1239 = vrot.lane.b32.xlu0 %v782, 40
        %v1240 = vpop.permute.xlu0 %1239
        %1241 = vrot.lane.b32.xlu0 %v784, 40
        %v1242 = vpop.permute.xlu0 %1241
        %1243 = vrot.lane.b32.xlu0 %v787, 40
        %v1244 = vpop.permute.xlu0 %1243
        %1245 = vrot.lane.b32.xlu0 %v789, 40
        %v1246 = vpop.permute.xlu0 %1245
        %1247 = vrot.lane.b32.xlu0 %v792, 40
        %v1248 = vpop.permute.xlu0 %1247
        %1249 = vrot.lane.b32.xlu0 %v794, 40
        %v1250 = vpop.permute.xlu0 %1249
        %1251 = vrot.lane.b32.xlu0 %v797, 40
        %v1252 = vpop.permute.xlu0 %1251
        %1253 = vrot.lane.b32.xlu0 %v799, 40
        %v1254 = vpop.permute.xlu0 %1253
        %1255 = vrot.lane.b32.xlu0 %v886, 40
        %v1256 = vpop.permute.xlu0 %1255
        %1257 = vrot.lane.b32.xlu0 %v888, 40
        %v1258 = vpop.permute.xlu0 %1257
        %1291 = vrot.lane.b32.xlu0 %v808, 50
        %v1292 = vpop.permute.xlu0 %1291
        %1293 = vrot.lane.b32.xlu0 %v810, 50
        %v1294 = vpop.permute.xlu0 %1293
        %1295 = vrot.lane.b32.xlu0 %v813, 50
        %v1296 = vpop.permute.xlu0 %1295
        %1297 = vrot.lane.b32.xlu0 %v815, 50
        %v1298 = vpop.permute.xlu0 %1297
        %1299 = vrot.lane.b32.xlu0 %v818, 50
        %v1300 = vpop.permute.xlu0 %1299
        %1301 = vrot.lane.b32.xlu0 %v820, 50
        %v1302 = vpop.permute.xlu0 %1301
        %1303 = vrot.lane.b32.xlu0 %v823, 50
        %v1304 = vpop.permute.xlu0 %1303
        %1305 = vrot.lane.b32.xlu0 %v825, 50
        %v1306 = vpop.permute.xlu0 %1305
        %1307 = vrot.lane.b32.xlu0 %v828, 50
        %v1308 = vpop.permute.xlu0 %1307
        %1309 = vrot.lane.b32.xlu0 %v830, 50
        %v1310 = vpop.permute.xlu0 %1309
        %1311 = vrot.lane.b32.xlu0 %v833, 50
        %v1312 = vpop.permute.xlu0 %1311
        %1313 = vrot.lane.b32.xlu0 %v835, 50
        %v1314 = vpop.permute.xlu0 %1313
        %1315 = vrot.lane.b32.xlu0 %v838, 50
        %v1316 = vpop.permute.xlu0 %1315
        %1317 = vrot.lane.b32.xlu0 %v840, 50
        %v1318 = vpop.permute.xlu0 %1317
        %1319 = vrot.lane.b32.xlu0 %v843, 50
        %v1320 = vpop.permute.xlu0 %1319
        %1321 = vrot.lane.b32.xlu0 %v845, 50
        %v1322 = vpop.permute.xlu0 %1321
        %1323 = vrot.lane.b32.xlu0 %v848, 50
        %v1324 = vpop.permute.xlu0 %1323
        %1325 = vrot.lane.b32.xlu0 %v850, 50
        %v1326 = vpop.permute.xlu0 %1325
        %1327 = vrot.lane.b32.xlu0 %v853, 50
        %v1328 = vpop.permute.xlu0 %1327
        %1329 = vrot.lane.b32.xlu0 %v855, 50
        %v1330 = vpop.permute.xlu0 %1329
        %1331 = vrot.lane.b32.xlu0 %v858, 50
        %v1332 = vpop.permute.xlu0 %1331
        %1333 = vrot.lane.b32.xlu0 %v860, 50
        %v1334 = vpop.permute.xlu0 %1333
        %1335 = vrot.lane.b32.xlu0 %v863, 50
        %v1336 = vpop.permute.xlu0 %1335
        %1337 = vrot.lane.b32.xlu0 %v865, 50
        %v1338 = vpop.permute.xlu0 %1337
        %1339 = vrot.lane.b32.xlu0 %v868, 50
        %v1340 = vpop.permute.xlu0 %1339
        %1341 = vrot.lane.b32.xlu0 %v870, 50
        %v1342 = vpop.permute.xlu0 %1341
        %1343 = vrot.lane.b32.xlu0 %v873, 50
        %v1344 = vpop.permute.xlu0 %1343
        %1345 = vrot.lane.b32.xlu0 %v875, 50
        %v1346 = vpop.permute.xlu0 %1345
        %1347 = vrot.lane.b32.xlu0 %v878, 50
        %v1348 = vpop.permute.xlu0 %1347
        %1349 = vrot.lane.b32.xlu0 %v880, 50
        %v1350 = vpop.permute.xlu0 %1349
        %1351 = vrot.lane.b32.xlu0 %v891, 50
        %v1352 = vpop.permute.xlu0 %1351
        %1353 = vrot.lane.b32.xlu0 %v893, 50
        %v1354 = vpop.permute.xlu0 %1353
        %1387 = vrot.lane.b32.xlu0 %v623, 60
        %v1388 = vpop.permute.xlu0 %1387
        %1389 = vrot.lane.b32.xlu0 %v624, 60
        %v1390 = vpop.permute.xlu0 %1389
        %1391 = vrot.lane.b32.xlu0 %v626, 60
        %v1392 = vpop.permute.xlu0 %1391
        %1393 = vrot.lane.b32.xlu0 %v627, 60
        %v1394 = vpop.permute.xlu0 %1393
        %1395 = vrot.lane.b32.xlu0 %v629, 60
        %v1396 = vpop.permute.xlu0 %1395
        %1397 = vrot.lane.b32.xlu0 %v630, 60
        %v1398 = vpop.permute.xlu0 %1397
        %1399 = vrot.lane.b32.xlu0 %v632, 60
        %v1400 = vpop.permute.xlu0 %1399
        %1401 = vrot.lane.b32.xlu0 %v633, 60
        %v1402 = vpop.permute.xlu0 %1401
        %1403 = vrot.lane.b32.xlu0 %v635, 60
        %v1404 = vpop.permute.xlu0 %1403
        %1405 = vrot.lane.b32.xlu0 %v636, 60
        %v1406 = vpop.permute.xlu0 %1405
        %1407 = vrot.lane.b32.xlu0 %v638, 60
        %v1408 = vpop.permute.xlu0 %1407
        %1409 = vrot.lane.b32.xlu0 %v639, 60
        %v1410 = vpop.permute.xlu0 %1409
        %1411 = vrot.lane.b32.xlu0 %v641, 60
        %v1412 = vpop.permute.xlu0 %1411
        %1413 = vrot.lane.b32.xlu0 %v642, 60
        %v1414 = vpop.permute.xlu0 %1413
        %1415 = vrot.lane.b32.xlu0 %v644, 60
        %v1416 = vpop.permute.xlu0 %1415
        %1417 = vrot.lane.b32.xlu0 %v645, 60
        %v1418 = vpop.permute.xlu0 %1417
        %1419 = vrot.lane.b32.xlu0 %v647, 60
        %v1420 = vpop.permute.xlu0 %1419
        %1421 = vrot.lane.b32.xlu0 %v648, 60
        %v1422 = vpop.permute.xlu0 %1421
        %1423 = vrot.lane.b32.xlu0 %v650, 60
        %v1424 = vpop.permute.xlu0 %1423
        %1425 = vrot.lane.b32.xlu0 %v651, 60
        %v1426 = vpop.permute.xlu0 %1425
        %1427 = vrot.lane.b32.xlu0 %v653, 60
        %v1428 = vpop.permute.xlu0 %1427
        %1429 = vrot.lane.b32.xlu0 %v654, 60
        %v1430 = vpop.permute.xlu0 %1429
        %1431 = vrot.lane.b32.xlu0 %v656, 60
        %v1432 = vpop.permute.xlu0 %1431
        %1433 = vrot.lane.b32.xlu0 %v657, 60
        %v1434 = vpop.permute.xlu0 %1433
        %1435 = vrot.lane.b32.xlu0 %v659, 60
        %v1436 = vpop.permute.xlu0 %1435
        %1437 = vrot.lane.b32.xlu0 %v660, 60
        %v1438 = vpop.permute.xlu0 %1437
        %1439 = vrot.lane.b32.xlu0 %v662, 60
        %v1440 = vpop.permute.xlu0 %1439
        %1441 = vrot.lane.b32.xlu0 %v663, 60
        %v1442 = vpop.permute.xlu0 %1441
        %1443 = vrot.lane.b32.xlu0 %v665, 60
        %v1444 = vpop.permute.xlu0 %1443
        %1445 = vrot.lane.b32.xlu0 %v666, 60
        %v1446 = vpop.permute.xlu0 %1445
        %1447 = vrot.lane.b32.xlu0 %v668, 60
        %v1448 = vpop.permute.xlu0 %1447
        %1449 = vrot.lane.b32.xlu0 %v669, 60
        %v1450 = vpop.permute.xlu0 %1449
        %1483 = vrot.lane.b32.xlu0 %v732, 70
        %v1484 = vpop.permute.xlu0 %1483
        %1485 = vrot.lane.b32.xlu0 %v734, 70
        %v1486 = vpop.permute.xlu0 %1485
        %1487 = vrot.lane.b32.xlu0 %v737, 70
        %v1488 = vpop.permute.xlu0 %1487
        %1489 = vrot.lane.b32.xlu0 %v739, 70
        %v1490 = vpop.permute.xlu0 %1489
        %1491 = vrot.lane.b32.xlu0 %v742, 70
        %v1492 = vpop.permute.xlu0 %1491
        %1493 = vrot.lane.b32.xlu0 %v744, 70
        %v1494 = vpop.permute.xlu0 %1493
        %1495 = vrot.lane.b32.xlu0 %v747, 70
        %v1496 = vpop.permute.xlu0 %1495
        %1497 = vrot.lane.b32.xlu0 %v749, 70
        %v1498 = vpop.permute.xlu0 %1497
        %1499 = vrot.lane.b32.xlu0 %v752, 70
        %v1500 = vpop.permute.xlu0 %1499
        %1501 = vrot.lane.b32.xlu0 %v754, 70
        %v1502 = vpop.permute.xlu0 %1501
        %1503 = vrot.lane.b32.xlu0 %v757, 70
        %v1504 = vpop.permute.xlu0 %1503
        %1505 = vrot.lane.b32.xlu0 %v759, 70
        %v1506 = vpop.permute.xlu0 %1505
        %1507 = vrot.lane.b32.xlu0 %v762, 70
        %v1508 = vpop.permute.xlu0 %1507
        %1509 = vrot.lane.b32.xlu0 %v764, 70
        %v1510 = vpop.permute.xlu0 %1509
        %1511 = vrot.lane.b32.xlu0 %v767, 70
        %v1512 = vpop.permute.xlu0 %1511
        %1513 = vrot.lane.b32.xlu0 %v769, 70
        %v1514 = vpop.permute.xlu0 %1513
        %1515 = vrot.lane.b32.xlu0 %v772, 70
        %v1516 = vpop.permute.xlu0 %1515
        %1517 = vrot.lane.b32.xlu0 %v774, 70
        %v1518 = vpop.permute.xlu0 %1517
        %1519 = vrot.lane.b32.xlu0 %v777, 70
        %v1520 = vpop.permute.xlu0 %1519
        %1521 = vrot.lane.b32.xlu0 %v779, 70
        %v1522 = vpop.permute.xlu0 %1521
        %1523 = vrot.lane.b32.xlu0 %v782, 70
        %v1524 = vpop.permute.xlu0 %1523
        %1525 = vrot.lane.b32.xlu0 %v784, 70
        %v1526 = vpop.permute.xlu0 %1525
        %1527 = vrot.lane.b32.xlu0 %v787, 70
        %v1528 = vpop.permute.xlu0 %1527
        %1529 = vrot.lane.b32.xlu0 %v789, 70
        %v1530 = vpop.permute.xlu0 %1529
        %1531 = vrot.lane.b32.xlu0 %v792, 70
        %v1532 = vpop.permute.xlu0 %1531
        %1533 = vrot.lane.b32.xlu0 %v794, 70
        %v1534 = vpop.permute.xlu0 %1533
        %1535 = vrot.lane.b32.xlu0 %v797, 70
        %v1536 = vpop.permute.xlu0 %1535
        %1537 = vrot.lane.b32.xlu0 %v799, 70
        %v1538 = vpop.permute.xlu0 %1537
        %1539 = vrot.lane.b32.xlu0 %v886, 70
        %v1540 = vpop.permute.xlu0 %1539
        %1541 = vrot.lane.b32.xlu0 %v888, 70
        %v1542 = vpop.permute.xlu0 %1541
        %1543 = vrot.lane.b32.xlu0 %v899, 70
        %v1544 = vpop.permute.xlu0 %1543
        %1545 = vrot.lane.b32.xlu0 %v901, 70
        %v1546 = vpop.permute.xlu0 %1545
        %1579 = vrot.lane.b32.xlu0 %v813, 80
        %v1580 = vpop.permute.xlu0 %1579
        %1581 = vrot.lane.b32.xlu0 %v815, 80
        %v1582 = vpop.permute.xlu0 %1581
        %1583 = vrot.lane.b32.xlu0 %v818, 80
        %v1584 = vpop.permute.xlu0 %1583
        %1585 = vrot.lane.b32.xlu0 %v820, 80
        %v1586 = vpop.permute.xlu0 %1585
        %1587 = vrot.lane.b32.xlu0 %v823, 80
        %v1588 = vpop.permute.xlu0 %1587
        %1589 = vrot.lane.b32.xlu0 %v825, 80
        %v1590 = vpop.permute.xlu0 %1589
        %1591 = vrot.lane.b32.xlu0 %v828, 80
        %v1592 = vpop.permute.xlu0 %1591
        %1593 = vrot.lane.b32.xlu0 %v830, 80
        %v1594 = vpop.permute.xlu0 %1593
        %1595 = vrot.lane.b32.xlu0 %v833, 80
        %v1596 = vpop.permute.xlu0 %1595
        %1597 = vrot.lane.b32.xlu0 %v835, 80
        %v1598 = vpop.permute.xlu0 %1597
        %1599 = vrot.lane.b32.xlu0 %v838, 80
        %v1600 = vpop.permute.xlu0 %1599
        %1601 = vrot.lane.b32.xlu0 %v840, 80
        %v1602 = vpop.permute.xlu0 %1601
        %1603 = vrot.lane.b32.xlu0 %v843, 80
        %v1604 = vpop.permute.xlu0 %1603
        %1605 = vrot.lane.b32.xlu0 %v845, 80
        %v1606 = vpop.permute.xlu0 %1605
        %1607 = vrot.lane.b32.xlu0 %v848, 80
        %v1608 = vpop.permute.xlu0 %1607
        %1609 = vrot.lane.b32.xlu0 %v850, 80
        %v1610 = vpop.permute.xlu0 %1609
        %1611 = vrot.lane.b32.xlu0 %v853, 80
        %v1612 = vpop.permute.xlu0 %1611
        %1613 = vrot.lane.b32.xlu0 %v855, 80
        %v1614 = vpop.permute.xlu0 %1613
        %1615 = vrot.lane.b32.xlu0 %v858, 80
        %v1616 = vpop.permute.xlu0 %1615
        %1617 = vrot.lane.b32.xlu0 %v860, 80
        %v1618 = vpop.permute.xlu0 %1617
        %1619 = vrot.lane.b32.xlu0 %v863, 80
        %v1620 = vpop.permute.xlu0 %1619
        %1621 = vrot.lane.b32.xlu0 %v865, 80
        %v1622 = vpop.permute.xlu0 %1621
        %1623 = vrot.lane.b32.xlu0 %v868, 80
        %v1624 = vpop.permute.xlu0 %1623
        %1625 = vrot.lane.b32.xlu0 %v870, 80
        %v1626 = vpop.permute.xlu0 %1625
        %1627 = vrot.lane.b32.xlu0 %v873, 80
        %v1628 = vpop.permute.xlu0 %1627
        %1629 = vrot.lane.b32.xlu0 %v875, 80
        %v1630 = vpop.permute.xlu0 %1629
        %1631 = vrot.lane.b32.xlu0 %v878, 80
        %v1632 = vpop.permute.xlu0 %1631
        %1633 = vrot.lane.b32.xlu0 %v880, 80
        %v1634 = vpop.permute.xlu0 %1633
        %1635 = vrot.lane.b32.xlu0 %v891, 80
        %v1636 = vpop.permute.xlu0 %1635
        %1637 = vrot.lane.b32.xlu0 %v893, 80
        %v1638 = vpop.permute.xlu0 %1637
        %1639 = vrot.lane.b32.xlu0 %v904, 80
        %v1640 = vpop.permute.xlu0 %1639
        %1641 = vrot.lane.b32.xlu0 %v906, 80
        %v1642 = vpop.permute.xlu0 %1641
        %v1675 = vsel %vm528, %v617, %v908
        %v1676 = vsel %vm528, %v618, %v910
        %v1677 = vsel %vm528, %v620, %v912
        %v1678 = vsel %vm528, %v621, %v914
        %v1679 = vsel %vm528, %v623, %v916
        %v1680 = vsel %vm528, %v624, %v918
        %v1681 = vsel %vm528, %v626, %v920
        %v1682 = vsel %vm528, %v627, %v922
        %v1683 = vsel %vm528, %v629, %v924
        %v1684 = vsel %vm528, %v630, %v926
        %v1685 = vsel %vm528, %v632, %v928
        %v1686 = vsel %vm528, %v633, %v930
        %v1687 = vsel %vm528, %v635, %v932
        %v1688 = vsel %vm528, %v636, %v934
        %v1689 = vsel %vm528, %v638, %v936
        %v1690 = vsel %vm528, %v639, %v938
        %v1691 = vsel %vm528, %v641, %v940
        %v1692 = vsel %vm528, %v642, %v942
        %v1693 = vsel %vm528, %v644, %v944
        %v1694 = vsel %vm528, %v645, %v946
        %v1695 = vsel %vm528, %v647, %v948
        %v1696 = vsel %vm528, %v648, %v950
        %v1697 = vsel %vm528, %v650, %v952
        %v1698 = vsel %vm528, %v651, %v954
        %v1699 = vsel %vm528, %v653, %v956
        %v1700 = vsel %vm528, %v654, %v958
        %v1701 = vsel %vm528, %v656, %v960
        %v1702 = vsel %vm528, %v657, %v962
        %v1703 = vsel %vm528, %v659, %v964
        %v1704 = vsel %vm528, %v660, %v966
        %v1705 = vsel %vm528, %v662, %v968
        %v1706 = vsel %vm528, %v663, %v970
        %vm1707 = vcmask 162816
        %v1708 = vsel %vm1707, %v1675, %v1004
        %v1709 = vsel %vm1707, %v1676, %v1006
        %v1710 = vsel %vm1707, %v1677, %v1008
        %v1711 = vsel %vm1707, %v1678, %v1010
        %v1712 = vsel %vm1707, %v1679, %v1012
        %v1713 = vsel %vm1707, %v1680, %v1014
        %v1714 = vsel %vm1707, %v1681, %v1016
        %v1715 = vsel %vm1707, %v1682, %v1018
        %v1716 = vsel %vm1707, %v1683, %v1020
        %v1717 = vsel %vm1707, %v1684, %v1022
        %v1718 = vsel %vm1707, %v1685, %v1024
        %v1719 = vsel %vm1707, %v1686, %v1026
        %v1720 = vsel %vm1707, %v1687, %v1028
        %v1721 = vsel %vm1707, %v1688, %v1030
        %v1722 = vsel %vm1707, %v1689, %v1032
        %v1723 = vsel %vm1707, %v1690, %v1034
        %v1724 = vsel %vm1707, %v1691, %v1036
        %v1725 = vsel %vm1707, %v1692, %v1038
        %v1726 = vsel %vm1707, %v1693, %v1040
        %v1727 = vsel %vm1707, %v1694, %v1042
        %v1728 = vsel %vm1707, %v1695, %v1044
        %v1729 = vsel %vm1707, %v1696, %v1046
        %v1730 = vsel %vm1707, %v1697, %v1048
        %v1731 = vsel %vm1707, %v1698, %v1050
        %v1732 = vsel %vm1707, %v1699, %v1052
        %v1733 = vsel %vm1707, %v1700, %v1054
        %v1734 = vsel %vm1707, %v1701, %v1056
        %v1735 = vsel %vm1707, %v1702, %v1058
        %v1736 = vsel %vm1707, %v1703, %v1060
        %v1737 = vsel %vm1707, %v1704, %v1062
        %v1738 = vsel %vm1707, %v1705, %v1064
        %v1739 = vsel %vm1707, %v1706, %v1066
        %vm1740 = vcmask 244736
        %v1741 = vsel %vm1740, %v1708, %v1100
        %v1742 = vsel %vm1740, %v1709, %v1102
        %v1743 = vsel %vm1740, %v1710, %v1104
        %v1744 = vsel %vm1740, %v1711, %v1106
        %v1745 = vsel %vm1740, %v1712, %v1108
        %v1746 = vsel %vm1740, %v1713, %v1110
        %v1747 = vsel %vm1740, %v1714, %v1112
        %v1748 = vsel %vm1740, %v1715, %v1114
        %v1749 = vsel %vm1740, %v1716, %v1116
        %v1750 = vsel %vm1740, %v1717, %v1118
        %v1751 = vsel %vm1740, %v1718, %v1120
        %v1752 = vsel %vm1740, %v1719, %v1122
        %v1753 = vsel %vm1740, %v1720, %v1124
        %v1754 = vsel %vm1740, %v1721, %v1126
        %v1755 = vsel %vm1740, %v1722, %v1128
        %v1756 = vsel %vm1740, %v1723, %v1130
        %v1757 = vsel %vm1740, %v1724, %v1132
        %v1758 = vsel %vm1740, %v1725, %v1134
        %v1759 = vsel %vm1740, %v1726, %v1136
        %v1760 = vsel %vm1740, %v1727, %v1138
        %v1761 = vsel %vm1740, %v1728, %v1140
        %v1762 = vsel %vm1740, %v1729, %v1142
        %v1763 = vsel %vm1740, %v1730, %v1144
        %v1764 = vsel %vm1740, %v1731, %v1146
        %v1765 = vsel %vm1740, %v1732, %v1148
        %v1766 = vsel %vm1740, %v1733, %v1150
        %v1767 = vsel %vm1740, %v1734, %v1152
        %v1768 = vsel %vm1740, %v1735, %v1154
        %v1769 = vsel %vm1740, %v1736, %v1156
        %v1770 = vsel %vm1740, %v1737, %v1158
        %v1771 = vsel %vm1740, %v1738, %v1160
        %v1772 = vsel %vm1740, %v1739, %v1162
        %vm1773 = vcmask 326656
        %v1774 = vsel %vm1773, %v1741, %v1196
        %v1775 = vsel %vm1773, %v1742, %v1198
        %v1776 = vsel %vm1773, %v1743, %v1200
        %v1777 = vsel %vm1773, %v1744, %v1202
        %v1778 = vsel %vm1773, %v1745, %v1204
        %v1779 = vsel %vm1773, %v1746, %v1206
        %v1780 = vsel %vm1773, %v1747, %v1208
        %v1781 = vsel %vm1773, %v1748, %v1210
        %v1782 = vsel %vm1773, %v1749, %v1212
        %v1783 = vsel %vm1773, %v1750, %v1214
        %v1784 = vsel %vm1773, %v1751, %v1216
        %v1785 = vsel %vm1773, %v1752, %v1218
        %v1786 = vsel %vm1773, %v1753, %v1220
        %v1787 = vsel %vm1773, %v1754, %v1222
        %v1788 = vsel %vm1773, %v1755, %v1224
        %v1789 = vsel %vm1773, %v1756, %v1226
        %v1790 = vsel %vm1773, %v1757, %v1228
        %v1791 = vsel %vm1773, %v1758, %v1230
        %v1792 = vsel %vm1773, %v1759, %v1232
        %v1793 = vsel %vm1773, %v1760, %v1234
        %v1794 = vsel %vm1773, %v1761, %v1236
        %v1795 = vsel %vm1773, %v1762, %v1238
        %v1796 = vsel %vm1773, %v1763, %v1240
        %v1797 = vsel %vm1773, %v1764, %v1242
        %v1798 = vsel %vm1773, %v1765, %v1244
        %v1799 = vsel %vm1773, %v1766, %v1246
        %v1800 = vsel %vm1773, %v1767, %v1248
        %v1801 = vsel %vm1773, %v1768, %v1250
        %v1802 = vsel %vm1773, %v1769, %v1252
        %v1803 = vsel %vm1773, %v1770, %v1254
        %v1804 = vsel %vm1773, %v1771, %v1256
        %v1805 = vsel %vm1773, %v1772, %v1258
        %vm1806 = vcmask 408576
        %v1807 = vsel %vm1806, %v1774, %v1292
        %v1808 = vsel %vm1806, %v1775, %v1294
        %v1809 = vsel %vm1806, %v1776, %v1296
        %v1810 = vsel %vm1806, %v1777, %v1298
        %v1811 = vsel %vm1806, %v1778, %v1300
        %v1812 = vsel %vm1806, %v1779, %v1302
        %v1813 = vsel %vm1806, %v1780, %v1304
        %v1814 = vsel %vm1806, %v1781, %v1306
        %v1815 = vsel %vm1806, %v1782, %v1308
        %v1816 = vsel %vm1806, %v1783, %v1310
        %v1817 = vsel %vm1806, %v1784, %v1312
        %v1818 = vsel %vm1806, %v1785, %v1314
        %v1819 = vsel %vm1806, %v1786, %v1316
        %v1820 = vsel %vm1806, %v1787, %v1318
        %v1821 = vsel %vm1806, %v1788, %v1320
        %v1822 = vsel %vm1806, %v1789, %v1322
        %v1823 = vsel %vm1806, %v1790, %v1324
        %v1824 = vsel %vm1806, %v1791, %v1326
        %v1825 = vsel %vm1806, %v1792, %v1328
        %v1826 = vsel %vm1806, %v1793, %v1330
        %v1827 = vsel %vm1806, %v1794, %v1332
        %v1828 = vsel %vm1806, %v1795, %v1334
        %v1829 = vsel %vm1806, %v1796, %v1336
        %v1830 = vsel %vm1806, %v1797, %v1338
        %v1831 = vsel %vm1806, %v1798, %v1340
        %v1832 = vsel %vm1806, %v1799, %v1342
        %v1833 = vsel %vm1806, %v1800, %v1344
        %v1834 = vsel %vm1806, %v1801, %v1346
        %v1835 = vsel %vm1806, %v1802, %v1348
        %v1836 = vsel %vm1806, %v1803, %v1350
        %v1837 = vsel %vm1806, %v1804, %v1352
        %v1838 = vsel %vm1806, %v1805, %v1354
        %vm1839 = vcmask 490496
        %v1840 = vsel %vm1839, %v1807, %v1388
        %v1841 = vsel %vm1839, %v1808, %v1390
        %v1842 = vsel %vm1839, %v1809, %v1392
        %v1843 = vsel %vm1839, %v1810, %v1394
        %v1844 = vsel %vm1839, %v1811, %v1396
        %v1845 = vsel %vm1839, %v1812, %v1398
        %v1846 = vsel %vm1839, %v1813, %v1400
        %v1847 = vsel %vm1839, %v1814, %v1402
        %v1848 = vsel %vm1839, %v1815, %v1404
        %v1849 = vsel %vm1839, %v1816, %v1406
        %v1850 = vsel %vm1839, %v1817, %v1408
        %v1851 = vsel %vm1839, %v1818, %v1410
        %v1852 = vsel %vm1839, %v1819, %v1412
        %v1853 = vsel %vm1839, %v1820, %v1414
        %v1854 = vsel %vm1839, %v1821, %v1416
        %v1855 = vsel %vm1839, %v1822, %v1418
        %v1856 = vsel %vm1839, %v1823, %v1420
        %v1857 = vsel %vm1839, %v1824, %v1422
        %v1858 = vsel %vm1839, %v1825, %v1424
        %v1859 = vsel %vm1839, %v1826, %v1426
        %v1860 = vsel %vm1839, %v1827, %v1428
        %v1861 = vsel %vm1839, %v1828, %v1430
        %v1862 = vsel %vm1839, %v1829, %v1432
        %v1863 = vsel %vm1839, %v1830, %v1434
        %v1864 = vsel %vm1839, %v1831, %v1436
        %v1865 = vsel %vm1839, %v1832, %v1438
        %v1866 = vsel %vm1839, %v1833, %v1440
        %v1867 = vsel %vm1839, %v1834, %v1442
        %v1868 = vsel %vm1839, %v1835, %v1444
        %v1869 = vsel %vm1839, %v1836, %v1446
        %v1870 = vsel %vm1839, %v1837, %v1448
        %v1871 = vsel %vm1839, %v1838, %v1450
        %vm1872 = vcmask 572416
        %v1873 = vsel %vm1872, %v1840, %v1484
        %v1874 = vsel %vm1872, %v1841, %v1486
        %v1875 = vsel %vm1872, %v1842, %v1488
        %v1876 = vsel %vm1872, %v1843, %v1490
        %v1877 = vsel %vm1872, %v1844, %v1492
        %v1878 = vsel %vm1872, %v1845, %v1494
        %v1879 = vsel %vm1872, %v1846, %v1496
        %v1880 = vsel %vm1872, %v1847, %v1498
        %v1881 = vsel %vm1872, %v1848, %v1500
        %v1882 = vsel %vm1872, %v1849, %v1502
        %v1883 = vsel %vm1872, %v1850, %v1504
        %v1884 = vsel %vm1872, %v1851, %v1506
        %v1885 = vsel %vm1872, %v1852, %v1508
        %v1886 = vsel %vm1872, %v1853, %v1510
        %v1887 = vsel %vm1872, %v1854, %v1512
        %v1888 = vsel %vm1872, %v1855, %v1514
        %v1889 = vsel %vm1872, %v1856, %v1516
        %v1890 = vsel %vm1872, %v1857, %v1518
        %v1891 = vsel %vm1872, %v1858, %v1520
        %v1892 = vsel %vm1872, %v1859, %v1522
        %v1893 = vsel %vm1872, %v1860, %v1524
        %v1894 = vsel %vm1872, %v1861, %v1526
        %v1895 = vsel %vm1872, %v1862, %v1528
        %v1896 = vsel %vm1872, %v1863, %v1530
        %v1897 = vsel %vm1872, %v1864, %v1532
        %v1898 = vsel %vm1872, %v1865, %v1534
        %v1899 = vsel %vm1872, %v1866, %v1536
        %v1900 = vsel %vm1872, %v1867, %v1538
        %v1901 = vsel %vm1872, %v1868, %v1540
        %v1902 = vsel %vm1872, %v1869, %v1542
        %v1903 = vsel %vm1872, %v1870, %v1544
        %v1904 = vsel %vm1872, %v1871, %v1546
        %vm1905 = vcmask 654336
        %v1906 = vsel %vm1905, %v1873, %v1580
        %v1907 = vsel %vm1905, %v1874, %v1582
        %v1908 = vsel %vm1905, %v1875, %v1584
        %v1909 = vsel %vm1905, %v1876, %v1586
        %v1910 = vsel %vm1905, %v1877, %v1588
        %v1911 = vsel %vm1905, %v1878, %v1590
        %v1912 = vsel %vm1905, %v1879, %v1592
        %v1913 = vsel %vm1905, %v1880, %v1594
        %v1914 = vsel %vm1905, %v1881, %v1596
        %v1915 = vsel %vm1905, %v1882, %v1598
        %v1916 = vsel %vm1905, %v1883, %v1600
        %v1917 = vsel %vm1905, %v1884, %v1602
        %v1918 = vsel %vm1905, %v1885, %v1604
        %v1919 = vsel %vm1905, %v1886, %v1606
        %v1920 = vsel %vm1905, %v1887, %v1608
        %v1921 = vsel %vm1905, %v1888, %v1610
        %v1922 = vsel %vm1905, %v1889, %v1612
        %v1923 = vsel %vm1905, %v1890, %v1614
        %v1924 = vsel %vm1905, %v1891, %v1616
        %v1925 = vsel %vm1905, %v1892, %v1618
        %v1926 = vsel %vm1905, %v1893, %v1620
        %v1927 = vsel %vm1905, %v1894, %v1622
        %v1928 = vsel %vm1905, %v1895, %v1624
        %v1929 = vsel %vm1905, %v1896, %v1626
        %v1930 = vsel %vm1905, %v1897, %v1628
        %v1931 = vsel %vm1905, %v1898, %v1630
        %v1932 = vsel %vm1905, %v1899, %v1632
        %v1933 = vsel %vm1905, %v1900, %v1634
        %v1934 = vsel %vm1905, %v1901, %v1636
        %v1935 = vsel %vm1905, %v1902, %v1638
        %v1936 = vsel %vm1905, %v1903, %v1640
        %v1937 = vsel %vm1905, %v1904, %v1642
        %v1938 = vld [vmem:[%s3] sm:$0xff]
        %v1939 = vld [vmem:[%s3 + $0x8] sm:$0xff]
        %v1940 = vld [vmem:[%s3 + $0x10] sm:$0xff]
        %v1941 = vld [vmem:[%s3 + $0x18] sm:$0xff]
        %v1942 = vld [vmem:[%s3 + $0x20] sm:$0xff]
        %v1943 = vld [vmem:[%s3 + $0x28] sm:$0xff]
        %v1944 = vld [vmem:[%s3 + $0x30] sm:$0xff]
        %v1945 = vld [vmem:[%s3 + $0x38] sm:$0xff]
        %v1946 = vld [vmem:[%s3 + $0x40] sm:$0xff]
        %v1947 = vld [vmem:[%s3 + $0x48] sm:$0xff]
        %v1948 = vld [vmem:[%s3 + $0x50] sm:$0xff]
        %v1949 = vld [vmem:[%s3 + $0x58] sm:$0x3]
        %v1950 = vld [vmem:[%s4] sm:$0x1]
        %v1952 = vperm.slane %v1950, 0
        %vm1954 = vcmask 736256
        %v1956 = vsel %vm1954, %v1906, 0
        %v1959 = vsel %vm1954, %v1907, 0
        %v1962 = vsel %vm1954, %v1908, 0
        %v1965 = vsel %vm1954, %v1909, 0
        %v1968 = vsel %vm1954, %v1910, 0
        %v1971 = vsel %vm1954, %v1911, 0
        %v1974 = vsel %vm1954, %v1912, 0
        %v1977 = vsel %vm1954, %v1913, 0
        %v1980 = vsel %vm1954, %v1914, 0
        %v1983 = vsel %vm1954, %v1915, 0
        %v1986 = vsel %vm1954, %v1916, 0
        %v1989 = vsel %vm1954, %v1917, 0
        %v1992 = vsel %vm1954, %v1918, 0
        %v1995 = vsel %vm1954, %v1919, 0
        %v1998 = vsel %vm1954, %v1920, 0
        %v2001 = vsel %vm1954, %v1921, 0
        %v2004 = vsel %vm1954, %v1922, 0
        %v2007 = vsel %vm1954, %v1923, 0
        %v2010 = vsel %vm1954, %v1924, 0
        %v2013 = vsel %vm1954, %v1925, 0
        %v2016 = vsel %vm1954, %v1926, 0
        %v2019 = vsel %vm1954, %v1927, 0
        %v2022 = vsel %vm1954, %v1928, 0
        %v2025 = vsel %vm1954, %v1929, 0
        %v2028 = vsel %vm1954, %v1930, 0
        %v2031 = vsel %vm1954, %v1931, 0
        %v2034 = vsel %vm1954, %v1932, 0
        %v2037 = vsel %vm1954, %v1933, 0
        %v2040 = vsel %vm1954, %v1934, 0
        %v2043 = vsel %vm1954, %v1935, 0
        %v2046 = vsel %vm1954, %v1936, 0
        %v2049 = vsel %vm1954, %v1937, 0
        %vm2051 = vcmask 1041408
        %v2053 = vsel %vm2051, %v1949, 0
        %2055 = vmatpush.msra.mxu0 0.0
        %2056 = vmatpush.msra.mxu0 0.0
        %2057 = vmatpush.msra.mxu0 0.0
        %2058 = vmatpush.msra.mxu0 0.0
        %2059 = vmatpush.msra.mxu0 %v2053
        %2060 = vmatpush.msra.mxu0 %v1948
        %2061 = vmatpush.msra.mxu0 %v1947
        %2062 = vmatpush.msra.mxu0 %v1946
        %2063 = vmatpush.msra.mxu0 %v1945
        %2064 = vmatpush.msra.mxu0 %v1944
        %2065 = vmatpush.msra.mxu0 %v1943
        %2066 = vmatpush.msra.mxu0 %v1942
        %2067 = vmatpush.msra.mxu0 %v1941
        %2068 = vmatpush.msra.mxu0 %v1940
        %2069 = vmatpush.msra.mxu0 %v1939
        %2070 = vmatpush.msra.mxu0 %v1938
        %2071 = vmatmul.f32.gmra.mxu0 %v1956
        %v2072 = vpop.f32.mrf.mxu0
        %v2073 = vadd.f32 %v1952, %v2072
        %2074 = vmatmul.f32.gmra.mxu0 %v1959
        %v2075 = vpop.f32.mrf.mxu0
        %v2076 = vadd.f32 %v1952, %v2075
        %2077 = vmatmul.f32.gmra.mxu0 %v1962
        %v2078 = vpop.f32.mrf.mxu0
        %v2079 = vadd.f32 %v1952, %v2078
        %2080 = vmatmul.f32.gmra.mxu0 %v1965
        %v2081 = vpop.f32.mrf.mxu0
        %v2082 = vadd.f32 %v1952, %v2081
        %2083 = vmatmul.f32.gmra.mxu0 %v1968
        %v2084 = vpop.f32.mrf.mxu0
        %v2085 = vadd.f32 %v1952, %v2084
        %2086 = vmatmul.f32.gmra.mxu0 %v1971
        %v2087 = vpop.f32.mrf.mxu0
        %v2088 = vadd.f32 %v1952, %v2087
        %2089 = vmatmul.f32.gmra.mxu0 %v1974
        %v2090 = vpop.f32.mrf.mxu0
        %v2091 = vadd.f32 %v1952, %v2090
        %2092 = vmatmul.f32.gmra.mxu0 %v1977
        %v2093 = vpop.f32.mrf.mxu0
        %v2094 = vadd.f32 %v1952, %v2093
        %2095 = vmatmul.f32.gmra.mxu0 %v1980
        %v2096 = vpop.f32.mrf.mxu0
        %v2097 = vadd.f32 %v1952, %v2096
        %2098 = vmatmul.f32.gmra.mxu0 %v1983
        %v2099 = vpop.f32.mrf.mxu0
        %v2100 = vadd.f32 %v1952, %v2099
        %2101 = vmatmul.f32.gmra.mxu0 %v1986
        %v2102 = vpop.f32.mrf.mxu0
        %v2103 = vadd.f32 %v1952, %v2102
        %2104 = vmatmul.f32.gmra.mxu0 %v1989
        %v2105 = vpop.f32.mrf.mxu0
        %v2106 = vadd.f32 %v1952, %v2105
        %2107 = vmatmul.f32.gmra.mxu0 %v1992
        %v2108 = vpop.f32.mrf.mxu0
        %v2109 = vadd.f32 %v1952, %v2108
        %2110 = vmatmul.f32.gmra.mxu0 %v1995
        %v2111 = vpop.f32.mrf.mxu0
        %v2112 = vadd.f32 %v1952, %v2111
        %2113 = vmatmul.f32.gmra.mxu0 %v1998
        %v2114 = vpop.f32.mrf.mxu0
        %v2115 = vadd.f32 %v1952, %v2114
        %2116 = vmatmul.f32.gmra.mxu0 %v2001
        %v2117 = vpop.f32.mrf.mxu0
        %v2118 = vadd.f32 %v1952, %v2117
        %2119 = vmatmul.f32.gmra.mxu0 %v2004
        %v2120 = vpop.f32.mrf.mxu0
        %v2121 = vadd.f32 %v1952, %v2120
        %2122 = vmatmul.f32.gmra.mxu0 %v2007
        %v2123 = vpop.f32.mrf.mxu0
        %v2124 = vadd.f32 %v1952, %v2123
        %2125 = vmatmul.f32.gmra.mxu0 %v2010
        %v2126 = vpop.f32.mrf.mxu0
        %v2127 = vadd.f32 %v1952, %v2126
        %2128 = vmatmul.f32.gmra.mxu0 %v2013
        %v2129 = vpop.f32.mrf.mxu0
        %v2130 = vadd.f32 %v1952, %v2129
        %2131 = vmatmul.f32.gmra.mxu0 %v2016
        %v2132 = vpop.f32.mrf.mxu0
        %v2133 = vadd.f32 %v1952, %v2132
        %2134 = vmatmul.f32.gmra.mxu0 %v2019
        %v2135 = vpop.f32.mrf.mxu0
        %v2136 = vadd.f32 %v1952, %v2135
        %2137 = vmatmul.f32.gmra.mxu0 %v2022
        %v2138 = vpop.f32.mrf.mxu0
        %v2139 = vadd.f32 %v1952, %v2138
        %2140 = vmatmul.f32.gmra.mxu0 %v2025
        %v2141 = vpop.f32.mrf.mxu0
        %v2142 = vadd.f32 %v1952, %v2141
        %2143 = vmatmul.f32.gmra.mxu0 %v2028
        %v2144 = vpop.f32.mrf.mxu0
        %v2145 = vadd.f32 %v1952, %v2144
        %2146 = vmatmul.f32.gmra.mxu0 %v2031
        %v2147 = vpop.f32.mrf.mxu0
        %v2148 = vadd.f32 %v1952, %v2147
        %2149 = vmatmul.f32.gmra.mxu0 %v2034
        %v2150 = vpop.f32.mrf.mxu0
        %v2151 = vadd.f32 %v1952, %v2150
        %2152 = vmatmul.f32.gmra.mxu0 %v2037
        %v2153 = vpop.f32.mrf.mxu0
        %v2154 = vadd.f32 %v1952, %v2153
        %2155 = vmatmul.f32.gmra.mxu0 %v2040
        %v2156 = vpop.f32.mrf.mxu0
        %v2157 = vadd.f32 %v1952, %v2156
        %2158 = vmatmul.f32.gmra.mxu0 %v2043
        %v2159 = vpop.f32.mrf.mxu0
        %v2160 = vadd.f32 %v1952, %v2159
        %2161 = vmatmul.f32.gmra.mxu0 %v2046
        %v2162 = vpop.f32.mrf.mxu0
        %v2163 = vadd.f32 %v1952, %v2162
        %2164 = vmatmul.f32.gmra.mxu0 %v2049
        %v2165 = vpop.f32.mrf.mxu0
        %v2166 = vadd.f32 %v1952, %v2165
        %2167 = vdwg.mxu0
        %v2168 = vmax.f32 %v2073, 0.0
        %v2169 = vmax.f32 %v2076, 0.0
        %v2170 = vmax.f32 %v2079, 0.0
        %v2171 = vmax.f32 %v2082, 0.0
        %v2172 = vmax.f32 %v2085, 0.0
        %v2173 = vmax.f32 %v2088, 0.0
        %v2174 = vmax.f32 %v2091, 0.0
        %v2175 = vmax.f32 %v2094, 0.0
        %v2176 = vmax.f32 %v2097, 0.0
        %v2177 = vmax.f32 %v2100, 0.0
        %v2178 = vmax.f32 %v2103, 0.0
        %v2179 = vmax.f32 %v2106, 0.0
        %v2180 = vmax.f32 %v2109, 0.0
        %v2181 = vmax.f32 %v2112, 0.0
        %v2182 = vmax.f32 %v2115, 0.0
        %v2183 = vmax.f32 %v2118, 0.0
        %v2184 = vmax.f32 %v2121, 0.0
        %v2185 = vmax.f32 %v2124, 0.0
        %v2186 = vmax.f32 %v2127, 0.0
        %v2187 = vmax.f32 %v2130, 0.0
        %v2188 = vmax.f32 %v2133, 0.0
        %v2189 = vmax.f32 %v2136, 0.0
        %v2190 = vmax.f32 %v2139, 0.0
        %v2191 = vmax.f32 %v2142, 0.0
        %v2192 = vmax.f32 %v2145, 0.0
        %v2193 = vmax.f32 %v2148, 0.0
        %v2194 = vmax.f32 %v2151, 0.0
        %v2195 = vmax.f32 %v2154, 0.0
        %v2196 = vmax.f32 %v2157, 0.0
        %v2197 = vmax.f32 %v2160, 0.0
        %v2198 = vmax.f32 %v2163, 0.0
        %v2199 = vmax.f32 %v2166, 0.0
        %vm2200 = vcmask 261120
        %v2201 = vsel %vm2200, %v2168, -inf
        %v2202 = vsel %vm2200, %v2170, -inf
        %v2203 = vmax.f32 %v2201, %v2202
        %v2204 = vsel %vm2200, %v2169, -inf
        %v2205 = vsel %vm2200, %v2171, -inf
        %v2206 = vmax.f32 %v2204, %v2205
        %v2207 = vsel %vm2200, %v2172, -inf
        %v2208 = vsel %vm2200, %v2174, -inf
        %v2209 = vmax.f32 %v2207, %v2208
        %v2210 = vsel %vm2200, %v2173, -inf
        %v2211 = vsel %vm2200, %v2175, -inf
        %v2212 = vmax.f32 %v2210, %v2211
        %v2213 = vsel %vm2200, %v2176, -inf
        %v2214 = vsel %vm2200, %v2178, -inf
        %v2215 = vmax.f32 %v2213, %v2214
        %v2216 = vsel %vm2200, %v2177, -inf
        %v2217 = vsel %vm2200, %v2179, -inf
        %v2218 = vmax.f32 %v2216, %v2217
        %v2219 = vsel %vm2200, %v2180, -inf
        %v2220 = vsel %vm2200, %v2182, -inf
        %v2221 = vmax.f32 %v2219, %v2220
        %v2222 = vsel %vm2200, %v2181, -inf
        %v2223 = vsel %vm2200, %v2183, -inf
        %v2224 = vmax.f32 %v2222, %v2223
        %v2225 = vsel %vm2200, %v2184, -inf
        %v2226 = vsel %vm2200, %v2186, -inf
        %v2227 = vmax.f32 %v2225, %v2226
        %v2228 = vsel %vm2200, %v2185, -inf
        %v2229 = vsel %vm2200, %v2187, -inf
        %v2230 = vmax.f32 %v2228, %v2229
        %v2231 = vsel %vm2200, %v2188, -inf
        %v2232 = vsel %vm2200, %v2190, -inf
        %v2233 = vmax.f32 %v2231, %v2232
        %v2234 = vsel %vm2200, %v2189, -inf
        %v2235 = vsel %vm2200, %v2191, -inf
        %v2236 = vmax.f32 %v2234, %v2235
        %v2237 = vsel %vm2200, %v2192, -inf
        %v2238 = vsel %vm2200, %v2194, -inf
        %v2239 = vmax.f32 %v2237, %v2238
        %v2240 = vsel %vm2200, %v2193, -inf
        %v2241 = vsel %vm2200, %v2195, -inf
        %v2242 = vmax.f32 %v2240, %v2241
        %v2243 = vsel %vm2200, %v2196, -inf
        %v2244 = vsel %vm2200, %v2198, -inf
        %v2245 = vmax.f32 %v2243, %v2244
        %v2246 = vsel %vm2200, %v2197, -inf
        %v2247 = vsel %vm2200, %v2199, -inf
        %v2248 = vmax.f32 %v2246, %v2247
        %v2265 = vrot.slane %v2203, 2
        %v2266 = vrot.slane %v2203, 4
        %v2267 = vrot.slane %v2203, 6
        %v2268 = vrot.slane %v2206, 2
        %v2269 = vrot.slane %v2206, 4
        %v2270 = vrot.slane %v2206, 6
        %v2271 = vrot.slane %v2209, 2
        %v2272 = vrot.slane %v2209, 4
        %v2273 = vrot.slane %v2209, 6
        %v2274 = vrot.slane %v2212, 2
        %v2275 = vrot.slane %v2212, 4
        %v2276 = vrot.slane %v2212, 6
        %v2277 = vrot.slane %v2215, 2
        %v2278 = vrot.slane %v2215, 4
        %v2279 = vrot.slane %v2215, 6
        %v2280 = vrot.slane %v2218, 2
        %v2281 = vrot.slane %v2218, 4
        %v2282 = vrot.slane %v2218, 6
        %v2283 = vrot.slane %v2221, 2
        %v2284 = vrot.slane %v2221, 4
        %v2285 = vrot.slane %v2221, 6
        %v2286 = vrot.slane %v2224, 2
        %v2287 = vrot.slane %v2224, 4
        %v2288 = vrot.slane %v2224, 6
        %v2289 = vrot.slane %v2227, 2
        %v2290 = vrot.slane %v2227, 4
        %v2291 = vrot.slane %v2227, 6
        %v2292 = vrot.slane %v2230, 2
        %v2293 = vrot.slane %v2230, 4
        %v2294 = vrot.slane %v2230, 6
        %v2295 = vrot.slane %v2233, 2
        %v2296 = vrot.slane %v2233, 4
        %v2297 = vrot.slane %v2233, 6
        %v2298 = vrot.slane %v2236, 2
        %v2299 = vrot.slane %v2236, 4
        %v2300 = vrot.slane %v2236, 6
        %v2301 = vrot.slane %v2239, 2
        %v2302 = vrot.slane %v2239, 4
        %v2303 = vrot.slane %v2239, 6
        %v2304 = vrot.slane %v2242, 2
        %v2305 = vrot.slane %v2242, 4
        %v2306 = vrot.slane %v2242, 6
        %v2307 = vrot.slane %v2245, 2
        %v2308 = vrot.slane %v2245, 4
        %v2309 = vrot.slane %v2245, 6
        %v2310 = vrot.slane %v2248, 2
        %v2311 = vrot.slane %v2248, 4
        %v2312 = vrot.slane %v2248, 6
        %vm2361 = vcmask 254976
        %v2362 = vsel %vm2361, %v2203, -inf
        %v2363 = vrot.slane %v2362, 4
        %v2364 = vmax.f32 %v2362, %v2363
        %v2365 = vrot.slane %v2364, 2
        %v2366 = vmax.f32 %v2364, %v2365
        %v2367 = vrot.slane %v2366, 1
        %v2368 = vmax.f32 %v2366, %v2367
        %v2369 = vsel %vm2361, %v2265, -inf
        %v2370 = vrot.slane %v2369, 4
        %v2371 = vmax.f32 %v2369, %v2370
        %v2372 = vrot.slane %v2371, 2
        %v2373 = vmax.f32 %v2371, %v2372
        %v2374 = vrot.slane %v2373, 1
        %v2375 = vmax.f32 %v2373, %v2374
        %v2376 = vsel %vm2361, %v2266, -inf
        %v2377 = vrot.slane %v2376, 4
        %v2378 = vmax.f32 %v2376, %v2377
        %v2379 = vrot.slane %v2378, 2
        %v2380 = vmax.f32 %v2378, %v2379
        %v2381 = vrot.slane %v2380, 1
        %v2382 = vmax.f32 %v2380, %v2381
        %v2383 = vsel %vm2361, %v2267, -inf
        %v2384 = vrot.slane %v2383, 4
        %v2385 = vmax.f32 %v2383, %v2384
        %v2386 = vrot.slane %v2385, 2
        %v2387 = vmax.f32 %v2385, %v2386
        %v2388 = vrot.slane %v2387, 1
        %v2389 = vmax.f32 %v2387, %v2388
        %v2390 = vsel %vm2361, %v2206, -inf
        %v2391 = vrot.slane %v2390, 4
        %v2392 = vmax.f32 %v2390, %v2391
        %v2393 = vrot.slane %v2392, 2
        %v2394 = vmax.f32 %v2392, %v2393
        %v2395 = vrot.slane %v2394, 1
        %v2396 = vmax.f32 %v2394, %v2395
        %v2397 = vsel %vm2361, %v2268, -inf
        %v2398 = vrot.slane %v2397, 4
        %v2399 = vmax.f32 %v2397, %v2398
        %v2400 = vrot.slane %v2399, 2
        %v2401 = vmax.f32 %v2399, %v2400
        %v2402 = vrot.slane %v2401, 1
        %v2403 = vmax.f32 %v2401, %v2402
        %v2404 = vsel %vm2361, %v2269, -inf
        %v2405 = vrot.slane %v2404, 4
        %v2406 = vmax.f32 %v2404, %v2405
        %v2407 = vrot.slane %v2406, 2
        %v2408 = vmax.f32 %v2406, %v2407
        %v2409 = vrot.slane %v2408, 1
        %v2410 = vmax.f32 %v2408, %v2409
        %v2411 = vsel %vm2361, %v2270, -inf
        %v2412 = vrot.slane %v2411, 4
        %v2413 = vmax.f32 %v2411, %v2412
        %v2414 = vrot.slane %v2413, 2
        %v2415 = vmax.f32 %v2413, %v2414
        %v2416 = vrot.slane %v2415, 1
        %v2417 = vmax.f32 %v2415, %v2416
        %v2418 = vsel %vm2361, %v2209, -inf
        %v2419 = vrot.slane %v2418, 4
        %v2420 = vmax.f32 %v2418, %v2419
        %v2421 = vrot.slane %v2420, 2
        %v2422 = vmax.f32 %v2420, %v2421
        %v2423 = vrot.slane %v2422, 1
        %v2424 = vmax.f32 %v2422, %v2423
        %v2425 = vsel %vm2361, %v2271, -inf
        %v2426 = vrot.slane %v2425, 4
        %v2427 = vmax.f32 %v2425, %v2426
        %v2428 = vrot.slane %v2427, 2
        %v2429 = vmax.f32 %v2427, %v2428
        %v2430 = vrot.slane %v2429, 1
        %v2431 = vmax.f32 %v2429, %v2430
        %v2432 = vsel %vm2361, %v2272, -inf
        %v2433 = vrot.slane %v2432, 4
        %v2434 = vmax.f32 %v2432, %v2433
        %v2435 = vrot.slane %v2434, 2
        %v2436 = vmax.f32 %v2434, %v2435
        %v2437 = vrot.slane %v2436, 1
        %v2438 = vmax.f32 %v2436, %v2437
        %v2439 = vsel %vm2361, %v2273, -inf
        %v2440 = vrot.slane %v2439, 4
        %v2441 = vmax.f32 %v2439, %v2440
        %v2442 = vrot.slane %v2441, 2
        %v2443 = vmax.f32 %v2441, %v2442
        %v2444 = vrot.slane %v2443, 1
        %v2445 = vmax.f32 %v2443, %v2444
        %v2446 = vsel %vm2361, %v2212, -inf
        %v2447 = vrot.slane %v2446, 4
        %v2448 = vmax.f32 %v2446, %v2447
        %v2449 = vrot.slane %v2448, 2
        %v2450 = vmax.f32 %v2448, %v2449
        %v2451 = vrot.slane %v2450, 1
        %v2452 = vmax.f32 %v2450, %v2451
        %v2453 = vsel %vm2361, %v2274, -inf
        %v2454 = vrot.slane %v2453, 4
        %v2455 = vmax.f32 %v2453, %v2454
        %v2456 = vrot.slane %v2455, 2
        %v2457 = vmax.f32 %v2455, %v2456
        %v2458 = vrot.slane %v2457, 1
        %v2459 = vmax.f32 %v2457, %v2458
        %v2460 = vsel %vm2361, %v2275, -inf
        %v2461 = vrot.slane %v2460, 4
        %v2462 = vmax.f32 %v2460, %v2461
        %v2463 = vrot.slane %v2462, 2
        %v2464 = vmax.f32 %v2462, %v2463
        %v2465 = vrot.slane %v2464, 1
        %v2466 = vmax.f32 %v2464, %v2465
        %v2467 = vsel %vm2361, %v2276, -inf
        %v2468 = vrot.slane %v2467, 4
        %v2469 = vmax.f32 %v2467, %v2468
        %v2470 = vrot.slane %v2469, 2
        %v2471 = vmax.f32 %v2469, %v2470
        %v2472 = vrot.slane %v2471, 1
        %v2473 = vmax.f32 %v2471, %v2472
        %v2474 = vsel %vm2361, %v2215, -inf
        %v2475 = vrot.slane %v2474, 4
        %v2476 = vmax.f32 %v2474, %v2475
        %v2477 = vrot.slane %v2476, 2
        %v2478 = vmax.f32 %v2476, %v2477
        %v2479 = vrot.slane %v2478, 1
        %v2480 = vmax.f32 %v2478, %v2479
        %v2481 = vsel %vm2361, %v2277, -inf
        %v2482 = vrot.slane %v2481, 4
        %v2483 = vmax.f32 %v2481, %v2482
        %v2484 = vrot.slane %v2483, 2
        %v2485 = vmax.f32 %v2483, %v2484
        %v2486 = vrot.slane %v2485, 1
        %v2487 = vmax.f32 %v2485, %v2486
        %v2488 = vsel %vm2361, %v2278, -inf
        %v2489 = vrot.slane %v2488, 4
        %v2490 = vmax.f32 %v2488, %v2489
        %v2491 = vrot.slane %v2490, 2
        %v2492 = vmax.f32 %v2490, %v2491
        %v2493 = vrot.slane %v2492, 1
        %v2494 = vmax.f32 %v2492, %v2493
        %v2495 = vsel %vm2361, %v2279, -inf
        %v2496 = vrot.slane %v2495, 4
        %v2497 = vmax.f32 %v2495, %v2496
        %v2498 = vrot.slane %v2497, 2
        %v2499 = vmax.f32 %v2497, %v2498
        %v2500 = vrot.slane %v2499, 1
        %v2501 = vmax.f32 %v2499, %v2500
        %v2502 = vsel %vm2361, %v2218, -inf
        %v2503 = vrot.slane %v2502, 4
        %v2504 = vmax.f32 %v2502, %v2503
        %v2505 = vrot.slane %v2504, 2
        %v2506 = vmax.f32 %v2504, %v2505
        %v2507 = vrot.slane %v2506, 1
        %v2508 = vmax.f32 %v2506, %v2507
        %v2509 = vsel %vm2361, %v2280, -inf
        %v2510 = vrot.slane %v2509, 4
        %v2511 = vmax.f32 %v2509, %v2510
        %v2512 = vrot.slane %v2511, 2
        %v2513 = vmax.f32 %v2511, %v2512
        %v2514 = vrot.slane %v2513, 1
        %v2515 = vmax.f32 %v2513, %v2514
        %v2516 = vsel %vm2361, %v2281, -inf
        %v2517 = vrot.slane %v2516, 4
        %v2518 = vmax.f32 %v2516, %v2517
        %v2519 = vrot.slane %v2518, 2
        %v2520 = vmax.f32 %v2518, %v2519
        %v2521 = vrot.slane %v2520, 1
        %v2522 = vmax.f32 %v2520, %v2521
        %v2523 = vsel %vm2361, %v2282, -inf
        %v2524 = vrot.slane %v2523, 4
        %v2525 = vmax.f32 %v2523, %v2524
        %v2526 = vrot.slane %v2525, 2
        %v2527 = vmax.f32 %v2525, %v2526
        %v2528 = vrot.slane %v2527, 1
        %v2529 = vmax.f32 %v2527, %v2528
        %v2530 = vsel %vm2361, %v2221, -inf
        %v2531 = vrot.slane %v2530, 4
        %v2532 = vmax.f32 %v2530, %v2531
        %v2533 = vrot.slane %v2532, 2
        %v2534 = vmax.f32 %v2532, %v2533
        %v2535 = vrot.slane %v2534, 1
        %v2536 = vmax.f32 %v2534, %v2535
        %v2537 = vsel %vm2361, %v2283, -inf
        %v2538 = vrot.slane %v2537, 4
        %v2539 = vmax.f32 %v2537, %v2538
        %v2540 = vrot.slane %v2539, 2
        %v2541 = vmax.f32 %v2539, %v2540
        %v2542 = vrot.slane %v2541, 1
        %v2543 = vmax.f32 %v2541, %v2542
        %v2544 = vsel %vm2361, %v2284, -inf
        %v2545 = vrot.slane %v2544, 4
        %v2546 = vmax.f32 %v2544, %v2545
        %v2547 = vrot.slane %v2546, 2
        %v2548 = vmax.f32 %v2546, %v2547
        %v2549 = vrot.slane %v2548, 1
        %v2550 = vmax.f32 %v2548, %v2549
        %v2551 = vsel %vm2361, %v2285, -inf
        %v2552 = vrot.slane %v2551, 4
        %v2553 = vmax.f32 %v2551, %v2552
        %v2554 = vrot.slane %v2553, 2
        %v2555 = vmax.f32 %v2553, %v2554
        %v2556 = vrot.slane %v2555, 1
        %v2557 = vmax.f32 %v2555, %v2556
        %v2558 = vsel %vm2361, %v2224, -inf
        %v2559 = vrot.slane %v2558, 4
        %v2560 = vmax.f32 %v2558, %v2559
        %v2561 = vrot.slane %v2560, 2
        %v2562 = vmax.f32 %v2560, %v2561
        %v2563 = vrot.slane %v2562, 1
        %v2564 = vmax.f32 %v2562, %v2563
        %v2565 = vsel %vm2361, %v2286, -inf
        %v2566 = vrot.slane %v2565, 4
        %v2567 = vmax.f32 %v2565, %v2566
        %v2568 = vrot.slane %v2567, 2
        %v2569 = vmax.f32 %v2567, %v2568
        %v2570 = vrot.slane %v2569, 1
        %v2571 = vmax.f32 %v2569, %v2570
        %v2572 = vsel %vm2361, %v2287, -inf
        %v2573 = vrot.slane %v2572, 4
        %v2574 = vmax.f32 %v2572, %v2573
        %v2575 = vrot.slane %v2574, 2
        %v2576 = vmax.f32 %v2574, %v2575
        %v2577 = vrot.slane %v2576, 1
        %v2578 = vmax.f32 %v2576, %v2577
        %v2579 = vsel %vm2361, %v2288, -inf
        %v2580 = vrot.slane %v2579, 4
        %v2581 = vmax.f32 %v2579, %v2580
        %v2582 = vrot.slane %v2581, 2
        %v2583 = vmax.f32 %v2581, %v2582
        %v2584 = vrot.slane %v2583, 1
        %v2585 = vmax.f32 %v2583, %v2584
        %v2586 = vsel %vm2361, %v2227, -inf
        %v2587 = vrot.slane %v2586, 4
        %v2588 = vmax.f32 %v2586, %v2587
        %v2589 = vrot.slane %v2588, 2
        %v2590 = vmax.f32 %v2588, %v2589
        %v2591 = vrot.slane %v2590, 1
        %v2592 = vmax.f32 %v2590, %v2591
        %v2593 = vsel %vm2361, %v2289, -inf
        %v2594 = vrot.slane %v2593, 4
        %v2595 = vmax.f32 %v2593, %v2594
        %v2596 = vrot.slane %v2595, 2
        %v2597 = vmax.f32 %v2595, %v2596
        %v2598 = vrot.slane %v2597, 1
        %v2599 = vmax.f32 %v2597, %v2598
        %v2600 = vsel %vm2361, %v2290, -inf
        %v2601 = vrot.slane %v2600, 4
        %v2602 = vmax.f32 %v2600, %v2601
        %v2603 = vrot.slane %v2602, 2
        %v2604 = vmax.f32 %v2602, %v2603
        %v2605 = vrot.slane %v2604, 1
        %v2606 = vmax.f32 %v2604, %v2605
        %v2607 = vsel %vm2361, %v2291, -inf
        %v2608 = vrot.slane %v2607, 4
        %v2609 = vmax.f32 %v2607, %v2608
        %v2610 = vrot.slane %v2609, 2
        %v2611 = vmax.f32 %v2609, %v2610
        %v2612 = vrot.slane %v2611, 1
        %v2613 = vmax.f32 %v2611, %v2612
        %v2614 = vsel %vm2361, %v2230, -inf
        %v2615 = vrot.slane %v2614, 4
        %v2616 = vmax.f32 %v2614, %v2615
        %v2617 = vrot.slane %v2616, 2
        %v2618 = vmax.f32 %v2616, %v2617
        %v2619 = vrot.slane %v2618, 1
        %v2620 = vmax.f32 %v2618, %v2619
        %v2621 = vsel %vm2361, %v2292, -inf
        %v2622 = vrot.slane %v2621, 4
        %v2623 = vmax.f32 %v2621, %v2622
        %v2624 = vrot.slane %v2623, 2
        %v2625 = vmax.f32 %v2623, %v2624
        %v2626 = vrot.slane %v2625, 1
        %v2627 = vmax.f32 %v2625, %v2626
        %v2628 = vsel %vm2361, %v2293, -inf
        %v2629 = vrot.slane %v2628, 4
        %v2630 = vmax.f32 %v2628, %v2629
        %v2631 = vrot.slane %v2630, 2
        %v2632 = vmax.f32 %v2630, %v2631
        %v2633 = vrot.slane %v2632, 1
        %v2634 = vmax.f32 %v2632, %v2633
        %v2635 = vsel %vm2361, %v2294, -inf
        %v2636 = vrot.slane %v2635, 4
        %v2637 = vmax.f32 %v2635, %v2636
        %v2638 = vrot.slane %v2637, 2
        %v2639 = vmax.f32 %v2637, %v2638
        %v2640 = vrot.slane %v2639, 1
        %v2641 = vmax.f32 %v2639, %v2640
        %v2642 = vsel %vm2361, %v2233, -inf
        %v2643 = vrot.slane %v2642, 4
        %v2644 = vmax.f32 %v2642, %v2643
        %v2645 = vrot.slane %v2644, 2
        %v2646 = vmax.f32 %v2644, %v2645
        %v2647 = vrot.slane %v2646, 1
        %v2648 = vmax.f32 %v2646, %v2647
        %v2649 = vsel %vm2361, %v2295, -inf
        %v2650 = vrot.slane %v2649, 4
        %v2651 = vmax.f32 %v2649, %v2650
        %v2652 = vrot.slane %v2651, 2
        %v2653 = vmax.f32 %v2651, %v2652
        %v2654 = vrot.slane %v2653, 1
        %v2655 = vmax.f32 %v2653, %v2654
        %v2656 = vsel %vm2361, %v2296, -inf
        %v2657 = vrot.slane %v2656, 4
        %v2658 = vmax.f32 %v2656, %v2657
        %v2659 = vrot.slane %v2658, 2
        %v2660 = vmax.f32 %v2658, %v2659
        %v2661 = vrot.slane %v2660, 1
        %v2662 = vmax.f32 %v2660, %v2661
        %v2663 = vsel %vm2361, %v2297, -inf
        %v2664 = vrot.slane %v2663, 4
        %v2665 = vmax.f32 %v2663, %v2664
        %v2666 = vrot.slane %v2665, 2
        %v2667 = vmax.f32 %v2665, %v2666
        %v2668 = vrot.slane %v2667, 1
        %v2669 = vmax.f32 %v2667, %v2668
        %v2670 = vsel %vm2361, %v2236, -inf
        %v2671 = vrot.slane %v2670, 4
        %v2672 = vmax.f32 %v2670, %v2671
        %v2673 = vrot.slane %v2672, 2
        %v2674 = vmax.f32 %v2672, %v2673
        %v2675 = vrot.slane %v2674, 1
        %v2676 = vmax.f32 %v2674, %v2675
        %v2677 = vsel %vm2361, %v2298, -inf
        %v2678 = vrot.slane %v2677, 4
        %v2679 = vmax.f32 %v2677, %v2678
        %v2680 = vrot.slane %v2679, 2
        %v2681 = vmax.f32 %v2679, %v2680
        %v2682 = vrot.slane %v2681, 1
        %v2683 = vmax.f32 %v2681, %v2682
        %v2684 = vsel %vm2361, %v2299, -inf
        %v2685 = vrot.slane %v2684, 4
        %v2686 = vmax.f32 %v2684, %v2685
        %v2687 = vrot.slane %v2686, 2
        %v2688 = vmax.f32 %v2686, %v2687
        %v2689 = vrot.slane %v2688, 1
        %v2690 = vmax.f32 %v2688, %v2689
        %v2691 = vsel %vm2361, %v2300, -inf
        %v2692 = vrot.slane %v2691, 4
        %v2693 = vmax.f32 %v2691, %v2692
        %v2694 = vrot.slane %v2693, 2
        %v2695 = vmax.f32 %v2693, %v2694
        %v2696 = vrot.slane %v2695, 1
        %v2697 = vmax.f32 %v2695, %v2696
        %v2698 = vsel %vm2361, %v2239, -inf
        %v2699 = vrot.slane %v2698, 4
        %v2700 = vmax.f32 %v2698, %v2699
        %v2701 = vrot.slane %v2700, 2
        %v2702 = vmax.f32 %v2700, %v2701
        %v2703 = vrot.slane %v2702, 1
        %v2704 = vmax.f32 %v2702, %v2703
        %v2705 = vsel %vm2361, %v2301, -inf
        %v2706 = vrot.slane %v2705, 4
        %v2707 = vmax.f32 %v2705, %v2706
        %v2708 = vrot.slane %v2707, 2
        %v2709 = vmax.f32 %v2707, %v2708
        %v2710 = vrot.slane %v2709, 1
        %v2711 = vmax.f32 %v2709, %v2710
        %v2712 = vsel %vm2361, %v2302, -inf
        %v2713 = vrot.slane %v2712, 4
        %v2714 = vmax.f32 %v2712, %v2713
        %v2715 = vrot.slane %v2714, 2
        %v2716 = vmax.f32 %v2714, %v2715
        %v2717 = vrot.slane %v2716, 1
        %v2718 = vmax.f32 %v2716, %v2717
        %v2719 = vsel %vm2361, %v2303, -inf
        %v2720 = vrot.slane %v2719, 4
        %v2721 = vmax.f32 %v2719, %v2720
        %v2722 = vrot.slane %v2721, 2
        %v2723 = vmax.f32 %v2721, %v2722
        %v2724 = vrot.slane %v2723, 1
        %v2725 = vmax.f32 %v2723, %v2724
        %v2726 = vsel %vm2361, %v2242, -inf
        %v2727 = vrot.slane %v2726, 4
        %v2728 = vmax.f32 %v2726, %v2727
        %v2729 = vrot.slane %v2728, 2
        %v2730 = vmax.f32 %v2728, %v2729
        %v2731 = vrot.slane %v2730, 1
        %v2732 = vmax.f32 %v2730, %v2731
        %v2733 = vsel %vm2361, %v2304, -inf
        %v2734 = vrot.slane %v2733, 4
        %v2735 = vmax.f32 %v2733, %v2734
        %v2736 = vrot.slane %v2735, 2
        %v2737 = vmax.f32 %v2735, %v2736
        %v2738 = vrot.slane %v2737, 1
        %v2739 = vmax.f32 %v2737, %v2738
        %v2740 = vsel %vm2361, %v2305, -inf
        %v2741 = vrot.slane %v2740, 4
        %v2742 = vmax.f32 %v2740, %v2741
        %v2743 = vrot.slane %v2742, 2
        %v2744 = vmax.f32 %v2742, %v2743
        %v2745 = vrot.slane %v2744, 1
        %v2746 = vmax.f32 %v2744, %v2745
        %v2747 = vsel %vm2361, %v2306, -inf
        %v2748 = vrot.slane %v2747, 4
        %v2749 = vmax.f32 %v2747, %v2748
        %v2750 = vrot.slane %v2749, 2
        %v2751 = vmax.f32 %v2749, %v2750
        %v2752 = vrot.slane %v2751, 1
        %v2753 = vmax.f32 %v2751, %v2752
        %v2754 = vsel %vm2361, %v2245, -inf
        %v2755 = vrot.slane %v2754, 4
        %v2756 = vmax.f32 %v2754, %v2755
        %v2757 = vrot.slane %v2756, 2
        %v2758 = vmax.f32 %v2756, %v2757
        %v2759 = vrot.slane %v2758, 1
        %v2760 = vmax.f32 %v2758, %v2759
        %v2761 = vsel %vm2361, %v2307, -inf
        %v2762 = vrot.slane %v2761, 4
        %v2763 = vmax.f32 %v2761, %v2762
        %v2764 = vrot.slane %v2763, 2
        %v2765 = vmax.f32 %v2763, %v2764
        %v2766 = vrot.slane %v2765, 1
        %v2767 = vmax.f32 %v2765, %v2766
        %v2768 = vsel %vm2361, %v2308, -inf
        %v2769 = vrot.slane %v2768, 4
        %v2770 = vmax.f32 %v2768, %v2769
        %v2771 = vrot.slane %v2770, 2
        %v2772 = vmax.f32 %v2770, %v2771
        %v2773 = vrot.slane %v2772, 1
        %v2774 = vmax.f32 %v2772, %v2773
        %v2775 = vsel %vm2361, %v2309, -inf
        %v2776 = vrot.slane %v2775, 4
        %v2777 = vmax.f32 %v2775, %v2776
        %v2778 = vrot.slane %v2777, 2
        %v2779 = vmax.f32 %v2777, %v2778
        %v2780 = vrot.slane %v2779, 1
        %v2781 = vmax.f32 %v2779, %v2780
        %v2782 = vsel %vm2361, %v2248, -inf
        %v2783 = vrot.slane %v2782, 4
        %v2784 = vmax.f32 %v2782, %v2783
        %v2785 = vrot.slane %v2784, 2
        %v2786 = vmax.f32 %v2784, %v2785
        %v2787 = vrot.slane %v2786, 1
        %v2788 = vmax.f32 %v2786, %v2787
        %v2789 = vsel %vm2361, %v2310, -inf
        %v2790 = vrot.slane %v2789, 4
        %v2791 = vmax.f32 %v2789, %v2790
        %v2792 = vrot.slane %v2791, 2
        %v2793 = vmax.f32 %v2791, %v2792
        %v2794 = vrot.slane %v2793, 1
        %v2795 = vmax.f32 %v2793, %v2794
        %v2796 = vsel %vm2361, %v2311, -inf
        %v2797 = vrot.slane %v2796, 4
        %v2798 = vmax.f32 %v2796, %v2797
        %v2799 = vrot.slane %v2798, 2
        %v2800 = vmax.f32 %v2798, %v2799
        %v2801 = vrot.slane %v2800, 1
        %v2802 = vmax.f32 %v2800, %v2801
        %v2803 = vsel %vm2361, %v2312, -inf
        %v2804 = vrot.slane %v2803, 4
        %v2805 = vmax.f32 %v2803, %v2804
        %v2806 = vrot.slane %v2805, 2
        %v2807 = vmax.f32 %v2805, %v2806
        %v2808 = vrot.slane %v2807, 1
        %v2809 = vmax.f32 %v2807, %v2808
        %2810 = vst.msk [vmem:[#allocation3] sm:$0xff] %vm2200, 0.0
        %2811 = vst.msk [vmem:[#allocation3 + $0x8] sm:$0x3] %vm2361, 0.0
        %2812 = vst.msk [vmem:[#allocation3 + $0x10] sm:$0xff] %vm2200, 0.0
        %2813 = vst.msk [vmem:[#allocation3 + $0x18] sm:$0x3] %vm2361, 0.0
        %2814 = vst.msk [vmem:[#allocation3 + $0x20] sm:$0xff] %vm2200, 0.0
        %2815 = vst.msk [vmem:[#allocation3 + $0x28] sm:$0x3] %vm2361, 0.0
        %2816 = vst.msk [vmem:[#allocation3 + $0x30] sm:$0xff] %vm2200, 0.0
        %2817 = vst.msk [vmem:[#allocation3 + $0x38] sm:$0x3] %vm2361, 0.0
        %2818 = vst.msk [vmem:[#allocation3 + $0x40] sm:$0xff] %vm2200, 0.0
        %2819 = vst.msk [vmem:[#allocation3 + $0x48] sm:$0x3] %vm2361, 0.0
        %2820 = vst.msk [vmem:[#allocation3 + $0x50] sm:$0xff] %vm2200, 0.0
        %2821 = vst.msk [vmem:[#allocation3 + $0x58] sm:$0x3] %vm2361, 0.0
        %2822 = vst.msk [vmem:[#allocation3 + $0x60] sm:$0xff] %vm2200, 0.0
        %2823 = vst.msk [vmem:[#allocation3 + $0x68] sm:$0x3] %vm2361, 0.0
        %2824 = vst.msk [vmem:[#allocation3 + $0x70] sm:$0xff] %vm2200, 0.0
        %2825 = vst.msk [vmem:[#allocation3 + $0x78] sm:$0x3] %vm2361, 0.0
        %2826 = vst.msk [vmem:[#allocation3 + $0x80] sm:$0xff] %vm2200, 0.0
        %2827 = vst.msk [vmem:[#allocation3 + $0x88] sm:$0x3] %vm2361, 0.0
        %2828 = vst.msk [vmem:[#allocation3 + $0x90] sm:$0xff] %vm2200, 0.0
        %2829 = vst.msk [vmem:[#allocation3 + $0x98] sm:$0x3] %vm2361, 0.0
        %vm2894 = vcmask 1041409
        %v2895 = vsel %vm2894, %v2375, %v2368
        %vm2896 = vcmask 1042434
        %v2897 = vsel %vm2896, %v2382, %v2895
        %vm2898 = vcmask 1043459
        %v2899 = vsel %vm2898, %v2389, %v2897
        %vm2900 = vcmask 1044484
        %v2901 = vsel %vm2900, %v2396, %v2899
        %vm2902 = vcmask 1045509
        %v2903 = vsel %vm2902, %v2403, %v2901
        %vm2904 = vcmask 1046534
        %v2905 = vsel %vm2904, %v2410, %v2903
        %vm2906 = vcmask 1047559
        %v2907 = vsel %vm2906, %v2417, %v2905
        %v2908 = vsel %vm2894, %v2431, %v2424
        %v2909 = vsel %vm2896, %v2438, %v2908
        %v2910 = vsel %vm2898, %v2445, %v2909
        %v2911 = vsel %vm2900, %v2452, %v2910
        %v2912 = vsel %vm2902, %v2459, %v2911
        %v2913 = vsel %vm2904, %v2466, %v2912
        %v2914 = vsel %vm2906, %v2473, %v2913
        %v2915 = vsel %vm2894, %v2487, %v2480
        %v2916 = vsel %vm2896, %v2494, %v2915
        %v2917 = vsel %vm2898, %v2501, %v2916
        %v2918 = vsel %vm2900, %v2508, %v2917
        %v2919 = vsel %vm2902, %v2515, %v2918
        %v2920 = vsel %vm2904, %v2522, %v2919
        %v2921 = vsel %vm2906, %v2529, %v2920
        %v2922 = vsel %vm2894, %v2543, %v2536
        %v2923 = vsel %vm2896, %v2550, %v2922
        %v2924 = vsel %vm2898, %v2557, %v2923
        %v2925 = vsel %vm2900, %v2564, %v2924
        %v2926 = vsel %vm2902, %v2571, %v2925
        %v2927 = vsel %vm2904, %v2578, %v2926
        %v2928 = vsel %vm2906, %v2585, %v2927
        %v2929 = vsel %vm2894, %v2599, %v2592
        %v2930 = vsel %vm2896, %v2606, %v2929
        %v2931 = vsel %vm2898, %v2613, %v2930
        %v2932 = vsel %vm2900, %v2620, %v2931
        %v2933 = vsel %vm2902, %v2627, %v2932
        %v2934 = vsel %vm2904, %v2634, %v2933
        %v2935 = vsel %vm2906, %v2641, %v2934
        %v2936 = vsel %vm2894, %v2655, %v2648
        %v2937 = vsel %vm2896, %v2662, %v2936
        %v2938 = vsel %vm2898, %v2669, %v2937
        %v2939 = vsel %vm2900, %v2676, %v2938
        %v2940 = vsel %vm2902, %v2683, %v2939
        %v2941 = vsel %vm2904, %v2690, %v2940
        %v2942 = vsel %vm2906, %v2697, %v2941
        %v2943 = vsel %vm2894, %v2711, %v2704
        %v2944 = vsel %vm2896, %v2718, %v2943
        %v2945 = vsel %vm2898, %v2725, %v2944
        %v2946 = vsel %vm2900, %v2732, %v2945
        %v2947 = vsel %vm2902, %v2739, %v2946
        %v2948 = vsel %vm2904, %v2746, %v2947
        %v2949 = vsel %vm2906, %v2753, %v2948
        %v2950 = vsel %vm2894, %v2767, %v2760
        %v2951 = vsel %vm2896, %v2774, %v2950
        %v2952 = vsel %vm2898, %v2781, %v2951
        %v2953 = vsel %vm2900, %v2788, %v2952
        %v2954 = vsel %vm2902, %v2795, %v2953
        %v2955 = vsel %vm2904, %v2802, %v2954
        %v2956 = vsel %vm2906, %v2809, %v2955
        %s2965 = scalar_lea.vmem [#allocation3], 16
        %2966 = vst.msk [vmem:[%s2965 + $0x1] sm:$0xff] %vm2200, %v2907
        %2967 = vst.msk [vmem:[%s2965 + $0x11] sm:$0xff] %vm2200, %v2914
        %2968 = vst.msk [vmem:[%s2965 + $0x21] sm:$0xff] %vm2200, %v2921
        %2969 = vst.msk [vmem:[%s2965 + $0x31] sm:$0xff] %vm2200, %v2928
        %2970 = vst.msk [vmem:[%s2965 + $0x41] sm:$0xff] %vm2200, %v2935
        %2971 = vst.msk [vmem:[%s2965 + $0x51] sm:$0xff] %vm2200, %v2942
        %2972 = vst.msk [vmem:[%s2965 + $0x61] sm:$0xff] %vm2200, %v2949
        %2973 = vst.msk [vmem:[%s2965 + $0x71] sm:$0xff] %vm2200, %v2956
        %v2974 = vld [vmem:[#allocation3] sm:$0xff]
        %v2975 = vld [vmem:[#allocation3 + $0x8] sm:$0x3]
        %v2976 = vld [vmem:[#allocation3 + $0x10] sm:$0xff]
        %v2977 = vld [vmem:[#allocation3 + $0x18] sm:$0x3]
        %v2978 = vld [vmem:[#allocation3 + $0x20] sm:$0xff]
        %v2979 = vld [vmem:[#allocation3 + $0x28] sm:$0x3]
        %v2980 = vld [vmem:[#allocation3 + $0x30] sm:$0xff]
        %v2981 = vld [vmem:[#allocation3 + $0x38] sm:$0x3]
        %v2982 = vld [vmem:[#allocation3 + $0x40] sm:$0xff]
        %v2983 = vld [vmem:[#allocation3 + $0x48] sm:$0x3]
        %v2984 = vld [vmem:[#allocation3 + $0x50] sm:$0xff]
        %v2985 = vld [vmem:[#allocation3 + $0x58] sm:$0x3]
        %v2986 = vld [vmem:[#allocation3 + $0x60] sm:$0xff]
        %v2987 = vld [vmem:[#allocation3 + $0x68] sm:$0x3]
        %v2988 = vld [vmem:[#allocation3 + $0x70] sm:$0xff]
        %v2989 = vld [vmem:[#allocation3 + $0x78] sm:$0x3]
        %v2990 = vld [vmem:[#allocation3 + $0x80] sm:$0xff]
        %v2991 = vld [vmem:[#allocation3 + $0x88] sm:$0x3]
        %v2992 = vld [vmem:[#allocation3 + $0x90] sm:$0xff]
        %v2993 = vld [vmem:[#allocation3 + $0x98] sm:$0x3]
        %v3010 = vrot.slane %v2974, 1
        %v3011 = vrot.slane %v2975, 1
        %v3012 = vsel %vm719, %v3010, %v3011
        %v3013 = vrot.slane %v2976, 1
        %v3014 = vrot.slane %v2977, 1
        %v3015 = vsel %vm719, %v3013, %v3014
        %v3016 = vrot.slane %v2978, 1
        %v3017 = vrot.slane %v2979, 1
        %v3018 = vsel %vm719, %v3016, %v3017
        %v3019 = vrot.slane %v2980, 1
        %v3020 = vrot.slane %v2981, 1
        %v3021 = vsel %vm719, %v3019, %v3020
        %v3022 = vrot.slane %v2982, 1
        %v3023 = vrot.slane %v2983, 1
        %v3024 = vsel %vm719, %v3022, %v3023
        %v3025 = vrot.slane %v2984, 1
        %v3026 = vrot.slane %v2985, 1
        %v3027 = vsel %vm719, %v3025, %v3026
        %v3028 = vrot.slane %v2986, 1
        %v3029 = vrot.slane %v2987, 1
        %v3030 = vsel %vm719, %v3028, %v3029
        %v3031 = vrot.slane %v2988, 1
        %v3032 = vrot.slane %v2989, 1
        %v3033 = vsel %vm719, %v3031, %v3032
        %v3034 = vrot.slane %v2974, 2
        %v3035 = vrot.slane %v2975, 2
        %v3036 = vsel %vm800, %v3034, %v3035
        %v3037 = vrot.slane %v2976, 2
        %v3038 = vrot.slane %v2977, 2
        %v3039 = vsel %vm800, %v3037, %v3038
        %v3040 = vrot.slane %v2978, 2
        %v3041 = vrot.slane %v2979, 2
        %v3042 = vsel %vm800, %v3040, %v3041
        %v3043 = vrot.slane %v2980, 2
        %v3044 = vrot.slane %v2981, 2
        %v3045 = vsel %vm800, %v3043, %v3044
        %v3046 = vrot.slane %v2982, 2
        %v3047 = vrot.slane %v2983, 2
        %v3048 = vsel %vm800, %v3046, %v3047
        %v3049 = vrot.slane %v2984, 2
        %v3050 = vrot.slane %v2985, 2
        %v3051 = vsel %vm800, %v3049, %v3050
        %v3052 = vrot.slane %v2986, 2
        %v3053 = vrot.slane %v2987, 2
        %v3054 = vsel %vm800, %v3052, %v3053
        %v3055 = vrot.slane %v2988, 2
        %v3056 = vrot.slane %v2989, 2
        %v3057 = vsel %vm800, %v3055, %v3056
        %v3060 = vrot.slane %v2990, 1
        %v3061 = vrot.slane %v2991, 1
        %v3062 = vsel %vm719, %v3060, %v3061
        %v3071 = vrot.slane %v2990, 2
        %v3072 = vrot.slane %v2991, 2
        %v3073 = vsel %vm800, %v3071, %v3072
        %v3076 = vrot.slane %v2992, 1
        %v3077 = vrot.slane %v2993, 1
        %v3078 = vsel %vm719, %v3076, %v3077
        %v3079 = vrot.slane %v2992, 2
        %v3080 = vrot.slane %v2993, 2
        %v3081 = vsel %vm800, %v3079, %v3080
        %3082 = vrot.lane.b32.xlu0 %v3012, 32
        %v3083 = vpop.permute.xlu0 %3082
        %3084 = vrot.lane.b32.xlu0 %v3015, 32
        %v3085 = vpop.permute.xlu0 %3084
        %3086 = vrot.lane.b32.xlu0 %v3018, 32
        %v3087 = vpop.permute.xlu0 %3086
        %3088 = vrot.lane.b32.xlu0 %v3021, 32
        %v3089 = vpop.permute.xlu0 %3088
        %3090 = vrot.lane.b32.xlu0 %v3024, 32
        %v3091 = vpop.permute.xlu0 %3090
        %3092 = vrot.lane.b32.xlu0 %v3027, 32
        %v3093 = vpop.permute.xlu0 %3092
        %3094 = vrot.lane.b32.xlu0 %v3030, 32
        %v3095 = vpop.permute.xlu0 %3094
        %3096 = vrot.lane.b32.xlu0 %v3033, 32
        %v3097 = vpop.permute.xlu0 %3096
        %3106 = vrot.lane.b32.xlu0 %v3036, 64
        %v3107 = vpop.permute.xlu0 %3106
        %3108 = vrot.lane.b32.xlu0 %v3039, 64
        %v3109 = vpop.permute.xlu0 %3108
        %3110 = vrot.lane.b32.xlu0 %v3042, 64
        %v3111 = vpop.permute.xlu0 %3110
        %3112 = vrot.lane.b32.xlu0 %v3045, 64
        %v3113 = vpop.permute.xlu0 %3112
        %3114 = vrot.lane.b32.xlu0 %v3048, 64
        %v3115 = vpop.permute.xlu0 %3114
        %3116 = vrot.lane.b32.xlu0 %v3051, 64
        %v3117 = vpop.permute.xlu0 %3116
        %3118 = vrot.lane.b32.xlu0 %v3054, 64
        %v3119 = vpop.permute.xlu0 %3118
        %3120 = vrot.lane.b32.xlu0 %v3057, 64
        %v3121 = vpop.permute.xlu0 %3120
        %3130 = vrot.lane.b32.xlu0 %v2976, 96
        %v3131 = vpop.permute.xlu0 %3130
        %3132 = vrot.lane.b32.xlu0 %v2978, 96
        %v3133 = vpop.permute.xlu0 %3132
        %3134 = vrot.lane.b32.xlu0 %v2980, 96
        %v3135 = vpop.permute.xlu0 %3134
        %3136 = vrot.lane.b32.xlu0 %v2982, 96
        %v3137 = vpop.permute.xlu0 %3136
        %3138 = vrot.lane.b32.xlu0 %v2984, 96
        %v3139 = vpop.permute.xlu0 %3138
        %3140 = vrot.lane.b32.xlu0 %v2986, 96
        %v3141 = vpop.permute.xlu0 %3140
        %3142 = vrot.lane.b32.xlu0 %v2988, 96
        %v3143 = vpop.permute.xlu0 %3142
        %3144 = vrot.lane.b32.xlu0 %v2990, 96
        %v3145 = vpop.permute.xlu0 %3144
        %3154 = vrot.lane.b32.xlu0 %v3039, 32
        %v3155 = vpop.permute.xlu0 %3154
        %3156 = vrot.lane.b32.xlu0 %v3042, 32
        %v3157 = vpop.permute.xlu0 %3156
        %3158 = vrot.lane.b32.xlu0 %v3045, 32
        %v3159 = vpop.permute.xlu0 %3158
        %3160 = vrot.lane.b32.xlu0 %v3048, 32
        %v3161 = vpop.permute.xlu0 %3160
        %3162 = vrot.lane.b32.xlu0 %v3051, 32
        %v3163 = vpop.permute.xlu0 %3162
        %3164 = vrot.lane.b32.xlu0 %v3054, 32
        %v3165 = vpop.permute.xlu0 %3164
        %3166 = vrot.lane.b32.xlu0 %v3057, 32
        %v3167 = vpop.permute.xlu0 %3166
        %3168 = vrot.lane.b32.xlu0 %v3073, 32
        %v3169 = vpop.permute.xlu0 %3168
        %3178 = vrot.lane.b32.xlu0 %v2978, 64
        %v3179 = vpop.permute.xlu0 %3178
        %3180 = vrot.lane.b32.xlu0 %v2980, 64
        %v3181 = vpop.permute.xlu0 %3180
        %3182 = vrot.lane.b32.xlu0 %v2982, 64
        %v3183 = vpop.permute.xlu0 %3182
        %3184 = vrot.lane.b32.xlu0 %v2984, 64
        %v3185 = vpop.permute.xlu0 %3184
        %3186 = vrot.lane.b32.xlu0 %v2986, 64
        %v3187 = vpop.permute.xlu0 %3186
        %3188 = vrot.lane.b32.xlu0 %v2988, 64
        %v3189 = vpop.permute.xlu0 %3188
        %3190 = vrot.lane.b32.xlu0 %v2990, 64
        %v3191 = vpop.permute.xlu0 %3190
        %3192 = vrot.lane.b32.xlu0 %v2992, 64
        %v3193 = vpop.permute.xlu0 %3192
        %3202 = vrot.lane.b32.xlu0 %v3018, 96
        %v3203 = vpop.permute.xlu0 %3202
        %3204 = vrot.lane.b32.xlu0 %v3021, 96
        %v3205 = vpop.permute.xlu0 %3204
        %3206 = vrot.lane.b32.xlu0 %v3024, 96
        %v3207 = vpop.permute.xlu0 %3206
        %3208 = vrot.lane.b32.xlu0 %v3027, 96
        %v3209 = vpop.permute.xlu0 %3208
        %3210 = vrot.lane.b32.xlu0 %v3030, 96
        %v3211 = vpop.permute.xlu0 %3210
        %3212 = vrot.lane.b32.xlu0 %v3033, 96
        %v3213 = vpop.permute.xlu0 %3212
        %3214 = vrot.lane.b32.xlu0 %v3062, 96
        %v3215 = vpop.permute.xlu0 %3214
        %3216 = vrot.lane.b32.xlu0 %v3078, 96
        %v3217 = vpop.permute.xlu0 %3216
        %v3226 = vsel %vm2200, %v2974, %v3083
        %v3227 = vsel %vm2200, %v2976, %v3085
        %v3228 = vsel %vm2200, %v2978, %v3087
        %v3229 = vsel %vm2200, %v2980, %v3089
        %v3230 = vsel %vm2200, %v2982, %v3091
        %v3231 = vsel %vm2200, %v2984, %v3093
        %v3232 = vsel %vm2200, %v2986, %v3095
        %v3233 = vsel %vm2200, %v2988, %v3097
        %vm3234 = vcmask 523264
        %v3235 = vsel %vm3234, %v3226, %v3107
        %v3236 = vsel %vm3234, %v3227, %v3109
        %v3237 = vsel %vm3234, %v3228, %v3111
        %v3238 = vsel %vm3234, %v3229, %v3113
        %v3239 = vsel %vm3234, %v3230, %v3115
        %v3240 = vsel %vm3234, %v3231, %v3117
        %v3241 = vsel %vm3234, %v3232, %v3119
        %v3242 = vsel %vm3234, %v3233, %v3121
        %vm3243 = vcmask 785408
        %v3244 = vsel %vm3243, %v3235, %v3131
        %v3245 = vsel %vm3243, %v3236, %v3133
        %v3246 = vsel %vm3243, %v3237, %v3135
        %v3247 = vsel %vm3243, %v3238, %v3137
        %v3248 = vsel %vm3243, %v3239, %v3139
        %v3249 = vsel %vm3243, %v3240, %v3141
        %v3250 = vsel %vm3243, %v3241, %v3143
        %v3251 = vsel %vm3243, %v3242, %v3145
        %v3252 = vsel %vm2200, %v3015, %v3155
        %v3253 = vsel %vm2200, %v3018, %v3157
        %v3254 = vsel %vm2200, %v3021, %v3159
        %v3255 = vsel %vm2200, %v3024, %v3161
        %v3256 = vsel %vm2200, %v3027, %v3163
        %v3257 = vsel %vm2200, %v3030, %v3165
        %v3258 = vsel %vm2200, %v3033, %v3167
        %v3259 = vsel %vm2200, %v3062, %v3169
        %v3260 = vsel %vm3234, %v3252, %v3179
        %v3261 = vsel %vm3234, %v3253, %v3181
        %v3262 = vsel %vm3234, %v3254, %v3183
        %v3263 = vsel %vm3234, %v3255, %v3185
        %v3264 = vsel %vm3234, %v3256, %v3187
        %v3265 = vsel %vm3234, %v3257, %v3189
        %v3266 = vsel %vm3234, %v3258, %v3191
        %v3267 = vsel %vm3234, %v3259, %v3193
        %v3268 = vsel %vm3243, %v3260, %v3203
        %v3269 = vsel %vm3243, %v3261, %v3205
        %v3270 = vsel %vm3243, %v3262, %v3207
        %v3271 = vsel %vm3243, %v3263, %v3209
        %v3272 = vsel %vm3243, %v3264, %v3211
        %v3273 = vsel %vm3243, %v3265, %v3213
        %v3274 = vsel %vm3243, %v3266, %v3215
        %v3275 = vsel %vm3243, %v3267, %v3217
        %v3276 = vld [vmem:[%s5] sm:$0xff]
        %v3277 = vld [vmem:[%s5 + $0x8] sm:$0xff]
        %v3278 = vld [vmem:[%s5 + $0x10] sm:$0xff]
        %v3279 = vld [vmem:[%s5 + $0x18] sm:$0xff]
        %v3280 = vld [vmem:[%s5 + $0x20] sm:$0xff]
        %v3281 = vld [vmem:[%s5 + $0x28] sm:$0xff]
        %v3282 = vld [vmem:[%s5 + $0x30] sm:$0xff]
        %v3283 = vld [vmem:[%s5 + $0x38] sm:$0xff]
        %v3284 = vld [vmem:[%s5 + $0x40] sm:$0xff]
        %v3285 = vld [vmem:[%s5 + $0x48] sm:$0xff]
        %v3286 = vld [vmem:[%s5 + $0x50] sm:$0xff]
        %v3287 = vld [vmem:[%s5 + $0x58] sm:$0xff]
        %v3288 = vld [vmem:[%s5 + $0x60] sm:$0xff]
        %v3289 = vld [vmem:[%s5 + $0x68] sm:$0xff]
        %v3290 = vld [vmem:[%s5 + $0x70] sm:$0xff]
        %v3291 = vld [vmem:[%s5 + $0x78] sm:$0xff]
        %v3292 = vld [vmem:[%s5 + $0x80] sm:$0xff]
        %v3293 = vld [vmem:[%s5 + $0x88] sm:$0xff]
        %v3294 = vld [vmem:[%s5 + $0x90] sm:$0xff]
        %v3295 = vld [vmem:[%s5 + $0x98] sm:$0xff]
        %v3296 = vld [vmem:[%s5 + $0xa0] sm:$0xff]
        %v3297 = vld [vmem:[%s5 + $0xa8] sm:$0xff]
        %v3298 = vld [vmem:[%s5 + $0xb0] sm:$0xff]
        %v3299 = vld [vmem:[%s5 + $0xb8] sm:$0xff]
        %v3300 = vld [vmem:[%s5 + $0xc0] sm:$0xff]
        %v3301 = vld [vmem:[%s5 + $0xc8] sm:$0xff]
        %v3302 = vld [vmem:[%s5 + $0xd0] sm:$0xff]
        %v3303 = vld [vmem:[%s5 + $0xd8] sm:$0xff]
        %v3304 = vld [vmem:[%s5 + $0xe0] sm:$0xff]
        %v3305 = vld [vmem:[%s5 + $0xe8] sm:$0xff]
        %v3306 = vld [vmem:[%s5 + $0xf0] sm:$0xff]
        %v3307 = vld [vmem:[%s5 + $0xf8] sm:$0xff]
        %v3308 = vld [vmem:[%s5 + $0x100] sm:$0xff]
        %v3309 = vld [vmem:[%s5 + $0x108] sm:$0xff]
        %v3310 = vld [vmem:[%s5 + $0x110] sm:$0xff]
        %v3311 = vld [vmem:[%s5 + $0x118] sm:$0xff]
        %v3312 = vld [vmem:[%s6] sm:$0x1]
        %v3314 = vperm.slane %v3312, 0
        %v3316 = vsel %vm2200, %v3042, 0
        %v3318 = vsel %vm2200, %v3045, 0
        %v3320 = vsel %vm2200, %v3048, 0
        %v3322 = vsel %vm2200, %v3051, 0
        %v3324 = vsel %vm2200, %v3054, 0
        %v3326 = vsel %vm2200, %v3057, 0
        %v3328 = vsel %vm2200, %v3073, 0
        %v3330 = vsel %vm2200, %v3081, 0
        %3332 = vmatpush.msra.mxu0 %v3291
        %3333 = vmatpush.msra.mxu0 %v3290
        %3334 = vmatpush.msra.mxu0 %v3289
        %3335 = vmatpush.msra.mxu0 %v3288
        %3336 = vmatpush.msra.mxu0 %v3287
        %3337 = vmatpush.msra.mxu0 %v3286
        %3338 = vmatpush.msra.mxu0 %v3285
        %3339 = vmatpush.msra.mxu0 %v3284
        %3340 = vmatpush.msra.mxu0 %v3283
        %3341 = vmatpush.msra.mxu0 %v3282
        %3342 = vmatpush.msra.mxu0 %v3281
        %3343 = vmatpush.msra.mxu0 %v3280
        %3344 = vmatpush.msra.mxu0 %v3279
        %3345 = vmatpush.msra.mxu0 %v3278
        %3346 = vmatpush.msra.mxu0 %v3277
        %3347 = vmatpush.msra.mxu0 %v3276
        %3348 = vmatmul.f32.gmra.mxu0 %v3244
        %v3349 = vpop.f32.mrf.mxu0
        %v3350 = vadd.f32 %v3314, %v3349
        %3351 = vmatmul.f32.gmra.mxu0 %v3245
        %v3352 = vpop.f32.mrf.mxu0
        %v3353 = vadd.f32 %v3314, %v3352
        %3354 = vmatmul.f32.gmra.mxu0 %v3246
        %v3355 = vpop.f32.mrf.mxu0
        %v3356 = vadd.f32 %v3314, %v3355
        %3357 = vmatmul.f32.gmra.mxu0 %v3247
        %v3358 = vpop.f32.mrf.mxu0
        %v3359 = vadd.f32 %v3314, %v3358
        %3360 = vmatmul.f32.gmra.mxu0 %v3248
        %v3361 = vpop.f32.mrf.mxu0
        %v3362 = vadd.f32 %v3314, %v3361
        %3363 = vmatmul.f32.gmra.mxu0 %v3249
        %v3364 = vpop.f32.mrf.mxu0
        %v3365 = vadd.f32 %v3314, %v3364
        %3366 = vmatmul.f32.gmra.mxu0 %v3250
        %v3367 = vpop.f32.mrf.mxu0
        %v3368 = vadd.f32 %v3314, %v3367
        %3369 = vmatmul.f32.gmra.mxu0 %v3251
        %v3370 = vpop.f32.mrf.mxu0
        %v3371 = vadd.f32 %v3314, %v3370
        %3372 = vdwg.mxu0
        %3373 = vmatpush.msra.mxu0 %v3307
        %3374 = vmatpush.msra.mxu0 %v3306
        %3375 = vmatpush.msra.mxu0 %v3305
        %3376 = vmatpush.msra.mxu0 %v3304
        %3377 = vmatpush.msra.mxu0 %v3303
        %3378 = vmatpush.msra.mxu0 %v3302
        %3379 = vmatpush.msra.mxu0 %v3301
        %3380 = vmatpush.msra.mxu0 %v3300
        %3381 = vmatpush.msra.mxu0 %v3299
        %3382 = vmatpush.msra.mxu0 %v3298
        %3383 = vmatpush.msra.mxu0 %v3297
        %3384 = vmatpush.msra.mxu0 %v3296
        %3385 = vmatpush.msra.mxu0 %v3295
        %3386 = vmatpush.msra.mxu0 %v3294
        %3387 = vmatpush.msra.mxu0 %v3293
        %3388 = vmatpush.msra.mxu0 %v3292
        %3389 = vmatmul.f32.gmra.mxu0 %v3268
        %v3390 = vpop.f32.mrf.mxu0
        %v3391 = vadd.f32 %v3350, %v3390
        %3392 = vmatmul.f32.gmra.mxu0 %v3269
        %v3393 = vpop.f32.mrf.mxu0
        %v3394 = vadd.f32 %v3353, %v3393
        %3395 = vmatmul.f32.gmra.mxu0 %v3270
        %v3396 = vpop.f32.mrf.mxu0
        %v3397 = vadd.f32 %v3356, %v3396
        %3398 = vmatmul.f32.gmra.mxu0 %v3271
        %v3399 = vpop.f32.mrf.mxu0
        %v3400 = vadd.f32 %v3359, %v3399
        %3401 = vmatmul.f32.gmra.mxu0 %v3272
        %v3402 = vpop.f32.mrf.mxu0
        %v3403 = vadd.f32 %v3362, %v3402
        %3404 = vmatmul.f32.gmra.mxu0 %v3273
        %v3405 = vpop.f32.mrf.mxu0
        %v3406 = vadd.f32 %v3365, %v3405
        %3407 = vmatmul.f32.gmra.mxu0 %v3274
        %v3408 = vpop.f32.mrf.mxu0
        %v3409 = vadd.f32 %v3368, %v3408
        %3410 = vmatmul.f32.gmra.mxu0 %v3275
        %v3411 = vpop.f32.mrf.mxu0
        %v3412 = vadd.f32 %v3371, %v3411
        %3413 = vdwg.mxu0
        %3414 = vmatpush.msra.mxu0 0.0
        %3415 = vmatpush.msra.mxu0 0.0
        %3416 = vmatpush.msra.mxu0 0.0
        %3417 = vmatpush.msra.mxu0 0.0
        %3418 = vmatpush.msra.mxu0 0.0
        %3419 = vmatpush.msra.mxu0 0.0
        %3420 = vmatpush.msra.mxu0 0.0
        %3421 = vmatpush.msra.mxu0 0.0
        %3422 = vmatpush.msra.mxu0 0.0
        %3423 = vmatpush.msra.mxu0 0.0
        %3424 = vmatpush.msra.mxu0 0.0
        %3425 = vmatpush.msra.mxu0 0.0
        %3426 = vmatpush.msra.mxu0 %v3311
        %3427 = vmatpush.msra.mxu0 %v3310
        %3428 = vmatpush.msra.mxu0 %v3309
        %3429 = vmatpush.msra.mxu0 %v3308
        %3430 = vmatmul.f32.gmra.mxu0 %v3316
        %v3431 = vpop.f32.mrf.mxu0
        %v3432 = vadd.f32 %v3391, %v3431
        %3433 = vmatmul.f32.gmra.mxu0 %v3318
        %v3434 = vpop.f32.mrf.mxu0
        %v3435 = vadd.f32 %v3394, %v3434
        %3436 = vmatmul.f32.gmra.mxu0 %v3320
        %v3437 = vpop.f32.mrf.mxu0
        %v3438 = vadd.f32 %v3397, %v3437
        %3439 = vmatmul.f32.gmra.mxu0 %v3322
        %v3440 = vpop.f32.mrf.mxu0
        %v3441 = vadd.f32 %v3400, %v3440
        %3442 = vmatmul.f32.gmra.mxu0 %v3324
        %v3443 = vpop.f32.mrf.mxu0
        %v3444 = vadd.f32 %v3403, %v3443
        %3445 = vmatmul.f32.gmra.mxu0 %v3326
        %v3446 = vpop.f32.mrf.mxu0
        %v3447 = vadd.f32 %v3406, %v3446
        %3448 = vmatmul.f32.gmra.mxu0 %v3328
        %v3449 = vpop.f32.mrf.mxu0
        %v3450 = vadd.f32 %v3409, %v3449
        %3451 = vmatmul.f32.gmra.mxu0 %v3330
        %v3452 = vpop.f32.mrf.mxu0
        %v3453 = vadd.f32 %v3412, %v3452
        %3454 = vdwg.mxu0
        %v3455 = vmax.f32 %v3432, 0.0
        %v3456 = vmax.f32 %v3435, 0.0
        %v3457 = vmax.f32 %v3438, 0.0
        %v3458 = vmax.f32 %v3441, 0.0
        %v3459 = vmax.f32 %v3444, 0.0
        %v3460 = vmax.f32 %v3447, 0.0
        %v3461 = vmax.f32 %v3450, 0.0
        %v3462 = vmax.f32 %v3453, 0.0
        %v3463 = vsel %vm3234, %v3455, -inf
        %v3464 = vsel %vm3234, %v3456, -inf
        %v3465 = vmax.f32 %v3463, %v3464
        %v3466 = vsel %vm3234, %v3457, -inf
        %v3467 = vsel %vm3234, %v3458, -inf
        %v3468 = vmax.f32 %v3466, %v3467
        %v3469 = vsel %vm3234, %v3459, -inf
        %v3470 = vsel %vm3234, %v3460, -inf
        %v3471 = vmax.f32 %v3469, %v3470
        %v3472 = vsel %vm3234, %v3461, -inf
        %v3473 = vsel %vm3234, %v3462, -inf
        %v3474 = vmax.f32 %v3472, %v3473
        %v3479 = vrot.slane %v3465, 2
        %v3480 = vrot.slane %v3465, 4
        %v3481 = vrot.slane %v3465, 6
        %v3482 = vrot.slane %v3468, 2
        %v3483 = vrot.slane %v3468, 4
        %v3484 = vrot.slane %v3468, 6
        %v3485 = vrot.slane %v3471, 2
        %v3486 = vrot.slane %v3471, 4
        %v3487 = vrot.slane %v3471, 6
        %v3488 = vrot.slane %v3474, 2
        %v3489 = vrot.slane %v3474, 4
        %v3490 = vrot.slane %v3474, 6
        %vm3503 = vcmask 517120
        %v3504 = vsel %vm3503, %v3465, -inf
        %v3505 = vrot.slane %v3504, 4
        %v3506 = vmax.f32 %v3504, %v3505
        %v3507 = vrot.slane %v3506, 2
        %v3508 = vmax.f32 %v3506, %v3507
        %v3509 = vrot.slane %v3508, 1
        %v3510 = vmax.f32 %v3508, %v3509
        %v3511 = vsel %vm3503, %v3479, -inf
        %v3512 = vrot.slane %v3511, 4
        %v3513 = vmax.f32 %v3511, %v3512
        %v3514 = vrot.slane %v3513, 2
        %v3515 = vmax.f32 %v3513, %v3514
        %v3516 = vrot.slane %v3515, 1
        %v3517 = vmax.f32 %v3515, %v3516
        %v3518 = vsel %vm3503, %v3480, -inf
        %v3519 = vrot.slane %v3518, 4
        %v3520 = vmax.f32 %v3518, %v3519
        %v3521 = vrot.slane %v3520, 2
        %v3522 = vmax.f32 %v3520, %v3521
        %v3523 = vrot.slane %v3522, 1
        %v3524 = vmax.f32 %v3522, %v3523
        %v3525 = vsel %vm3503, %v3481, -inf
        %v3526 = vrot.slane %v3525, 4
        %v3527 = vmax.f32 %v3525, %v3526
        %v3528 = vrot.slane %v3527, 2
        %v3529 = vmax.f32 %v3527, %v3528
        %v3530 = vrot.slane %v3529, 1
        %v3531 = vmax.f32 %v3529, %v3530
        %v3532 = vsel %vm3503, %v3468, -inf
        %v3533 = vrot.slane %v3532, 4
        %v3534 = vmax.f32 %v3532, %v3533
        %v3535 = vrot.slane %v3534, 2
        %v3536 = vmax.f32 %v3534, %v3535
        %v3537 = vrot.slane %v3536, 1
        %v3538 = vmax.f32 %v3536, %v3537
        %v3539 = vsel %vm3503, %v3482, -inf
        %v3540 = vrot.slane %v3539, 4
        %v3541 = vmax.f32 %v3539, %v3540
        %v3542 = vrot.slane %v3541, 2
        %v3543 = vmax.f32 %v3541, %v3542
        %v3544 = vrot.slane %v3543, 1
        %v3545 = vmax.f32 %v3543, %v3544
        %v3546 = vsel %vm3503, %v3483, -inf
        %v3547 = vrot.slane %v3546, 4
        %v3548 = vmax.f32 %v3546, %v3547
        %v3549 = vrot.slane %v3548, 2
        %v3550 = vmax.f32 %v3548, %v3549
        %v3551 = vrot.slane %v3550, 1
        %v3552 = vmax.f32 %v3550, %v3551
        %v3553 = vsel %vm3503, %v3484, -inf
        %v3554 = vrot.slane %v3553, 4
        %v3555 = vmax.f32 %v3553, %v3554
        %v3556 = vrot.slane %v3555, 2
        %v3557 = vmax.f32 %v3555, %v3556
        %v3558 = vrot.slane %v3557, 1
        %v3559 = vmax.f32 %v3557, %v3558
        %v3560 = vsel %vm3503, %v3471, -inf
        %v3561 = vrot.slane %v3560, 4
        %v3562 = vmax.f32 %v3560, %v3561
        %v3563 = vrot.slane %v3562, 2
        %v3564 = vmax.f32 %v3562, %v3563
        %v3565 = vrot.slane %v3564, 1
        %v3566 = vmax.f32 %v3564, %v3565
        %v3567 = vsel %vm3503, %v3485, -inf
        %v3568 = vrot.slane %v3567, 4
        %v3569 = vmax.f32 %v3567, %v3568
        %v3570 = vrot.slane %v3569, 2
        %v3571 = vmax.f32 %v3569, %v3570
        %v3572 = vrot.slane %v3571, 1
        %v3573 = vmax.f32 %v3571, %v3572
        %v3574 = vsel %vm3503, %v3486, -inf
        %v3575 = vrot.slane %v3574, 4
        %v3576 = vmax.f32 %v3574, %v3575
        %v3577 = vrot.slane %v3576, 2
        %v3578 = vmax.f32 %v3576, %v3577
        %v3579 = vrot.slane %v3578, 1
        %v3580 = vmax.f32 %v3578, %v3579
        %v3581 = vsel %vm3503, %v3487, -inf
        %v3582 = vrot.slane %v3581, 4
        %v3583 = vmax.f32 %v3581, %v3582
        %v3584 = vrot.slane %v3583, 2
        %v3585 = vmax.f32 %v3583, %v3584
        %v3586 = vrot.slane %v3585, 1
        %v3587 = vmax.f32 %v3585, %v3586
        %v3588 = vsel %vm3503, %v3474, -inf
        %v3589 = vrot.slane %v3588, 4
        %v3590 = vmax.f32 %v3588, %v3589
        %v3591 = vrot.slane %v3590, 2
        %v3592 = vmax.f32 %v3590, %v3591
        %v3593 = vrot.slane %v3592, 1
        %v3594 = vmax.f32 %v3592, %v3593
        %v3595 = vsel %vm3503, %v3488, -inf
        %v3596 = vrot.slane %v3595, 4
        %v3597 = vmax.f32 %v3595, %v3596
        %v3598 = vrot.slane %v3597, 2
        %v3599 = vmax.f32 %v3597, %v3598
        %v3600 = vrot.slane %v3599, 1
        %v3601 = vmax.f32 %v3599, %v3600
        %v3602 = vsel %vm3503, %v3489, -inf
        %v3603 = vrot.slane %v3602, 4
        %v3604 = vmax.f32 %v3602, %v3603
        %v3605 = vrot.slane %v3604, 2
        %v3606 = vmax.f32 %v3604, %v3605
        %v3607 = vrot.slane %v3606, 1
        %v3608 = vmax.f32 %v3606, %v3607
        %v3609 = vsel %vm3503, %v3490, -inf
        %v3610 = vrot.slane %v3609, 4
        %v3611 = vmax.f32 %v3609, %v3610
        %v3612 = vrot.slane %v3611, 2
        %v3613 = vmax.f32 %v3611, %v3612
        %v3614 = vrot.slane %v3613, 1
        %v3615 = vmax.f32 %v3613, %v3614
        %v3632 = vsel %vm2894, %v3517, %v3510
        %v3633 = vsel %vm2896, %v3524, %v3632
        %v3634 = vsel %vm2898, %v3531, %v3633
        %v3635 = vsel %vm2894, %v3545, %v3538
        %v3636 = vsel %vm2896, %v3552, %v3635
        %v3637 = vsel %vm2898, %v3559, %v3636
        %v3638 = vsel %vm2894, %v3573, %v3566
        %v3639 = vsel %vm2896, %v3580, %v3638
        %v3640 = vsel %vm2898, %v3587, %v3639
        %v3641 = vsel %vm2894, %v3601, %v3594
        %v3642 = vsel %vm2896, %v3608, %v3641
        %v3643 = vsel %vm2898, %v3615, %v3642
        %vm3648 = vcmask 519168
        %3649 = vst.msk [vmem:[%s271] sm:$0xf] %vm3648, %v3634
        %3650 = vst.msk [vmem:[%s271 + $0x4] sm:$0xf] %vm3648, %v3637
        %3651 = vst.msk [vmem:[%s271 + $0x8] sm:$0xf] %vm3648, %v3640
        %3652 = vst.msk [vmem:[%s271 + $0xc] sm:$0xf] %vm3648, %v3643
        %s3653 = sand.u32 %s181, 1
        %s3654 = scalar_lea.sflag [#allocation5], %s3653
        %s3655 = sand.u32 %s181, 1
        %s3656 = smul.addr %s3655, 16
        %s3657 = scalar_lea.vmem [#allocation4], %s3656
        // Predicated region
        $region49: #{tpu_custom_call.1} parent=47 // pred_check
          %p3658 = pneg %p191
        $region50: #{tpu_custom_call.1} parent=47 // pred_check_branch
          %3660 = sbr.rel (%p3658) target = $region52
        $region51: #{tpu_custom_call.1} parent=47 // pred_region
          %3662 = vsyncadd %s3654, 0
          %s3663 = smul.addr %s21, 4
          %s3664 = smul.addr %s3663, 4
          %s3665 = scalar_lea.hbm %s7, %s3664
          %s3666 = sshll.u32 %s3657, 4
          %s3667 = int_to_ptr.vmem [resolvable:$true] %s3666
          %s3668 = sshll.u32 %s3665, 4
          %s3669 = int_to_ptr.hbm [resolvable:$true] %s3668
          %3674 = dma.vmem_to_hbm [thread:$0]  %s3667, 256, %s3669, %s3654, 64, 64, 4
        $region52: #{tpu_custom_call.1} parent=47 // pred_fallthru
          _
      $region48: #{tpu_custom_call.1} parent=5 // pred_fallthru
        _
      %p3675 = scmp.le.s32.totalorder 2, %s16
      // Predicated region
      $region53: #{tpu_custom_call.1} parent=5 // pred_check
        %p3676 = pneg %p3675
      $region54: #{tpu_custom_call.1} parent=5 // pred_check_branch
        %3678 = sbr.rel (%p3676) target = $region56
      $region55: #{tpu_custom_call.1} parent=5 // pred_region
        %s3679 = ssub.s32 %s16, 2
        // Predicated region
        $region57: #{tpu_custom_call.1} parent=55 // pred_check
          %p3680 = pneg %p197
        $region58: #{tpu_custom_call.1} parent=55 // pred_check_branch
          %3682 = sbr.rel (%p3680) target = $region60
        $region59: #{tpu_custom_call.1} parent=55 // pred_region
          %s3683 = sand.u32 %s182, 1
          %s3684 = scalar_lea.sflag [#allocation5], %s3683
          %s3685 = sand.u32 %s182, 1
          %s3686 = smul.addr %s3685, 16
          %s3687 = scalar_lea.vmem [#allocation4], %s3686
          %3689 = dma.done %s3684, 256
        $region60: #{tpu_custom_call.1} parent=55 // pred_fallthru
          _
      $region56: #{tpu_custom_call.1} parent=5 // pred_fallthru
        _
    $region6: #{tpu_custom_call.1} parent=1 // loop_footer
      %s20 = sadd.s32 1, %s16
    $region7: #{tpu_custom_call.1} parent=1 // loop_footer_branch
      %15 = sbr.rel target = $region3
    $region8: #{tpu_custom_call.1} parent=1 // loop_exit
      _
    %3690 = vsyncpa [#allocation5], 1
    %s3691 = scalar_lea.sflag [#allocation5], 1
    %3692 = vsyncpa %s3691, 1

</llo_original>
